<compile_context>
chip_gen: v6e
topology: v6e:2x2x1
jax: 0.10.0
libtpu: 0.0.40
codegen_flags: <defaults>
</compile_context>

<pallas_src>
import jax
import jax.numpy as jnp
from jax.experimental import pallas as pl
from jax.experimental.pallas import tpu as pltpu

HIDDEN = 128          # hidden_dims[0] in the module
OBS_FEATURES = 3      # observed_data / uncertainties each have 3 features
IN_FEATURES = 2 * OBS_FEATURES


def _mlp_kernel(obs_ref, unc_ref, w1o_ref, w1u_ref, b1_ref,
                w2_ref, b2_ref, w3_ref, b3_ref, o_ref):
    mm = w2_ref.dtype  # matmul operand dtype (f32 by default; bf16 optional)
    # Full f32 MXU passes when operands are f32 (accuracy is free here);
    # default precision for the (optional) bf16 path.
    prec = (jax.lax.Precision.HIGHEST if mm == jnp.float32
            else jax.lax.Precision.DEFAULT)

    # ---- Layer 1: Linear(6 -> 128) as two K=3 matmuls (no concat), then ReLU.
    h = jnp.dot(obs_ref[...].astype(mm), w1o_ref[...],
                preferred_element_type=jnp.float32, precision=prec)
    h = h + jnp.dot(unc_ref[...].astype(mm), w1u_ref[...],
                    preferred_element_type=jnp.float32, precision=prec)
    h = jnp.maximum(h + b1_ref[...], 0.0)          # f32 elementwise (v5e-safe)

    # ---- Layer 2: Linear(128 -> 128) + ReLU.
    h = jnp.dot(h.astype(mm), w2_ref[...],
                preferred_element_type=jnp.float32, precision=prec)
    h = jnp.maximum(h + b2_ref[...], 0.0)

    # ---- Layer 3: Linear(128 -> 128), no activation (matches the Sequential).
    h = jnp.dot(h.astype(mm), w3_ref[...],
                preferred_element_type=jnp.float32, precision=prec)
    o_ref[...] = (h + b3_ref[...]).astype(o_ref.dtype)


def prepare_params(params, *, matmul_dtype=jnp.float32):
    """One-time parameter preparation (hoisted out of the per-call wrapper).

    `params` = (w1, b1, w2, b2, w3, b3) with each w of shape
    (in_features, out_features), i.e. the transpose of nn.Linear.weight, and
    w1's 6 input rows ordered [observed_data(3), uncertainties(3)].
    """
    w1, b1, w2, b2, w3, b3 = params
    assert w1.shape == (IN_FEATURES, HIDDEN), ("w1 must be (6, 128) = "
                                               "nn.Linear.weight.T", w1.shape)
    assert w2.shape == (HIDDEN, HIDDEN) and w3.shape == (HIDDEN, HIDDEN)
    assert b1.shape == (HIDDEN,) and b2.shape == (HIDDEN,) and b3.shape == (HIDDEN,)

    # Split the first-layer weight so no (B, 6) concat is ever materialized.
    w1_obs = jnp.asarray(w1[:OBS_FEATURES], matmul_dtype)   # (3, 128)
    w1_unc = jnp.asarray(w1[OBS_FEATURES:], matmul_dtype)   # (3, 128)
    w2c = jnp.asarray(w2, matmul_dtype)
    w3c = jnp.asarray(w3, matmul_dtype)
    # Biases stay f32 and 2D (1, 128) so they map onto (sublane, lane) tiles.
    b1r = jnp.asarray(b1, jnp.float32).reshape(1, HIDDEN)
    b2r = jnp.asarray(b2, jnp.float32).reshape(1, HIDDEN)
    b3r = jnp.asarray(b3, jnp.float32).reshape(1, HIDDEN)
    return (w1_obs, w1_unc, b1r, w2c, b2r, w3c, b3r)


def recognition_network_3d_forward(observed_data, uncertainties, params, *,
                                   tile_b=2048, out_dtype=None, trim=True):
    """q(v|w) conditioning net: (B,3),(B,3) -> (B,128).

    `params` may be the raw 6-tuple (prepared on the fly, convenience path) or
    the 7-tuple returned by prepare_params() (preferred: hoists all parameter
    conversion out of the per-call path).
    """
    B = observed_data.shape[0]
    assert observed_data.shape == (B, OBS_FEATURES)
    assert uncertainties.shape == (B, OBS_FEATURES)

    if len(params) == 6:
        params = prepare_params(params)
    w1_obs, w1_unc, b1r, w2c, b2r, w3c, b3r = params

    if out_dtype is None:
        # Writeback-bound kernel: match the activation dtype (bf16 activations
        # -> bf16 writeback -> ~2x less output HBM traffic).
        out_dtype = observed_data.dtype

    # ---- Batch tiling ------------------------------------------------------
    tile_b = max(8, (int(tile_b) // 8) * 8)
    b_pad8 = ((B + 7) // 8) * 8
    if b_pad8 > 512:
        # Large batch: guarantee >= 2 grid steps so the "parallel" batch axis
        # can be sharded across both TensorCores on v7x.
        eff_tile = min(tile_b, ((b_pad8 // 2) + 7) // 8 * 8)
    else:
        eff_tile = b_pad8                      # small batch: single grid step
    num_tiles = -(-b_pad8 // eff_tile)
    b_pad = num_tiles * eff_tile

    obs = observed_data.astype(jnp.float32)
    unc = uncertainties.astype(jnp.float32)
    if b_pad != B:
        pad = b_pad - B
        obs = jnp.pad(obs, ((0, pad), (0, 0)))
        unc = jnp.pad(unc, ((0, pad), (0, 0)))

    # ---- VMEM budget (per-generation safe: min 32 MiB, max 56 MiB < v7x 64) -
    out_bytes = jnp.dtype(out_dtype).itemsize
    per_row = (2 * 2 * 128 * 4            # two (tile,3) inputs, lane-padded, 2 buffers
               + 2 * HIDDEN * out_bytes   # output double buffer
               + 2 * HIDDEN * 4)          # live f32 intermediates
    weight_bytes = 4 * (2 * OBS_FEATURES * HIDDEN + 2 * HIDDEN * HIDDEN + 3 * HIDDEN)
    est = per_row * eff_tile + weight_bytes
    vmem_limit = int(min(56 * 2**20, max(32 * 2**20, 2 * est)))

    def _build_and_call(single_buffer_weights):
        w_kwargs = ({"pipeline_mode": pl.Buffered(buffer_count=1)}
                    if single_buffer_weights else {})

        def resident(shape):
            # Constant index_map -> VMEM-resident across grid steps.
            return pl.BlockSpec(shape, lambda i: (0, 0), **w_kwargs)

        return pl.pallas_call(
            _mlp_kernel,
            out_shape=jax.ShapeDtypeStruct((b_pad, HIDDEN), out_dtype),
            grid_spec=pltpu.PrefetchScalarGridSpec(
                num_scalar_prefetch=0,
                grid=(num_tiles,),
                in_specs=[
                    # Batch-tiled activations; last dim (3) equals the array dim.
                    pl.BlockSpec((eff_tile, OBS_FEATURES), lambda i: (i, 0)),
                    pl.BlockSpec((eff_tile, OBS_FEATURES), lambda i: (i, 0)),
                    resident((OBS_FEATURES, HIDDEN)),
                    resident((OBS_FEATURES, HIDDEN)),
                    resident((1, HIDDEN)),
                    resident((HIDDEN, HIDDEN)),
                    resident((1, HIDDEN)),
                    resident((HIDDEN, HIDDEN)),
                    resident((1, HIDDEN)),
                ],
                out_specs=pl.BlockSpec((eff_tile, HIDDEN), lambda i: (i, 0)),
            ),
            compiler_params=pltpu.CompilerParams(
                # Batch axis -> sharded over both TensorCores on v7x.
                dimension_semantics=("parallel",),
                vmem_limit_bytes=vmem_limit,
            ),
        )(obs, unc, w1_obs, w1_unc, b1r, w2c, b2r, w3c, b3r)

    try:
        out = _build_and_call(True)
    except Exception:
        # Fallback if this jax/Mosaic build rejects Buffered(1) resident specs.
        out = _build_and_call(False)

    if trim and b_pad != B:
        # NOTE: this leading-dim slice copies the whole result; callers that
        # can consume the padded slab (rows >= B are garbage) should pass
        # trim=False and slice lazily inside their own jit.
        out = out[:B]
    return out


def init_params(key):
    """Deterministic synthetic init mimicking nn.Linear's uniform fan-in init."""
    def linear_init(k, fan_in, fan_out):
        kw, kb = jax.random.split(k)
        bound = 1.0 / jnp.sqrt(float(fan_in))
        w = jax.random.uniform(kw, (fan_in, fan_out), jnp.float32, -bound, bound)
        b = jax.random.uniform(kb, (fan_out,), jnp.float32, -bound, bound)
        return w, b

    k1, k2, k3 = jax.random.split(key, 3)
    w1, b1 = linear_init(k1, IN_FEATURES, HIDDEN)
    w2, b2 = linear_init(k2, HIDDEN, HIDDEN)
    w3, b3 = linear_init(k3, HIDDEN, HIDDEN)
    return (w1, b1, w2, b2, w3, b3)


def _reference_forward(observed_data, uncertainties, params):
    """Pure-JAX f32 reference matching the PyTorch module semantics."""
    w1, b1, w2, b2, w3, b3 = params
    hp = jax.lax.Precision.HIGHEST
    x = jnp.concatenate([observed_data, uncertainties], axis=1)
    h = jnp.maximum(jnp.dot(x, w1, precision=hp) + b1, 0.0)
    h = jnp.maximum(jnp.dot(h, w2, precision=hp) + b2, 0.0)
    return jnp.dot(h, w3, precision=hp) + b3


if __name__ == "__main__":
    key = jax.random.PRNGKey(0)
    k_params, k_obs, k_unc = jax.random.split(key, 3)

    B = 16  # small batch for the check; the kernel handles arbitrary B via padding
    params = init_params(k_params)
    prepared = prepare_params(params)  # one-time: split/cast/reshape hoisted here

    observed_data = jax.random.normal(k_obs, (B, OBS_FEATURES), jnp.float32)
    uncertainties = jnp.abs(jax.random.normal(k_unc, (B, OBS_FEATURES), jnp.float32))

    out = recognition_network_3d_forward(observed_data, uncertainties, prepared)
    out = jax.block_until_ready(out)

    ref = _reference_forward(observed_data, uncertainties, params)
    assert out.shape == (B, HIDDEN)
    # f32 matmul operands + HIGHEST precision MXU passes -> tight tolerance.
    assert jnp.allclose(out, ref, atol=1e-4, rtol=1e-4), "mismatch vs reference"

    # TODO(synk): sample()/log_prob() rely on nflows rational-quadratic-spline
    # autoregressive transforms; only the forward() conditioning MLP is
    # implemented here (as required by the module's forward pass).
    print("KERNEL_OK")
</pallas_src>

<mosaic_0001>
module attributes {stable_mosaic.version = 11 : i64} {
  func.func @_mlp_kernel(%arg0: i32, %arg1: memref<16x3xf32, #tpu.memory_space<vmem>>, %arg2: memref<16x3xf32, #tpu.memory_space<vmem>>, %arg3: memref<3x128xf32, #tpu.memory_space<vmem>>, %arg4: memref<3x128xf32, #tpu.memory_space<vmem>>, %arg5: memref<1x128xf32, #tpu.memory_space<vmem>>, %arg6: memref<128x128xf32, #tpu.memory_space<vmem>>, %arg7: memref<1x128xf32, #tpu.memory_space<vmem>>, %arg8: memref<128x128xf32, #tpu.memory_space<vmem>>, %arg9: memref<1x128xf32, #tpu.memory_space<vmem>>, %arg10: memref<16x128xf32, #tpu.memory_space<vmem>>) attributes {dimension_semantics = [#tpu.dimension_semantics<parallel>], iteration_bounds = array<i64: 1>, scalar_prefetch = 0 : i64, scratch_operands = 0 : i64, tpu.core_type = #tpu.core_type<tc>, window_params = [{transform_indices = @transform_0, window_bounds = array<i64: 16, 3>}, {transform_indices = @transform_1, window_bounds = array<i64: 16, 3>}, {pipeline_mode = #tpu.pipeline_mode<synchronous>, transform_indices = @transform_2, window_bounds = array<i64: 3, 128>}, {pipeline_mode = #tpu.pipeline_mode<synchronous>, transform_indices = @transform_3, window_bounds = array<i64: 3, 128>}, {pipeline_mode = #tpu.pipeline_mode<synchronous>, transform_indices = @transform_4, window_bounds = array<i64: 1, 128>}, {pipeline_mode = #tpu.pipeline_mode<synchronous>, transform_indices = @transform_5, window_bounds = array<i64: 128, 128>}, {pipeline_mode = #tpu.pipeline_mode<synchronous>, transform_indices = @transform_6, window_bounds = array<i64: 1, 128>}, {pipeline_mode = #tpu.pipeline_mode<synchronous>, transform_indices = @transform_7, window_bounds = array<i64: 128, 128>}, {pipeline_mode = #tpu.pipeline_mode<synchronous>, transform_indices = @transform_8, window_bounds = array<i64: 1, 128>}, {transform_indices = @transform_9, window_bounds = array<i64: 16, 128>}]} {
    %c0 = arith.constant 0 : index
    %c0_0 = arith.constant 0 : index
    %0 = vector.load %arg1[%c0, %c0_0] : memref<16x3xf32, #tpu.memory_space<vmem>>, vector<16x3xf32>
    %c0_1 = arith.constant 0 : index
    %c0_2 = arith.constant 0 : index
    %1 = vector.load %arg3[%c0_1, %c0_2] : memref<3x128xf32, #tpu.memory_space<vmem>>, vector<3x128xf32>
    %cst = arith.constant dense<0.000000e+00> : vector<16x128xf32>
    %2 = tpu.matmul %0, %1, %cst {dimension_numbers = #tpu.dot_dimension_numbers<[1], [0], [0], [1], [0, 0, 1, 1], [], []>, precision = #tpu.contract_precision<fp32>} : vector<16x3xf32>, vector<3x128xf32>, vector<16x128xf32> -> vector<16x128xf32>
    %c0_3 = arith.constant 0 : index
    %c0_4 = arith.constant 0 : index
    %3 = vector.load %arg2[%c0_3, %c0_4] : memref<16x3xf32, #tpu.memory_space<vmem>>, vector<16x3xf32>
    %c0_5 = arith.constant 0 : index
    %c0_6 = arith.constant 0 : index
    %4 = vector.load %arg4[%c0_5, %c0_6] : memref<3x128xf32, #tpu.memory_space<vmem>>, vector<3x128xf32>
    %cst_7 = arith.constant dense<0.000000e+00> : vector<16x128xf32>
    %5 = tpu.matmul %3, %4, %cst_7 {dimension_numbers = #tpu.dot_dimension_numbers<[1], [0], [0], [1], [0, 0, 1, 1], [], []>, precision = #tpu.contract_precision<fp32>} : vector<16x3xf32>, vector<3x128xf32>, vector<16x128xf32> -> vector<16x128xf32>
    %6 = arith.addf %2, %5 : vector<16x128xf32>
    %c0_8 = arith.constant 0 : index
    %c0_9 = arith.constant 0 : index
    %7 = vector.load %arg5[%c0_8, %c0_9] : memref<1x128xf32, #tpu.memory_space<vmem>>, vector<1x128xf32>
    %8 = vector.broadcast %7 : vector<1x128xf32> to vector<16x128xf32>
    %9 = arith.addf %6, %8 : vector<16x128xf32>
    %cst_10 = arith.constant 0.000000e+00 : f32
    %10 = vector.broadcast %cst_10 : f32 to vector<16x128xf32>
    %11 = arith.maximumf %9, %10 : vector<16x128xf32>
    %c0_11 = arith.constant 0 : index
    %c0_12 = arith.constant 0 : index
    %12 = vector.load %arg6[%c0_11, %c0_12] : memref<128x128xf32, #tpu.memory_space<vmem>>, vector<128x128xf32>
    %cst_13 = arith.constant dense<0.000000e+00> : vector<16x128xf32>
    %13 = tpu.matmul %11, %12, %cst_13 {dimension_numbers = #tpu.dot_dimension_numbers<[1], [0], [0], [1], [0, 0, 1, 1], [], []>, precision = #tpu.contract_precision<fp32>} : vector<16x128xf32>, vector<128x128xf32>, vector<16x128xf32> -> vector<16x128xf32>
    %c0_14 = arith.constant 0 : index
    %c0_15 = arith.constant 0 : index
    %14 = vector.load %arg7[%c0_14, %c0_15] : memref<1x128xf32, #tpu.memory_space<vmem>>, vector<1x128xf32>
    %15 = vector.broadcast %14 : vector<1x128xf32> to vector<16x128xf32>
    %16 = arith.addf %13, %15 : vector<16x128xf32>
    %cst_16 = arith.constant 0.000000e+00 : f32
    %17 = vector.broadcast %cst_16 : f32 to vector<16x128xf32>
    %18 = arith.maximumf %16, %17 : vector<16x128xf32>
    %c0_17 = arith.constant 0 : index
    %c0_18 = arith.constant 0 : index
    %19 = vector.load %arg8[%c0_17, %c0_18] : memref<128x128xf32, #tpu.memory_space<vmem>>, vector<128x128xf32>
    %cst_19 = arith.constant dense<0.000000e+00> : vector<16x128xf32>
    %20 = tpu.matmul %18, %19, %cst_19 {dimension_numbers = #tpu.dot_dimension_numbers<[1], [0], [0], [1], [0, 0, 1, 1], [], []>, precision = #tpu.contract_precision<fp32>} : vector<16x128xf32>, vector<128x128xf32>, vector<16x128xf32> -> vector<16x128xf32>
    %c0_20 = arith.constant 0 : index
    %c0_21 = arith.constant 0 : index
    %21 = vector.load %arg9[%c0_20, %c0_21] : memref<1x128xf32, #tpu.memory_space<vmem>>, vector<1x128xf32>
    %22 = vector.broadcast %21 : vector<1x128xf32> to vector<16x128xf32>
    %23 = arith.addf %20, %22 : vector<16x128xf32>
    %c0_22 = arith.constant 0 : index
    %c0_23 = arith.constant 0 : index
    %24 = vector.load %arg10[%c0_22, %c0_23] : memref<16x128xf32, #tpu.memory_space<vmem>>, vector<16x128xf32>
    tpu.vector_store %arg10[%c0_22, %c0_23], %23 {strides = array<i32>} : memref<16x128xf32, #tpu.memory_space<vmem>>, vector<16x128xf32>,
    return
  }
  func.func @transform_0(%arg0: i32) -> (i32, i32) {
    %c0_i32 = arith.constant 0 : i32
    %c0_i32_0 = arith.constant 0 : i32
    return %arg0, %c0_i32 : i32, i32
  }
  func.func @transform_1(%arg0: i32) -> (i32, i32) {
    %c0_i32 = arith.constant 0 : i32
    %c0_i32_0 = arith.constant 0 : i32
    return %arg0, %c0_i32 : i32, i32
  }
  func.func @transform_2(%arg0: i32) -> (i32, i32) {
    %c0_i32 = arith.constant 0 : i32
    %c0_i32_0 = arith.constant 0 : i32
    %c0_i32_1 = arith.constant 0 : i32
    return %c0_i32, %c0_i32_0 : i32, i32
  }
  func.func @transform_3(%arg0: i32) -> (i32, i32) {
    %c0_i32 = arith.constant 0 : i32
    %c0_i32_0 = arith.constant 0 : i32
    %c0_i32_1 = arith.constant 0 : i32
    return %c0_i32, %c0_i32_0 : i32, i32
  }
  func.func @transform_4(%arg0: i32) -> (i32, i32) {
    %c0_i32 = arith.constant 0 : i32
    %c0_i32_0 = arith.constant 0 : i32
    %c0_i32_1 = arith.constant 0 : i32
    return %c0_i32, %c0_i32_0 : i32, i32
  }
  func.func @transform_5(%arg0: i32) -> (i32, i32) {
    %c0_i32 = arith.constant 0 : i32
    %c0_i32_0 = arith.constant 0 : i32
    %c0_i32_1 = arith.constant 0 : i32
    return %c0_i32, %c0_i32_0 : i32, i32
  }
  func.func @transform_6(%arg0: i32) -> (i32, i32) {
    %c0_i32 = arith.constant 0 : i32
    %c0_i32_0 = arith.constant 0 : i32
    %c0_i32_1 = arith.constant 0 : i32
    return %c0_i32, %c0_i32_0 : i32, i32
  }
  func.func @transform_7(%arg0: i32) -> (i32, i32) {
    %c0_i32 = arith.constant 0 : i32
    %c0_i32_0 = arith.constant 0 : i32
    %c0_i32_1 = arith.constant 0 : i32
    return %c0_i32, %c0_i32_0 : i32, i32
  }
  func.func @transform_8(%arg0: i32) -> (i32, i32) {
    %c0_i32 = arith.constant 0 : i32
    %c0_i32_0 = arith.constant 0 : i32
    %c0_i32_1 = arith.constant 0 : i32
    return %c0_i32, %c0_i32_0 : i32, i32
  }
  func.func @transform_9(%arg0: i32) -> (i32, i32) {
    %c0_i32 = arith.constant 0 : i32
    %c0_i32_0 = arith.constant 0 : i32
    return %arg0, %c0_i32 : i32, i32
  }
}

module attributes {stable_mosaic.version = 11 : i64} {
  func.func @_mlp_kernel(%arg0: i32, %arg1: memref<16x3xf32, #tpu.memory_space<vmem>>, %arg2: memref<16x3xf32, #tpu.memory_space<vmem>>, %arg3: memref<3x128xf32, #tpu.memory_space<vmem>>, %arg4: memref<3x128xf32, #tpu.memory_space<vmem>>, %arg5: memref<1x128xf32, #tpu.memory_space<vmem>>, %arg6: memref<128x128xf32, #tpu.memory_space<vmem>>, %arg7: memref<1x128xf32, #tpu.memory_space<vmem>>, %arg8: memref<128x128xf32, #tpu.memory_space<vmem>>, %arg9: memref<1x128xf32, #tpu.memory_space<vmem>>, %arg10: memref<16x128xf32, #tpu.memory_space<vmem>>) attributes {dimension_semantics = [#tpu.dimension_semantics<parallel>], iteration_bounds = array<i64: 1>, scalar_prefetch = 0 : i64, scratch_operands = 0 : i64, tpu.core_type = #tpu.core_type<tc>, window_params = [{transform_indices = @transform_0, window_bounds = array<i64: 16, 3>}, {transform_indices = @transform_1, window_bounds = array<i64: 16, 3>}, {pipeline_mode = #tpu.pipeline_mode<synchronous>, transform_indices = @transform_2, window_bounds = array<i64: 3, 128>}, {pipeline_mode = #tpu.pipeline_mode<synchronous>, transform_indices = @transform_3, window_bounds = array<i64: 3, 128>}, {pipeline_mode = #tpu.pipeline_mode<synchronous>, transform_indices = @transform_4, window_bounds = array<i64: 1, 128>}, {pipeline_mode = #tpu.pipeline_mode<synchronous>, transform_indices = @transform_5, window_bounds = array<i64: 128, 128>}, {pipeline_mode = #tpu.pipeline_mode<synchronous>, transform_indices = @transform_6, window_bounds = array<i64: 1, 128>}, {pipeline_mode = #tpu.pipeline_mode<synchronous>, transform_indices = @transform_7, window_bounds = array<i64: 128, 128>}, {pipeline_mode = #tpu.pipeline_mode<synchronous>, transform_indices = @transform_8, window_bounds = array<i64: 1, 128>}, {transform_indices = @transform_9, window_bounds = array<i64: 16, 128>}]} {
    %c0 = arith.constant 0 : index
    %c0_0 = arith.constant 0 : index
    %0 = vector.load %arg1[%c0, %c0_0] : memref<16x3xf32, #tpu.memory_space<vmem>>, vector<16x3xf32>
    %c0_1 = arith.constant 0 : index
    %c0_2 = arith.constant 0 : index
    %1 = vector.load %arg3[%c0_1, %c0_2] : memref<3x128xf32, #tpu.memory_space<vmem>>, vector<3x128xf32>
    %cst = arith.constant dense<0.000000e+00> : vector<16x128xf32>
    %2 = tpu.matmul %0, %1, %cst {dimension_numbers = #tpu.dot_dimension_numbers<[1], [0], [0], [1], [0, 0, 1, 1], [], []>, precision = #tpu.contract_precision<fp32>} : vector<16x3xf32>, vector<3x128xf32>, vector<16x128xf32> -> vector<16x128xf32>
    %c0_3 = arith.constant 0 : index
    %c0_4 = arith.constant 0 : index
    %3 = vector.load %arg2[%c0_3, %c0_4] : memref<16x3xf32, #tpu.memory_space<vmem>>, vector<16x3xf32>
    %c0_5 = arith.constant 0 : index
    %c0_6 = arith.constant 0 : index
    %4 = vector.load %arg4[%c0_5, %c0_6] : memref<3x128xf32, #tpu.memory_space<vmem>>, vector<3x128xf32>
    %cst_7 = arith.constant dense<0.000000e+00> : vector<16x128xf32>
    %5 = tpu.matmul %3, %4, %cst_7 {dimension_numbers = #tpu.dot_dimension_numbers<[1], [0], [0], [1], [0, 0, 1, 1], [], []>, precision = #tpu.contract_precision<fp32>} : vector<16x3xf32>, vector<3x128xf32>, vector<16x128xf32> -> vector<16x128xf32>
    %6 = arith.addf %2, %5 : vector<16x128xf32>
    %c0_8 = arith.constant 0 : index
    %c0_9 = arith.constant 0 : index
    %7 = vector.load %arg5[%c0_8, %c0_9] : memref<1x128xf32, #tpu.memory_space<vmem>>, vector<1x128xf32>
    %8 = vector.broadcast %7 : vector<1x128xf32> to vector<16x128xf32>
    %9 = arith.addf %6, %8 : vector<16x128xf32>
    %cst_10 = arith.constant 0.000000e+00 : f32
    %10 = vector.broadcast %cst_10 : f32 to vector<16x128xf32>
    %11 = arith.maximumf %9, %10 : vector<16x128xf32>
    %c0_11 = arith.constant 0 : index
    %c0_12 = arith.constant 0 : index
    %12 = vector.load %arg6[%c0_11, %c0_12] : memref<128x128xf32, #tpu.memory_space<vmem>>, vector<128x128xf32>
    %cst_13 = arith.constant dense<0.000000e+00> : vector<16x128xf32>
    %13 = tpu.matmul %11, %12, %cst_13 {dimension_numbers = #tpu.dot_dimension_numbers<[1], [0], [0], [1], [0, 0, 1, 1], [], []>, precision = #tpu.contract_precision<fp32>} : vector<16x128xf32>, vector<128x128xf32>, vector<16x128xf32> -> vector<16x128xf32>
    %c0_14 = arith.constant 0 : index
    %c0_15 = arith.constant 0 : index
    %14 = vector.load %arg7[%c0_14, %c0_15] : memref<1x128xf32, #tpu.memory_space<vmem>>, vector<1x128xf32>
    %15 = vector.broadcast %14 : vector<1x128xf32> to vector<16x128xf32>
    %16 = arith.addf %13, %15 : vector<16x128xf32>
    %cst_16 = arith.constant 0.000000e+00 : f32
    %17 = vector.broadcast %cst_16 : f32 to vector<16x128xf32>
    %18 = arith.maximumf %16, %17 : vector<16x128xf32>
    %c0_17 = arith.constant 0 : index
    %c0_18 = arith.constant 0 : index
    %19 = vector.load %arg8[%c0_17, %c0_18] : memref<128x128xf32, #tpu.memory_space<vmem>>, vector<128x128xf32>
    %cst_19 = arith.constant dense<0.000000e+00> : vector<16x128xf32>
    %20 = tpu.matmul %18, %19, %cst_19 {dimension_numbers = #tpu.dot_dimension_numbers<[1], [0], [0], [1], [0, 0, 1, 1], [], []>, precision = #tpu.contract_precision<fp32>} : vector<16x128xf32>, vector<128x128xf32>, vector<16x128xf32> -> vector<16x128xf32>
    %c0_20 = arith.constant 0 : index
    %c0_21 = arith.constant 0 : index
    %21 = vector.load %arg9[%c0_20, %c0_21] : memref<1x128xf32, #tpu.memory_space<vmem>>, vector<1x128xf32>
    %22 = vector.broadcast %21 : vector<1x128xf32> to vector<16x128xf32>
    %23 = arith.addf %20, %22 : vector<16x128xf32>
    %c0_22 = arith.constant 0 : index
    %c0_23 = arith.constant 0 : index
    %24 = vector.load %arg10[%c0_22, %c0_23] : memref<16x128xf32, #tpu.memory_space<vmem>>, vector<16x128xf32>
    tpu.vector_store %arg10[%c0_22, %c0_23], %23 {strides = array<i32>} : memref<16x128xf32, #tpu.memory_space<vmem>>, vector<16x128xf32>,
    return
  }
  func.func @transform_0(%arg0: i32) -> (i32, i32) {
    %c0_i32 = arith.constant 0 : i32
    %c0_i32_0 = arith.constant 0 : i32
    return %arg0, %c0_i32 : i32, i32
  }
  func.func @transform_1(%arg0: i32) -> (i32, i32) {
    %c0_i32 = arith.constant 0 : i32
    %c0_i32_0 = arith.constant 0 : i32
    return %arg0, %c0_i32 : i32, i32
  }
  func.func @transform_2(%arg0: i32) -> (i32, i32) {
    %c0_i32 = arith.constant 0 : i32
    %c0_i32_0 = arith.constant 0 : i32
    %c0_i32_1 = arith.constant 0 : i32
    return %c0_i32, %c0_i32_0 : i32, i32
  }
  func.func @transform_3(%arg0: i32) -> (i32, i32) {
    %c0_i32 = arith.constant 0 : i32
    %c0_i32_0 = arith.constant 0 : i32
    %c0_i32_1 = arith.constant 0 : i32
    return %c0_i32, %c0_i32_0 : i32, i32
  }
  func.func @transform_4(%arg0: i32) -> (i32, i32) {
    %c0_i32 = arith.constant 0 : i32
    %c0_i32_0 = arith.constant 0 : i32
    %c0_i32_1 = arith.constant 0 : i32
    return %c0_i32, %c0_i32_0 : i32, i32
  }
  func.func @transform_5(%arg0: i32) -> (i32, i32) {
    %c0_i32 = arith.constant 0 : i32
    %c0_i32_0 = arith.constant 0 : i32
    %c0_i32_1 = arith.constant 0 : i32
    return %c0_i32, %c0_i32_0 : i32, i32
  }
  func.func @transform_6(%arg0: i32) -> (i32, i32) {
    %c0_i32 = arith.constant 0 : i32
    %c0_i32_0 = arith.constant 0 : i32
    %c0_i32_1 = arith.constant 0 : i32
    return %c0_i32, %c0_i32_0 : i32, i32
  }
  func.func @transform_7(%arg0: i32) -> (i32, i32) {
    %c0_i32 = arith.constant 0 : i32
    %c0_i32_0 = arith.constant 0 : i32
    %c0_i32_1 = arith.constant 0 : i32
    return %c0_i32, %c0_i32_0 : i32, i32
  }
  func.func @transform_8(%arg0: i32) -> (i32, i32) {
    %c0_i32 = arith.constant 0 : i32
    %c0_i32_0 = arith.constant 0 : i32
    %c0_i32_1 = arith.constant 0 : i32
    return %c0_i32, %c0_i32_0 : i32, i32
  }
  func.func @transform_9(%arg0: i32) -> (i32, i32) {
    %c0_i32 = arith.constant 0 : i32
    %c0_i32_0 = arith.constant 0 : i32
    return %arg0, %c0_i32 : i32, i32
  }
}

</mosaic_0001>

<llo_original>
// kernel: tpu_custom_call.1
$region0: #{tpu_custom_call.1}
  #allocation0 [shape = 'u32[]', space=smem, size = 0x4, offset = 0x4, fixed_abs, tag = 'smem constant byte address 0x4 - core index']
  #allocation1 [shape = 'u32[144,128]{1,0:T(1,128)}', space=vmem, size = 0x12000, scoped, tag = 'internal scratch']
  %s0 = inlined_call_operand.vmem [shape: f32[16,3], index: 0, kind: input, shape index: {}]
  %s1 = inlined_call_operand.vmem [shape: f32[16,3], index: 1, kind: input, shape index: {}]
  %s2 = inlined_call_operand.vmem [shape: f32[3,128], index: 2, kind: input, shape index: {}]
  %s3 = inlined_call_operand.vmem [shape: f32[3,128], index: 3, kind: input, shape index: {}]
  %s4 = inlined_call_operand.vmem [shape: f32[1,128], index: 4, kind: input, shape index: {}]
  %s5 = inlined_call_operand.hbm [shape: f32[128,128], index: 5, kind: input, shape index: {}]
  %s6 = inlined_call_operand.vmem [shape: f32[1,128], index: 6, kind: input, shape index: {}]
  %s7 = inlined_call_operand.hbm [shape: f32[128,128], index: 7, kind: input, shape index: {}]
  %s8 = inlined_call_operand.vmem [shape: f32[1,128], index: 8, kind: input, shape index: {}]
  %s9 = inlined_call_operand.hbm [shape: f32[16,128], index: 9, kind: output, shape index: {}]
  %s10 = sld [smem:[#allocation0]]
  $region54: #{tpu_custom_call.1} parent=0
    _
  %s12 = ssub.s32 1, %s10
  %s13 = scalar_select 0, %s12, %s10
  $region1: #{tpu_custom_call.1} parent=0
    #allocation2 [shape = 'u8[65536]{0}', space=vmem, size = 0x10000, scoped, tag = 'input window, operand 5, single buffered']
    #allocation3 [shape = 's32[1]{0}', space=sflag, size = 0x4, scoped, tag = 'scoped memory for tpu_custom_call.1']
    #allocation4 [shape = 's32[1]{0}', space=sflag, size = 0x4, scoped, tag = 'scoped memory for tpu_custom_call.1']
    #allocation5 [shape = 'u8[65536]{0}', space=vmem, size = 0x10000, scoped, tag = 'input window, operand 7, single buffered']
    #allocation6 [shape = 's32[1]{0}', space=sflag, size = 0x4, scoped, tag = 'scoped memory for tpu_custom_call.1']
    #allocation7 [shape = 'u8[8192]{0}', space=vmem, size = 0x2000, scoped, tag = 'output window, operand 0, single buffered']
    %14 = vsyncpa [#allocation3], 0
    %15 = vsyncpa [#allocation6], 0
    %16 = vsyncpa [#allocation4], 0
    // Predicated region
    $region2: #{tpu_custom_call.1} parent=1 // pred_check
      _
    $region3: #{tpu_custom_call.1} parent=1 // pred_check_branch
      %18 = sbr.rel (0) target = $region5
    $region4: #{tpu_custom_call.1} parent=1 // pred_region
      _
    $region5: #{tpu_custom_call.1} parent=1 // pred_fallthru
      _
    // Predicated region
    $region6: #{tpu_custom_call.1} parent=1 // pred_check
      _
    $region7: #{tpu_custom_call.1} parent=1 // pred_check_branch
      %20 = sbr.rel (0) target = $region9
    $region8: #{tpu_custom_call.1} parent=1 // pred_region
      _
    $region9: #{tpu_custom_call.1} parent=1 // pred_fallthru
      _
    // Predicated region
    $region10: #{tpu_custom_call.1} parent=1 // pred_check
      _
    $region11: #{tpu_custom_call.1} parent=1 // pred_check_branch
      %22 = sbr.rel (0) target = $region13
    $region12: #{tpu_custom_call.1} parent=1 // pred_region
      _
    $region13: #{tpu_custom_call.1} parent=1 // pred_fallthru
      _
    // Predicated region
    $region14: #{tpu_custom_call.1} parent=1 // pred_check
      _
    $region15: #{tpu_custom_call.1} parent=1 // pred_check_branch
      %24 = sbr.rel (0) target = $region17
    $region16: #{tpu_custom_call.1} parent=1 // pred_region
      _
    $region17: #{tpu_custom_call.1} parent=1 // pred_fallthru
      _
    // Predicated region
    $region18: #{tpu_custom_call.1} parent=1 // pred_check
      _
    $region19: #{tpu_custom_call.1} parent=1 // pred_check_branch
      %26 = sbr.rel (0) target = $region21
    $region20: #{tpu_custom_call.1} parent=1 // pred_region
      _
    $region21: #{tpu_custom_call.1} parent=1 // pred_fallthru
      _
    // Predicated region
    $region22: #{tpu_custom_call.1} parent=1 // pred_check
      _
    $region23: #{tpu_custom_call.1} parent=1 // pred_check_branch
      %28 = sbr.rel (0) target = $region25
    $region24: #{tpu_custom_call.1} parent=1 // pred_region
      %s30 = ssub.s32 2048, 2048
      %31 = vsyncadd [#allocation3], %s30
      %s32 = sshll.u32 [#allocation2], 4
      %s33 = int_to_ptr.vmem [resolvable:$true] %s32
      %38 = dma.hbm_to_vmem [thread:$0]  %s5, 2048, %s33, [#allocation3], 128, 128, 8
    $region25: #{tpu_custom_call.1} parent=1 // pred_fallthru
      _
    // Predicated region
    $region26: #{tpu_custom_call.1} parent=1 // pred_check
      _
    $region27: #{tpu_custom_call.1} parent=1 // pred_check_branch
      %40 = sbr.rel (0) target = $region29
    $region28: #{tpu_custom_call.1} parent=1 // pred_region
      _
    $region29: #{tpu_custom_call.1} parent=1 // pred_fallthru
      _
    // Predicated region
    $region30: #{tpu_custom_call.1} parent=1 // pred_check
      _
    $region31: #{tpu_custom_call.1} parent=1 // pred_check_branch
      %42 = sbr.rel (0) target = $region33
    $region32: #{tpu_custom_call.1} parent=1 // pred_region
      %s44 = ssub.s32 2048, 2048
      %45 = vsyncadd [#allocation6], %s44
      %s46 = sshll.u32 [#allocation5], 4
      %s47 = int_to_ptr.vmem [resolvable:$true] %s46
      %52 = dma.hbm_to_vmem [thread:$0]  %s7, 2048, %s47, [#allocation6], 128, 128, 8
    $region33: #{tpu_custom_call.1} parent=1 // pred_fallthru
      _
    // Predicated region
    $region34: #{tpu_custom_call.1} parent=1 // pred_check
      _
    $region35: #{tpu_custom_call.1} parent=1 // pred_check_branch
      %54 = sbr.rel (0) target = $region37
    $region36: #{tpu_custom_call.1} parent=1 // pred_region
      _
    $region37: #{tpu_custom_call.1} parent=1 // pred_fallthru
      _
    // Predicated region
    $region38: #{tpu_custom_call.1} parent=1 // pred_check
      _
    $region39: #{tpu_custom_call.1} parent=1 // pred_check_branch
      %56 = sbr.rel (0) target = $region41
    $region40: #{tpu_custom_call.1} parent=1 // pred_region
      %57 = dma.done [#allocation3], 2048
    $region41: #{tpu_custom_call.1} parent=1 // pred_fallthru
      _
    // Predicated region
    $region42: #{tpu_custom_call.1} parent=1 // pred_check
      _
    $region43: #{tpu_custom_call.1} parent=1 // pred_check_branch
      %59 = sbr.rel (0) target = $region45
    $region44: #{tpu_custom_call.1} parent=1 // pred_region
      %60 = dma.done [#allocation6], 2048
    $region45: #{tpu_custom_call.1} parent=1 // pred_fallthru
      _
    %v61 = vld [vmem:[%s0] sm:$0xff]
    %v62 = vld [vmem:[%s0 + $0x8] sm:$0xff]
    %v63 = vld [vmem:[%s2] sm:$0x7]
    %v64 = vld [vmem:[%s1] sm:$0xff]
    %v65 = vld [vmem:[%s1 + $0x8] sm:$0xff]
    %v66 = vld [vmem:[%s3] sm:$0x7]
    %vm67 = vcmask 23552
    %v69 = vsel %vm67, %v64, 0
    %v72 = vsel %vm67, %v65, 0
    %vm74 = vcmask 1042432
    %v76 = vsel %vm74, %v66, 0
    %78 = vmatprep.subr.mxu0 0.0
    %79 = vmatpush1.msra.mxu0 0.0
    %80 = vmatprep.subr.mxu0 0.0
    %81 = vmatpush1.msra.mxu0 0.0
    %82 = vmatprep.subr.mxu0 0.0
    %83 = vmatpush1.msra.mxu0 0.0
    %84 = vmatprep.subr.mxu0 0.0
    %85 = vmatpush1.msra.mxu0 0.0
    %86 = vmatprep.subr.mxu0 0.0
    %87 = vmatpush1.msra.mxu0 0.0
    %88 = vmatprep.subr.mxu0 0.0
    %89 = vmatpush1.msra.mxu0 0.0
    %90 = vmatprep.subr.mxu0 0.0
    %91 = vmatpush1.msra.mxu0 0.0
    %92 = vmatprep.subr.mxu0 0.0
    %93 = vmatpush1.msra.mxu0 0.0
    %94 = vmatprep.subr.mxu0 0.0
    %95 = vmatpush1.msra.mxu0 0.0
    %96 = vmatprep.subr.mxu0 0.0
    %97 = vmatpush1.msra.mxu0 0.0
    %98 = vmatprep.subr.mxu0 0.0
    %99 = vmatpush1.msra.mxu0 0.0
    %100 = vmatprep.subr.mxu0 0.0
    %101 = vmatpush1.msra.mxu0 0.0
    %102 = vmatprep.subr.mxu0 0.0
    %103 = vmatpush1.msra.mxu0 0.0
    %104 = vmatprep.subr.mxu0 0.0
    %105 = vmatpush1.msra.mxu0 0.0
    %106 = vmatprep.subr.mxu0 0.0
    %107 = vmatpush1.msra.mxu0 0.0
    %108 = vmatprep.subr.mxu0 0.0
    %v109 = vand.u32 %v76, 4294901760
    %110 = vmatpush1.msra.mxu0 %v109
    %111 = vmatprep.subr.mxu0 0.0
    %112 = vmatpush2.msra.mxu0 0.0
    %113 = vmatprep.subr.mxu0 0.0
    %114 = vmatpush2.msra.mxu0 0.0
    %115 = vmatprep.subr.mxu0 0.0
    %116 = vmatpush2.msra.mxu0 0.0
    %117 = vmatprep.subr.mxu0 0.0
    %118 = vmatpush2.msra.mxu0 0.0
    %119 = vmatprep.subr.mxu0 0.0
    %120 = vmatpush2.msra.mxu0 0.0
    %121 = vmatprep.subr.mxu0 0.0
    %122 = vmatpush2.msra.mxu0 0.0
    %123 = vmatprep.subr.mxu0 0.0
    %124 = vmatpush2.msra.mxu0 0.0
    %125 = vmatprep.subr.mxu0 0.0
    %126 = vmatpush2.msra.mxu0 0.0
    %127 = vmatprep.subr.mxu0 0.0
    %128 = vmatpush2.msra.mxu0 0.0
    %129 = vmatprep.subr.mxu0 0.0
    %130 = vmatpush2.msra.mxu0 0.0
    %131 = vmatprep.subr.mxu0 0.0
    %132 = vmatpush2.msra.mxu0 0.0
    %133 = vmatprep.subr.mxu0 0.0
    %134 = vmatpush2.msra.mxu0 0.0
    %135 = vmatprep.subr.mxu0 0.0
    %136 = vmatpush2.msra.mxu0 0.0
    %137 = vmatprep.subr.mxu0 0.0
    %138 = vmatpush2.msra.mxu0 0.0
    %139 = vmatprep.subr.mxu0 0.0
    %140 = vmatpush2.msra.mxu0 0.0
    %141 = vmatprep.subr.mxu0 0.0
    %142 = vmatpush2.msra.mxu0 0.0
    %143 = vmatprep.mubr.f32.mxu0 0.0
    %v144 = vand.u32 %v69, 4294901760
    %v145 = vsub.f32 %v69, %v144
    %v146 = vand.u32 %v145, 4294901760
    %v147 = vsub.f32 %v145, %v146
    %v148 = vand.u32 %v147, 4294901760
    %149 = vmatmul.mubr.f32.gmra.mxu0 %v148
    %v150 = vpop.f32.mrf.mxu0
    %v151 = vadd.f32 0.0, %v150
    %v152 = vpop.f32.mrf.mxu0
    %153 = vmatprep.mubr.f32.mxu0 0.0
    %v154 = vand.u32 %v72, 4294901760
    %v155 = vsub.f32 %v72, %v154
    %v156 = vand.u32 %v155, 4294901760
    %v157 = vsub.f32 %v155, %v156
    %v158 = vand.u32 %v157, 4294901760
    %159 = vmatmul.mubr.f32.gmra.mxu0 %v158
    %v160 = vpop.f32.mrf.mxu0
    %v161 = vadd.f32 0.0, %v160
    %v162 = vpop.f32.mrf.mxu0
    %163 = vdwg.mxu0
    %164 = vmatprep.subr.mxu0 0.0
    %165 = vmatpush1.msra.mxu0 0.0
    %166 = vmatprep.subr.mxu0 0.0
    %167 = vmatpush1.msra.mxu0 0.0
    %168 = vmatprep.subr.mxu0 0.0
    %169 = vmatpush1.msra.mxu0 0.0
    %170 = vmatprep.subr.mxu0 0.0
    %171 = vmatpush1.msra.mxu0 0.0
    %172 = vmatprep.subr.mxu0 0.0
    %173 = vmatpush1.msra.mxu0 0.0
    %174 = vmatprep.subr.mxu0 0.0
    %175 = vmatpush1.msra.mxu0 0.0
    %176 = vmatprep.subr.mxu0 0.0
    %177 = vmatpush1.msra.mxu0 0.0
    %178 = vmatprep.subr.mxu0 0.0
    %179 = vmatpush1.msra.mxu0 0.0
    %180 = vmatprep.subr.mxu0 0.0
    %181 = vmatpush1.msra.mxu0 0.0
    %182 = vmatprep.subr.mxu0 0.0
    %183 = vmatpush1.msra.mxu0 0.0
    %184 = vmatprep.subr.mxu0 0.0
    %185 = vmatpush1.msra.mxu0 0.0
    %186 = vmatprep.subr.mxu0 0.0
    %187 = vmatpush1.msra.mxu0 0.0
    %188 = vmatprep.subr.mxu0 0.0
    %189 = vmatpush1.msra.mxu0 0.0
    %190 = vmatprep.subr.mxu0 0.0
    %191 = vmatpush1.msra.mxu0 0.0
    %192 = vmatprep.subr.mxu0 0.0
    %193 = vmatpush1.msra.mxu0 0.0
    %194 = vmatprep.subr.mxu0 0.0
    %v195 = vand.u32 %v76, 4294901760
    %v196 = vsub.f32 %v76, %v195
    %v197 = vand.u32 %v196, 4294901760
    %v198 = vsub.f32 %v196, %v197
    %v199 = vand.u32 %v198, 4294901760
    %200 = vmatpush1.msra.mxu0 %v199
    %201 = vmatprep.subr.mxu0 0.0
    %202 = vmatpush2.msra.mxu0 0.0
    %203 = vmatprep.subr.mxu0 0.0
    %204 = vmatpush2.msra.mxu0 0.0
    %205 = vmatprep.subr.mxu0 0.0
    %206 = vmatpush2.msra.mxu0 0.0
    %207 = vmatprep.subr.mxu0 0.0
    %208 = vmatpush2.msra.mxu0 0.0
    %209 = vmatprep.subr.mxu0 0.0
    %210 = vmatpush2.msra.mxu0 0.0
    %211 = vmatprep.subr.mxu0 0.0
    %212 = vmatpush2.msra.mxu0 0.0
    %213 = vmatprep.subr.mxu0 0.0
    %214 = vmatpush2.msra.mxu0 0.0
    %215 = vmatprep.subr.mxu0 0.0
    %216 = vmatpush2.msra.mxu0 0.0
    %217 = vmatprep.subr.mxu0 0.0
    %218 = vmatpush2.msra.mxu0 0.0
    %219 = vmatprep.subr.mxu0 0.0
    %220 = vmatpush2.msra.mxu0 0.0
    %221 = vmatprep.subr.mxu0 0.0
    %222 = vmatpush2.msra.mxu0 0.0
    %223 = vmatprep.subr.mxu0 0.0
    %224 = vmatpush2.msra.mxu0 0.0
    %225 = vmatprep.subr.mxu0 0.0
    %226 = vmatpush2.msra.mxu0 0.0
    %227 = vmatprep.subr.mxu0 0.0
    %228 = vmatpush2.msra.mxu0 0.0
    %229 = vmatprep.subr.mxu0 0.0
    %230 = vmatpush2.msra.mxu0 0.0
    %231 = vmatprep.subr.mxu0 0.0
    %232 = vmatpush2.msra.mxu0 0.0
    %233 = vmatprep.mubr.f32.mxu0 0.0
    %v234 = vand.u32 %v69, 4294901760
    %235 = vmatmul.mubr.f32.gmra.mxu0 %v234
    %v236 = vpop.f32.mrf.mxu0
    %v237 = vadd.f32 %v151, %v236
    %v238 = vpop.f32.mrf.mxu0
    %239 = vmatprep.mubr.f32.mxu0 0.0
    %v240 = vand.u32 %v72, 4294901760
    %241 = vmatmul.mubr.f32.gmra.mxu0 %v240
    %v242 = vpop.f32.mrf.mxu0
    %v243 = vadd.f32 %v161, %v242
    %v244 = vpop.f32.mrf.mxu0
    %245 = vdwg.mxu0
    %246 = vmatprep.subr.mxu0 0.0
    %247 = vmatpush1.msra.mxu0 0.0
    %248 = vmatprep.subr.mxu0 0.0
    %249 = vmatpush1.msra.mxu0 0.0
    %250 = vmatprep.subr.mxu0 0.0
    %251 = vmatpush1.msra.mxu0 0.0
    %252 = vmatprep.subr.mxu0 0.0
    %253 = vmatpush1.msra.mxu0 0.0
    %254 = vmatprep.subr.mxu0 0.0
    %255 = vmatpush1.msra.mxu0 0.0
    %256 = vmatprep.subr.mxu0 0.0
    %257 = vmatpush1.msra.mxu0 0.0
    %258 = vmatprep.subr.mxu0 0.0
    %259 = vmatpush1.msra.mxu0 0.0
    %260 = vmatprep.subr.mxu0 0.0
    %261 = vmatpush1.msra.mxu0 0.0
    %262 = vmatprep.subr.mxu0 0.0
    %263 = vmatpush1.msra.mxu0 0.0
    %264 = vmatprep.subr.mxu0 0.0
    %265 = vmatpush1.msra.mxu0 0.0
    %266 = vmatprep.subr.mxu0 0.0
    %267 = vmatpush1.msra.mxu0 0.0
    %268 = vmatprep.subr.mxu0 0.0
    %269 = vmatpush1.msra.mxu0 0.0
    %270 = vmatprep.subr.mxu0 0.0
    %271 = vmatpush1.msra.mxu0 0.0
    %272 = vmatprep.subr.mxu0 0.0
    %273 = vmatpush1.msra.mxu0 0.0
    %274 = vmatprep.subr.mxu0 0.0
    %275 = vmatpush1.msra.mxu0 0.0
    %276 = vmatprep.subr.mxu0 0.0
    %v277 = vand.u32 %v76, 4294901760
    %v278 = vsub.f32 %v76, %v277
    %279 = vmatpush1.msra.mxu0 %v278
    %280 = vmatprep.subr.mxu0 0.0
    %281 = vmatpush2.msra.mxu0 0.0
    %282 = vmatprep.subr.mxu0 0.0
    %283 = vmatpush2.msra.mxu0 0.0
    %284 = vmatprep.subr.mxu0 0.0
    %285 = vmatpush2.msra.mxu0 0.0
    %286 = vmatprep.subr.mxu0 0.0
    %287 = vmatpush2.msra.mxu0 0.0
    %288 = vmatprep.subr.mxu0 0.0
    %289 = vmatpush2.msra.mxu0 0.0
    %290 = vmatprep.subr.mxu0 0.0
    %291 = vmatpush2.msra.mxu0 0.0
    %292 = vmatprep.subr.mxu0 0.0
    %293 = vmatpush2.msra.mxu0 0.0
    %294 = vmatprep.subr.mxu0 0.0
    %295 = vmatpush2.msra.mxu0 0.0
    %296 = vmatprep.subr.mxu0 0.0
    %297 = vmatpush2.msra.mxu0 0.0
    %298 = vmatprep.subr.mxu0 0.0
    %299 = vmatpush2.msra.mxu0 0.0
    %300 = vmatprep.subr.mxu0 0.0
    %301 = vmatpush2.msra.mxu0 0.0
    %302 = vmatprep.subr.mxu0 0.0
    %303 = vmatpush2.msra.mxu0 0.0
    %304 = vmatprep.subr.mxu0 0.0
    %305 = vmatpush2.msra.mxu0 0.0
    %306 = vmatprep.subr.mxu0 0.0
    %307 = vmatpush2.msra.mxu0 0.0
    %308 = vmatprep.subr.mxu0 0.0
    %309 = vmatpush2.msra.mxu0 0.0
    %310 = vmatprep.subr.mxu0 0.0
    %311 = vmatpush2.msra.mxu0 0.0
    %312 = vmatprep.mubr.f32.mxu0 0.0
    %v313 = vand.u32 %v69, 4294901760
    %v314 = vsub.f32 %v69, %v313
    %315 = vmatmul.mubr.f32.gmra.mxu0 %v314
    %v316 = vpop.f32.mrf.mxu0
    %v317 = vadd.f32 %v237, %v316
    %v318 = vpop.f32.mrf.mxu0
    %319 = vmatprep.mubr.f32.mxu0 0.0
    %v320 = vand.u32 %v72, 4294901760
    %v321 = vsub.f32 %v72, %v320
    %322 = vmatmul.mubr.f32.gmra.mxu0 %v321
    %v323 = vpop.f32.mrf.mxu0
    %v324 = vadd.f32 %v243, %v323
    %v325 = vpop.f32.mrf.mxu0
    %326 = vdwg.mxu0
    %327 = vmatprep.subr.mxu0 0.0
    %328 = vmatpush1.msra.mxu0 0.0
    %329 = vmatprep.subr.mxu0 0.0
    %330 = vmatpush1.msra.mxu0 0.0
    %331 = vmatprep.subr.mxu0 0.0
    %332 = vmatpush1.msra.mxu0 0.0
    %333 = vmatprep.subr.mxu0 0.0
    %334 = vmatpush1.msra.mxu0 0.0
    %335 = vmatprep.subr.mxu0 0.0
    %336 = vmatpush1.msra.mxu0 0.0
    %337 = vmatprep.subr.mxu0 0.0
    %338 = vmatpush1.msra.mxu0 0.0
    %339 = vmatprep.subr.mxu0 0.0
    %340 = vmatpush1.msra.mxu0 0.0
    %341 = vmatprep.subr.mxu0 0.0
    %342 = vmatpush1.msra.mxu0 0.0
    %343 = vmatprep.subr.mxu0 0.0
    %344 = vmatpush1.msra.mxu0 0.0
    %345 = vmatprep.subr.mxu0 0.0
    %346 = vmatpush1.msra.mxu0 0.0
    %347 = vmatprep.subr.mxu0 0.0
    %348 = vmatpush1.msra.mxu0 0.0
    %349 = vmatprep.subr.mxu0 0.0
    %350 = vmatpush1.msra.mxu0 0.0
    %351 = vmatprep.subr.mxu0 0.0
    %352 = vmatpush1.msra.mxu0 0.0
    %353 = vmatprep.subr.mxu0 0.0
    %354 = vmatpush1.msra.mxu0 0.0
    %355 = vmatprep.subr.mxu0 0.0
    %356 = vmatpush1.msra.mxu0 0.0
    %357 = vmatprep.subr.mxu0 0.0
    %v358 = vand.u32 %v76, 4294901760
    %359 = vmatpush1.msra.mxu0 %v358
    %360 = vmatprep.subr.mxu0 0.0
    %361 = vmatpush2.msra.mxu0 0.0
    %362 = vmatprep.subr.mxu0 0.0
    %363 = vmatpush2.msra.mxu0 0.0
    %364 = vmatprep.subr.mxu0 0.0
    %365 = vmatpush2.msra.mxu0 0.0
    %366 = vmatprep.subr.mxu0 0.0
    %367 = vmatpush2.msra.mxu0 0.0
    %368 = vmatprep.subr.mxu0 0.0
    %369 = vmatpush2.msra.mxu0 0.0
    %370 = vmatprep.subr.mxu0 0.0
    %371 = vmatpush2.msra.mxu0 0.0
    %372 = vmatprep.subr.mxu0 0.0
    %373 = vmatpush2.msra.mxu0 0.0
    %374 = vmatprep.subr.mxu0 0.0
    %375 = vmatpush2.msra.mxu0 0.0
    %376 = vmatprep.subr.mxu0 0.0
    %377 = vmatpush2.msra.mxu0 0.0
    %378 = vmatprep.subr.mxu0 0.0
    %379 = vmatpush2.msra.mxu0 0.0
    %380 = vmatprep.subr.mxu0 0.0
    %381 = vmatpush2.msra.mxu0 0.0
    %382 = vmatprep.subr.mxu0 0.0
    %383 = vmatpush2.msra.mxu0 0.0
    %384 = vmatprep.subr.mxu0 0.0
    %385 = vmatpush2.msra.mxu0 0.0
    %386 = vmatprep.subr.mxu0 0.0
    %387 = vmatpush2.msra.mxu0 0.0
    %388 = vmatprep.subr.mxu0 0.0
    %389 = vmatpush2.msra.mxu0 0.0
    %390 = vmatprep.subr.mxu0 0.0
    %391 = vmatpush2.msra.mxu0 0.0
    %392 = vmatprep.mubr.f32.mxu0 0.0
    %v393 = vand.u32 %v69, 4294901760
    %v394 = vsub.f32 %v69, %v393
    %v395 = vand.u32 %v394, 4294901760
    %396 = vmatmul.mubr.f32.gmra.mxu0 %v395
    %v397 = vpop.f32.mrf.mxu0
    %v398 = vadd.f32 %v317, %v397
    %v399 = vpop.f32.mrf.mxu0
    %400 = vmatprep.mubr.f32.mxu0 0.0
    %v401 = vand.u32 %v72, 4294901760
    %v402 = vsub.f32 %v72, %v401
    %v403 = vand.u32 %v402, 4294901760
    %404 = vmatmul.mubr.f32.gmra.mxu0 %v403
    %v405 = vpop.f32.mrf.mxu0
    %v406 = vadd.f32 %v324, %v405
    %v407 = vpop.f32.mrf.mxu0
    %408 = vdwg.mxu0
    %409 = vmatprep.subr.mxu0 0.0
    %410 = vmatpush1.msra.mxu0 0.0
    %411 = vmatprep.subr.mxu0 0.0
    %412 = vmatpush1.msra.mxu0 0.0
    %413 = vmatprep.subr.mxu0 0.0
    %414 = vmatpush1.msra.mxu0 0.0
    %415 = vmatprep.subr.mxu0 0.0
    %416 = vmatpush1.msra.mxu0 0.0
    %417 = vmatprep.subr.mxu0 0.0
    %418 = vmatpush1.msra.mxu0 0.0
    %419 = vmatprep.subr.mxu0 0.0
    %420 = vmatpush1.msra.mxu0 0.0
    %421 = vmatprep.subr.mxu0 0.0
    %422 = vmatpush1.msra.mxu0 0.0
    %423 = vmatprep.subr.mxu0 0.0
    %424 = vmatpush1.msra.mxu0 0.0
    %425 = vmatprep.subr.mxu0 0.0
    %426 = vmatpush1.msra.mxu0 0.0
    %427 = vmatprep.subr.mxu0 0.0
    %428 = vmatpush1.msra.mxu0 0.0
    %429 = vmatprep.subr.mxu0 0.0
    %430 = vmatpush1.msra.mxu0 0.0
    %431 = vmatprep.subr.mxu0 0.0
    %432 = vmatpush1.msra.mxu0 0.0
    %433 = vmatprep.subr.mxu0 0.0
    %434 = vmatpush1.msra.mxu0 0.0
    %435 = vmatprep.subr.mxu0 0.0
    %436 = vmatpush1.msra.mxu0 0.0
    %437 = vmatprep.subr.mxu0 0.0
    %438 = vmatpush1.msra.mxu0 0.0
    %439 = vmatprep.subr.mxu0 0.0
    %v440 = vand.u32 %v76, 4294901760
    %v441 = vsub.f32 %v76, %v440
    %v442 = vand.u32 %v441, 4294901760
    %443 = vmatpush1.msra.mxu0 %v442
    %444 = vmatprep.subr.mxu0 0.0
    %445 = vmatpush2.msra.mxu0 0.0
    %446 = vmatprep.subr.mxu0 0.0
    %447 = vmatpush2.msra.mxu0 0.0
    %448 = vmatprep.subr.mxu0 0.0
    %449 = vmatpush2.msra.mxu0 0.0
    %450 = vmatprep.subr.mxu0 0.0
    %451 = vmatpush2.msra.mxu0 0.0
    %452 = vmatprep.subr.mxu0 0.0
    %453 = vmatpush2.msra.mxu0 0.0
    %454 = vmatprep.subr.mxu0 0.0
    %455 = vmatpush2.msra.mxu0 0.0
    %456 = vmatprep.subr.mxu0 0.0
    %457 = vmatpush2.msra.mxu0 0.0
    %458 = vmatprep.subr.mxu0 0.0
    %459 = vmatpush2.msra.mxu0 0.0
    %460 = vmatprep.subr.mxu0 0.0
    %461 = vmatpush2.msra.mxu0 0.0
    %462 = vmatprep.subr.mxu0 0.0
    %463 = vmatpush2.msra.mxu0 0.0
    %464 = vmatprep.subr.mxu0 0.0
    %465 = vmatpush2.msra.mxu0 0.0
    %466 = vmatprep.subr.mxu0 0.0
    %467 = vmatpush2.msra.mxu0 0.0
    %468 = vmatprep.subr.mxu0 0.0
    %469 = vmatpush2.msra.mxu0 0.0
    %470 = vmatprep.subr.mxu0 0.0
    %471 = vmatpush2.msra.mxu0 0.0
    %472 = vmatprep.subr.mxu0 0.0
    %473 = vmatpush2.msra.mxu0 0.0
    %474 = vmatprep.subr.mxu0 0.0
    %475 = vmatpush2.msra.mxu0 0.0
    %476 = vmatprep.mubr.f32.mxu0 0.0
    %v477 = vand.u32 %v69, 4294901760
    %478 = vmatmul.mubr.f32.gmra.mxu0 %v477
    %v479 = vpop.f32.mrf.mxu0
    %v480 = vadd.f32 %v398, %v479
    %v481 = vpop.f32.mrf.mxu0
    %482 = vmatprep.mubr.f32.mxu0 0.0
    %v483 = vand.u32 %v72, 4294901760
    %484 = vmatmul.mubr.f32.gmra.mxu0 %v483
    %v485 = vpop.f32.mrf.mxu0
    %v486 = vadd.f32 %v406, %v485
    %v487 = vpop.f32.mrf.mxu0
    %488 = vdwg.mxu0
    %489 = vmatprep.subr.mxu0 0.0
    %490 = vmatpush1.msra.mxu0 0.0
    %491 = vmatprep.subr.mxu0 0.0
    %492 = vmatpush1.msra.mxu0 0.0
    %493 = vmatprep.subr.mxu0 0.0
    %494 = vmatpush1.msra.mxu0 0.0
    %495 = vmatprep.subr.mxu0 0.0
    %496 = vmatpush1.msra.mxu0 0.0
    %497 = vmatprep.subr.mxu0 0.0
    %498 = vmatpush1.msra.mxu0 0.0
    %499 = vmatprep.subr.mxu0 0.0
    %500 = vmatpush1.msra.mxu0 0.0
    %501 = vmatprep.subr.mxu0 0.0
    %502 = vmatpush1.msra.mxu0 0.0
    %503 = vmatprep.subr.mxu0 0.0
    %504 = vmatpush1.msra.mxu0 0.0
    %505 = vmatprep.subr.mxu0 0.0
    %506 = vmatpush1.msra.mxu0 0.0
    %507 = vmatprep.subr.mxu0 0.0
    %508 = vmatpush1.msra.mxu0 0.0
    %509 = vmatprep.subr.mxu0 0.0
    %510 = vmatpush1.msra.mxu0 0.0
    %511 = vmatprep.subr.mxu0 0.0
    %512 = vmatpush1.msra.mxu0 0.0
    %513 = vmatprep.subr.mxu0 0.0
    %514 = vmatpush1.msra.mxu0 0.0
    %515 = vmatprep.subr.mxu0 0.0
    %516 = vmatpush1.msra.mxu0 0.0
    %517 = vmatprep.subr.mxu0 0.0
    %518 = vmatpush1.msra.mxu0 0.0
    %519 = vmatprep.subr.mxu0 0.0
    %v520 = vand.u32 %v76, 4294901760
    %521 = vmatpush1.msra.mxu0 %v520
    %522 = vmatprep.subr.mxu0 0.0
    %523 = vmatpush2.msra.mxu0 0.0
    %524 = vmatprep.subr.mxu0 0.0
    %525 = vmatpush2.msra.mxu0 0.0
    %526 = vmatprep.subr.mxu0 0.0
    %527 = vmatpush2.msra.mxu0 0.0
    %528 = vmatprep.subr.mxu0 0.0
    %529 = vmatpush2.msra.mxu0 0.0
    %530 = vmatprep.subr.mxu0 0.0
    %531 = vmatpush2.msra.mxu0 0.0
    %532 = vmatprep.subr.mxu0 0.0
    %533 = vmatpush2.msra.mxu0 0.0
    %534 = vmatprep.subr.mxu0 0.0
    %535 = vmatpush2.msra.mxu0 0.0
    %536 = vmatprep.subr.mxu0 0.0
    %537 = vmatpush2.msra.mxu0 0.0
    %538 = vmatprep.subr.mxu0 0.0
    %539 = vmatpush2.msra.mxu0 0.0
    %540 = vmatprep.subr.mxu0 0.0
    %541 = vmatpush2.msra.mxu0 0.0
    %542 = vmatprep.subr.mxu0 0.0
    %543 = vmatpush2.msra.mxu0 0.0
    %544 = vmatprep.subr.mxu0 0.0
    %545 = vmatpush2.msra.mxu0 0.0
    %546 = vmatprep.subr.mxu0 0.0
    %547 = vmatpush2.msra.mxu0 0.0
    %548 = vmatprep.subr.mxu0 0.0
    %549 = vmatpush2.msra.mxu0 0.0
    %550 = vmatprep.subr.mxu0 0.0
    %551 = vmatpush2.msra.mxu0 0.0
    %552 = vmatprep.subr.mxu0 0.0
    %553 = vmatpush2.msra.mxu0 0.0
    %554 = vmatprep.mubr.f32.mxu0 0.0
    %v555 = vand.u32 %v69, 4294901760
    %556 = vmatmul.mubr.f32.gmra.mxu0 %v555
    %v557 = vpop.f32.mrf.mxu0
    %v558 = vadd.f32 %v480, %v557
    %v559 = vpop.f32.mrf.mxu0
    %560 = vmatprep.mubr.f32.mxu0 0.0
    %v561 = vand.u32 %v72, 4294901760
    %562 = vmatmul.mubr.f32.gmra.mxu0 %v561
    %v563 = vpop.f32.mrf.mxu0
    %v564 = vadd.f32 %v486, %v563
    %v565 = vpop.f32.mrf.mxu0
    %566 = vdwg.mxu0
    %v568 = vsel %vm67, %v61, 0
    %v571 = vsel %vm67, %v62, 0
    %v574 = vsel %vm74, %v63, 0
    %576 = vmatprep.subr.mxu0 0.0
    %577 = vmatpush1.msra.mxu0 0.0
    %578 = vmatprep.subr.mxu0 0.0
    %579 = vmatpush1.msra.mxu0 0.0
    %580 = vmatprep.subr.mxu0 0.0
    %581 = vmatpush1.msra.mxu0 0.0
    %582 = vmatprep.subr.mxu0 0.0
    %583 = vmatpush1.msra.mxu0 0.0
    %584 = vmatprep.subr.mxu0 0.0
    %585 = vmatpush1.msra.mxu0 0.0
    %586 = vmatprep.subr.mxu0 0.0
    %587 = vmatpush1.msra.mxu0 0.0
    %588 = vmatprep.subr.mxu0 0.0
    %589 = vmatpush1.msra.mxu0 0.0
    %590 = vmatprep.subr.mxu0 0.0
    %591 = vmatpush1.msra.mxu0 0.0
    %592 = vmatprep.subr.mxu0 0.0
    %593 = vmatpush1.msra.mxu0 0.0
    %594 = vmatprep.subr.mxu0 0.0
    %595 = vmatpush1.msra.mxu0 0.0
    %596 = vmatprep.subr.mxu0 0.0
    %597 = vmatpush1.msra.mxu0 0.0
    %598 = vmatprep.subr.mxu0 0.0
    %599 = vmatpush1.msra.mxu0 0.0
    %600 = vmatprep.subr.mxu0 0.0
    %601 = vmatpush1.msra.mxu0 0.0
    %602 = vmatprep.subr.mxu0 0.0
    %603 = vmatpush1.msra.mxu0 0.0
    %604 = vmatprep.subr.mxu0 0.0
    %605 = vmatpush1.msra.mxu0 0.0
    %606 = vmatprep.subr.mxu0 0.0
    %v607 = vand.u32 %v574, 4294901760
    %608 = vmatpush1.msra.mxu0 %v607
    %609 = vmatprep.subr.mxu0 0.0
    %610 = vmatpush2.msra.mxu0 0.0
    %611 = vmatprep.subr.mxu0 0.0
    %612 = vmatpush2.msra.mxu0 0.0
    %613 = vmatprep.subr.mxu0 0.0
    %614 = vmatpush2.msra.mxu0 0.0
    %615 = vmatprep.subr.mxu0 0.0
    %616 = vmatpush2.msra.mxu0 0.0
    %617 = vmatprep.subr.mxu0 0.0
    %618 = vmatpush2.msra.mxu0 0.0
    %619 = vmatprep.subr.mxu0 0.0
    %620 = vmatpush2.msra.mxu0 0.0
    %621 = vmatprep.subr.mxu0 0.0
    %622 = vmatpush2.msra.mxu0 0.0
    %623 = vmatprep.subr.mxu0 0.0
    %624 = vmatpush2.msra.mxu0 0.0
    %625 = vmatprep.subr.mxu0 0.0
    %626 = vmatpush2.msra.mxu0 0.0
    %627 = vmatprep.subr.mxu0 0.0
    %628 = vmatpush2.msra.mxu0 0.0
    %629 = vmatprep.subr.mxu0 0.0
    %630 = vmatpush2.msra.mxu0 0.0
    %631 = vmatprep.subr.mxu0 0.0
    %632 = vmatpush2.msra.mxu0 0.0
    %633 = vmatprep.subr.mxu0 0.0
    %634 = vmatpush2.msra.mxu0 0.0
    %635 = vmatprep.subr.mxu0 0.0
    %636 = vmatpush2.msra.mxu0 0.0
    %637 = vmatprep.subr.mxu0 0.0
    %638 = vmatpush2.msra.mxu0 0.0
    %639 = vmatprep.subr.mxu0 0.0
    %640 = vmatpush2.msra.mxu0 0.0
    %641 = vmatprep.mubr.f32.mxu0 0.0
    %v642 = vand.u32 %v568, 4294901760
    %v643 = vsub.f32 %v568, %v642
    %v644 = vand.u32 %v643, 4294901760
    %v645 = vsub.f32 %v643, %v644
    %v646 = vand.u32 %v645, 4294901760
    %647 = vmatmul.mubr.f32.gmra.mxu0 %v646
    %v648 = vpop.f32.mrf.mxu0
    %v649 = vadd.f32 %v558, %v648
    %v650 = vpop.f32.mrf.mxu0
    %651 = vmatprep.mubr.f32.mxu0 0.0
    %v652 = vand.u32 %v571, 4294901760
    %v653 = vsub.f32 %v571, %v652
    %v654 = vand.u32 %v653, 4294901760
    %v655 = vsub.f32 %v653, %v654
    %v656 = vand.u32 %v655, 4294901760
    %657 = vmatmul.mubr.f32.gmra.mxu0 %v656
    %v658 = vpop.f32.mrf.mxu0
    %v659 = vadd.f32 %v564, %v658
    %v660 = vpop.f32.mrf.mxu0
    %661 = vdwg.mxu0
    %662 = vmatprep.subr.mxu0 0.0
    %663 = vmatpush1.msra.mxu0 0.0
    %664 = vmatprep.subr.mxu0 0.0
    %665 = vmatpush1.msra.mxu0 0.0
    %666 = vmatprep.subr.mxu0 0.0
    %667 = vmatpush1.msra.mxu0 0.0
    %668 = vmatprep.subr.mxu0 0.0
    %669 = vmatpush1.msra.mxu0 0.0
    %670 = vmatprep.subr.mxu0 0.0
    %671 = vmatpush1.msra.mxu0 0.0
    %672 = vmatprep.subr.mxu0 0.0
    %673 = vmatpush1.msra.mxu0 0.0
    %674 = vmatprep.subr.mxu0 0.0
    %675 = vmatpush1.msra.mxu0 0.0
    %676 = vmatprep.subr.mxu0 0.0
    %677 = vmatpush1.msra.mxu0 0.0
    %678 = vmatprep.subr.mxu0 0.0
    %679 = vmatpush1.msra.mxu0 0.0
    %680 = vmatprep.subr.mxu0 0.0
    %681 = vmatpush1.msra.mxu0 0.0
    %682 = vmatprep.subr.mxu0 0.0
    %683 = vmatpush1.msra.mxu0 0.0
    %684 = vmatprep.subr.mxu0 0.0
    %685 = vmatpush1.msra.mxu0 0.0
    %686 = vmatprep.subr.mxu0 0.0
    %687 = vmatpush1.msra.mxu0 0.0
    %688 = vmatprep.subr.mxu0 0.0
    %689 = vmatpush1.msra.mxu0 0.0
    %690 = vmatprep.subr.mxu0 0.0
    %691 = vmatpush1.msra.mxu0 0.0
    %692 = vmatprep.subr.mxu0 0.0
    %v693 = vand.u32 %v574, 4294901760
    %v694 = vsub.f32 %v574, %v693
    %v695 = vand.u32 %v694, 4294901760
    %v696 = vsub.f32 %v694, %v695
    %v697 = vand.u32 %v696, 4294901760
    %698 = vmatpush1.msra.mxu0 %v697
    %699 = vmatprep.subr.mxu0 0.0
    %700 = vmatpush2.msra.mxu0 0.0
    %701 = vmatprep.subr.mxu0 0.0
    %702 = vmatpush2.msra.mxu0 0.0
    %703 = vmatprep.subr.mxu0 0.0
    %704 = vmatpush2.msra.mxu0 0.0
    %705 = vmatprep.subr.mxu0 0.0
    %706 = vmatpush2.msra.mxu0 0.0
    %707 = vmatprep.subr.mxu0 0.0
    %708 = vmatpush2.msra.mxu0 0.0
    %709 = vmatprep.subr.mxu0 0.0
    %710 = vmatpush2.msra.mxu0 0.0
    %711 = vmatprep.subr.mxu0 0.0
    %712 = vmatpush2.msra.mxu0 0.0
    %713 = vmatprep.subr.mxu0 0.0
    %714 = vmatpush2.msra.mxu0 0.0
    %715 = vmatprep.subr.mxu0 0.0
    %716 = vmatpush2.msra.mxu0 0.0
    %717 = vmatprep.subr.mxu0 0.0
    %718 = vmatpush2.msra.mxu0 0.0
    %719 = vmatprep.subr.mxu0 0.0
    %720 = vmatpush2.msra.mxu0 0.0
    %721 = vmatprep.subr.mxu0 0.0
    %722 = vmatpush2.msra.mxu0 0.0
    %723 = vmatprep.subr.mxu0 0.0
    %724 = vmatpush2.msra.mxu0 0.0
    %725 = vmatprep.subr.mxu0 0.0
    %726 = vmatpush2.msra.mxu0 0.0
    %727 = vmatprep.subr.mxu0 0.0
    %728 = vmatpush2.msra.mxu0 0.0
    %729 = vmatprep.subr.mxu0 0.0
    %730 = vmatpush2.msra.mxu0 0.0
    %731 = vmatprep.mubr.f32.mxu0 0.0
    %v732 = vand.u32 %v568, 4294901760
    %733 = vmatmul.mubr.f32.gmra.mxu0 %v732
    %v734 = vpop.f32.mrf.mxu0
    %v735 = vadd.f32 %v649, %v734
    %v736 = vpop.f32.mrf.mxu0
    %737 = vmatprep.mubr.f32.mxu0 0.0
    %v738 = vand.u32 %v571, 4294901760
    %739 = vmatmul.mubr.f32.gmra.mxu0 %v738
    %v740 = vpop.f32.mrf.mxu0
    %v741 = vadd.f32 %v659, %v740
    %v742 = vpop.f32.mrf.mxu0
    %743 = vdwg.mxu0
    %744 = vmatprep.subr.mxu0 0.0
    %745 = vmatpush1.msra.mxu0 0.0
    %746 = vmatprep.subr.mxu0 0.0
    %747 = vmatpush1.msra.mxu0 0.0
    %748 = vmatprep.subr.mxu0 0.0
    %749 = vmatpush1.msra.mxu0 0.0
    %750 = vmatprep.subr.mxu0 0.0
    %751 = vmatpush1.msra.mxu0 0.0
    %752 = vmatprep.subr.mxu0 0.0
    %753 = vmatpush1.msra.mxu0 0.0
    %754 = vmatprep.subr.mxu0 0.0
    %755 = vmatpush1.msra.mxu0 0.0
    %756 = vmatprep.subr.mxu0 0.0
    %757 = vmatpush1.msra.mxu0 0.0
    %758 = vmatprep.subr.mxu0 0.0
    %759 = vmatpush1.msra.mxu0 0.0
    %760 = vmatprep.subr.mxu0 0.0
    %761 = vmatpush1.msra.mxu0 0.0
    %762 = vmatprep.subr.mxu0 0.0
    %763 = vmatpush1.msra.mxu0 0.0
    %764 = vmatprep.subr.mxu0 0.0
    %765 = vmatpush1.msra.mxu0 0.0
    %766 = vmatprep.subr.mxu0 0.0
    %767 = vmatpush1.msra.mxu0 0.0
    %768 = vmatprep.subr.mxu0 0.0
    %769 = vmatpush1.msra.mxu0 0.0
    %770 = vmatprep.subr.mxu0 0.0
    %771 = vmatpush1.msra.mxu0 0.0
    %772 = vmatprep.subr.mxu0 0.0
    %773 = vmatpush1.msra.mxu0 0.0
    %774 = vmatprep.subr.mxu0 0.0
    %v775 = vand.u32 %v574, 4294901760
    %v776 = vsub.f32 %v574, %v775
    %777 = vmatpush1.msra.mxu0 %v776
    %778 = vmatprep.subr.mxu0 0.0
    %779 = vmatpush2.msra.mxu0 0.0
    %780 = vmatprep.subr.mxu0 0.0
    %781 = vmatpush2.msra.mxu0 0.0
    %782 = vmatprep.subr.mxu0 0.0
    %783 = vmatpush2.msra.mxu0 0.0
    %784 = vmatprep.subr.mxu0 0.0
    %785 = vmatpush2.msra.mxu0 0.0
    %786 = vmatprep.subr.mxu0 0.0
    %787 = vmatpush2.msra.mxu0 0.0
    %788 = vmatprep.subr.mxu0 0.0
    %789 = vmatpush2.msra.mxu0 0.0
    %790 = vmatprep.subr.mxu0 0.0
    %791 = vmatpush2.msra.mxu0 0.0
    %792 = vmatprep.subr.mxu0 0.0
    %793 = vmatpush2.msra.mxu0 0.0
    %794 = vmatprep.subr.mxu0 0.0
    %795 = vmatpush2.msra.mxu0 0.0
    %796 = vmatprep.subr.mxu0 0.0
    %797 = vmatpush2.msra.mxu0 0.0
    %798 = vmatprep.subr.mxu0 0.0
    %799 = vmatpush2.msra.mxu0 0.0
    %800 = vmatprep.subr.mxu0 0.0
    %801 = vmatpush2.msra.mxu0 0.0
    %802 = vmatprep.subr.mxu0 0.0
    %803 = vmatpush2.msra.mxu0 0.0
    %804 = vmatprep.subr.mxu0 0.0
    %805 = vmatpush2.msra.mxu0 0.0
    %806 = vmatprep.subr.mxu0 0.0
    %807 = vmatpush2.msra.mxu0 0.0
    %808 = vmatprep.subr.mxu0 0.0
    %809 = vmatpush2.msra.mxu0 0.0
    %810 = vmatprep.mubr.f32.mxu0 0.0
    %v811 = vand.u32 %v568, 4294901760
    %v812 = vsub.f32 %v568, %v811
    %813 = vmatmul.mubr.f32.gmra.mxu0 %v812
    %v814 = vpop.f32.mrf.mxu0
    %v815 = vadd.f32 %v735, %v814
    %v816 = vpop.f32.mrf.mxu0
    %817 = vmatprep.mubr.f32.mxu0 0.0
    %v818 = vand.u32 %v571, 4294901760
    %v819 = vsub.f32 %v571, %v818
    %820 = vmatmul.mubr.f32.gmra.mxu0 %v819
    %v821 = vpop.f32.mrf.mxu0
    %v822 = vadd.f32 %v741, %v821
    %v823 = vpop.f32.mrf.mxu0
    %824 = vdwg.mxu0
    %825 = vmatprep.subr.mxu0 0.0
    %826 = vmatpush1.msra.mxu0 0.0
    %827 = vmatprep.subr.mxu0 0.0
    %828 = vmatpush1.msra.mxu0 0.0
    %829 = vmatprep.subr.mxu0 0.0
    %830 = vmatpush1.msra.mxu0 0.0
    %831 = vmatprep.subr.mxu0 0.0
    %832 = vmatpush1.msra.mxu0 0.0
    %833 = vmatprep.subr.mxu0 0.0
    %834 = vmatpush1.msra.mxu0 0.0
    %835 = vmatprep.subr.mxu0 0.0
    %836 = vmatpush1.msra.mxu0 0.0
    %837 = vmatprep.subr.mxu0 0.0
    %838 = vmatpush1.msra.mxu0 0.0
    %839 = vmatprep.subr.mxu0 0.0
    %840 = vmatpush1.msra.mxu0 0.0
    %841 = vmatprep.subr.mxu0 0.0
    %842 = vmatpush1.msra.mxu0 0.0
    %843 = vmatprep.subr.mxu0 0.0
    %844 = vmatpush1.msra.mxu0 0.0
    %845 = vmatprep.subr.mxu0 0.0
    %846 = vmatpush1.msra.mxu0 0.0
    %847 = vmatprep.subr.mxu0 0.0
    %848 = vmatpush1.msra.mxu0 0.0
    %849 = vmatprep.subr.mxu0 0.0
    %850 = vmatpush1.msra.mxu0 0.0
    %851 = vmatprep.subr.mxu0 0.0
    %852 = vmatpush1.msra.mxu0 0.0
    %853 = vmatprep.subr.mxu0 0.0
    %854 = vmatpush1.msra.mxu0 0.0
    %855 = vmatprep.subr.mxu0 0.0
    %v856 = vand.u32 %v574, 4294901760
    %857 = vmatpush1.msra.mxu0 %v856
    %858 = vmatprep.subr.mxu0 0.0
    %859 = vmatpush2.msra.mxu0 0.0
    %860 = vmatprep.subr.mxu0 0.0
    %861 = vmatpush2.msra.mxu0 0.0
    %862 = vmatprep.subr.mxu0 0.0
    %863 = vmatpush2.msra.mxu0 0.0
    %864 = vmatprep.subr.mxu0 0.0
    %865 = vmatpush2.msra.mxu0 0.0
    %866 = vmatprep.subr.mxu0 0.0
    %867 = vmatpush2.msra.mxu0 0.0
    %868 = vmatprep.subr.mxu0 0.0
    %869 = vmatpush2.msra.mxu0 0.0
    %870 = vmatprep.subr.mxu0 0.0
    %871 = vmatpush2.msra.mxu0 0.0
    %872 = vmatprep.subr.mxu0 0.0
    %873 = vmatpush2.msra.mxu0 0.0
    %874 = vmatprep.subr.mxu0 0.0
    %875 = vmatpush2.msra.mxu0 0.0
    %876 = vmatprep.subr.mxu0 0.0
    %877 = vmatpush2.msra.mxu0 0.0
    %878 = vmatprep.subr.mxu0 0.0
    %879 = vmatpush2.msra.mxu0 0.0
    %880 = vmatprep.subr.mxu0 0.0
    %881 = vmatpush2.msra.mxu0 0.0
    %882 = vmatprep.subr.mxu0 0.0
    %883 = vmatpush2.msra.mxu0 0.0
    %884 = vmatprep.subr.mxu0 0.0
    %885 = vmatpush2.msra.mxu0 0.0
    %886 = vmatprep.subr.mxu0 0.0
    %887 = vmatpush2.msra.mxu0 0.0
    %888 = vmatprep.subr.mxu0 0.0
    %889 = vmatpush2.msra.mxu0 0.0
    %890 = vmatprep.mubr.f32.mxu0 0.0
    %v891 = vand.u32 %v568, 4294901760
    %v892 = vsub.f32 %v568, %v891
    %v893 = vand.u32 %v892, 4294901760
    %894 = vmatmul.mubr.f32.gmra.mxu0 %v893
    %v895 = vpop.f32.mrf.mxu0
    %v896 = vadd.f32 %v815, %v895
    %v897 = vpop.f32.mrf.mxu0
    %898 = vmatprep.mubr.f32.mxu0 0.0
    %v899 = vand.u32 %v571, 4294901760
    %v900 = vsub.f32 %v571, %v899
    %v901 = vand.u32 %v900, 4294901760
    %902 = vmatmul.mubr.f32.gmra.mxu0 %v901
    %v903 = vpop.f32.mrf.mxu0
    %v904 = vadd.f32 %v822, %v903
    %v905 = vpop.f32.mrf.mxu0
    %906 = vdwg.mxu0
    %907 = vmatprep.subr.mxu0 0.0
    %908 = vmatpush1.msra.mxu0 0.0
    %909 = vmatprep.subr.mxu0 0.0
    %910 = vmatpush1.msra.mxu0 0.0
    %911 = vmatprep.subr.mxu0 0.0
    %912 = vmatpush1.msra.mxu0 0.0
    %913 = vmatprep.subr.mxu0 0.0
    %914 = vmatpush1.msra.mxu0 0.0
    %915 = vmatprep.subr.mxu0 0.0
    %916 = vmatpush1.msra.mxu0 0.0
    %917 = vmatprep.subr.mxu0 0.0
    %918 = vmatpush1.msra.mxu0 0.0
    %919 = vmatprep.subr.mxu0 0.0
    %920 = vmatpush1.msra.mxu0 0.0
    %921 = vmatprep.subr.mxu0 0.0
    %922 = vmatpush1.msra.mxu0 0.0
    %923 = vmatprep.subr.mxu0 0.0
    %924 = vmatpush1.msra.mxu0 0.0
    %925 = vmatprep.subr.mxu0 0.0
    %926 = vmatpush1.msra.mxu0 0.0
    %927 = vmatprep.subr.mxu0 0.0
    %928 = vmatpush1.msra.mxu0 0.0
    %929 = vmatprep.subr.mxu0 0.0
    %930 = vmatpush1.msra.mxu0 0.0
    %931 = vmatprep.subr.mxu0 0.0
    %932 = vmatpush1.msra.mxu0 0.0
    %933 = vmatprep.subr.mxu0 0.0
    %934 = vmatpush1.msra.mxu0 0.0
    %935 = vmatprep.subr.mxu0 0.0
    %936 = vmatpush1.msra.mxu0 0.0
    %937 = vmatprep.subr.mxu0 0.0
    %v938 = vand.u32 %v574, 4294901760
    %v939 = vsub.f32 %v574, %v938
    %v940 = vand.u32 %v939, 4294901760
    %941 = vmatpush1.msra.mxu0 %v940
    %942 = vmatprep.subr.mxu0 0.0
    %943 = vmatpush2.msra.mxu0 0.0
    %944 = vmatprep.subr.mxu0 0.0
    %945 = vmatpush2.msra.mxu0 0.0
    %946 = vmatprep.subr.mxu0 0.0
    %947 = vmatpush2.msra.mxu0 0.0
    %948 = vmatprep.subr.mxu0 0.0
    %949 = vmatpush2.msra.mxu0 0.0
    %950 = vmatprep.subr.mxu0 0.0
    %951 = vmatpush2.msra.mxu0 0.0
    %952 = vmatprep.subr.mxu0 0.0
    %953 = vmatpush2.msra.mxu0 0.0
    %954 = vmatprep.subr.mxu0 0.0
    %955 = vmatpush2.msra.mxu0 0.0
    %956 = vmatprep.subr.mxu0 0.0
    %957 = vmatpush2.msra.mxu0 0.0
    %958 = vmatprep.subr.mxu0 0.0
    %959 = vmatpush2.msra.mxu0 0.0
    %960 = vmatprep.subr.mxu0 0.0
    %961 = vmatpush2.msra.mxu0 0.0
    %962 = vmatprep.subr.mxu0 0.0
    %963 = vmatpush2.msra.mxu0 0.0
    %964 = vmatprep.subr.mxu0 0.0
    %965 = vmatpush2.msra.mxu0 0.0
    %966 = vmatprep.subr.mxu0 0.0
    %967 = vmatpush2.msra.mxu0 0.0
    %968 = vmatprep.subr.mxu0 0.0
    %969 = vmatpush2.msra.mxu0 0.0
    %970 = vmatprep.subr.mxu0 0.0
    %971 = vmatpush2.msra.mxu0 0.0
    %972 = vmatprep.subr.mxu0 0.0
    %973 = vmatpush2.msra.mxu0 0.0
    %974 = vmatprep.mubr.f32.mxu0 0.0
    %v975 = vand.u32 %v568, 4294901760
    %976 = vmatmul.mubr.f32.gmra.mxu0 %v975
    %v977 = vpop.f32.mrf.mxu0
    %v978 = vadd.f32 %v896, %v977
    %v979 = vpop.f32.mrf.mxu0
    %980 = vmatprep.mubr.f32.mxu0 0.0
    %v981 = vand.u32 %v571, 4294901760
    %982 = vmatmul.mubr.f32.gmra.mxu0 %v981
    %v983 = vpop.f32.mrf.mxu0
    %v984 = vadd.f32 %v904, %v983
    %v985 = vpop.f32.mrf.mxu0
    %986 = vdwg.mxu0
    %987 = vmatprep.subr.mxu0 0.0
    %988 = vmatpush1.msra.mxu0 0.0
    %989 = vmatprep.subr.mxu0 0.0
    %990 = vmatpush1.msra.mxu0 0.0
    %991 = vmatprep.subr.mxu0 0.0
    %992 = vmatpush1.msra.mxu0 0.0
    %993 = vmatprep.subr.mxu0 0.0
    %994 = vmatpush1.msra.mxu0 0.0
    %995 = vmatprep.subr.mxu0 0.0
    %996 = vmatpush1.msra.mxu0 0.0
    %997 = vmatprep.subr.mxu0 0.0
    %998 = vmatpush1.msra.mxu0 0.0
    %999 = vmatprep.subr.mxu0 0.0
    %1000 = vmatpush1.msra.mxu0 0.0
    %1001 = vmatprep.subr.mxu0 0.0
    %1002 = vmatpush1.msra.mxu0 0.0
    %1003 = vmatprep.subr.mxu0 0.0
    %1004 = vmatpush1.msra.mxu0 0.0
    %1005 = vmatprep.subr.mxu0 0.0
    %1006 = vmatpush1.msra.mxu0 0.0
    %1007 = vmatprep.subr.mxu0 0.0
    %1008 = vmatpush1.msra.mxu0 0.0
    %1009 = vmatprep.subr.mxu0 0.0
    %1010 = vmatpush1.msra.mxu0 0.0
    %1011 = vmatprep.subr.mxu0 0.0
    %1012 = vmatpush1.msra.mxu0 0.0
    %1013 = vmatprep.subr.mxu0 0.0
    %1014 = vmatpush1.msra.mxu0 0.0
    %1015 = vmatprep.subr.mxu0 0.0
    %1016 = vmatpush1.msra.mxu0 0.0
    %1017 = vmatprep.subr.mxu0 0.0
    %v1018 = vand.u32 %v574, 4294901760
    %1019 = vmatpush1.msra.mxu0 %v1018
    %1020 = vmatprep.subr.mxu0 0.0
    %1021 = vmatpush2.msra.mxu0 0.0
    %1022 = vmatprep.subr.mxu0 0.0
    %1023 = vmatpush2.msra.mxu0 0.0
    %1024 = vmatprep.subr.mxu0 0.0
    %1025 = vmatpush2.msra.mxu0 0.0
    %1026 = vmatprep.subr.mxu0 0.0
    %1027 = vmatpush2.msra.mxu0 0.0
    %1028 = vmatprep.subr.mxu0 0.0
    %1029 = vmatpush2.msra.mxu0 0.0
    %1030 = vmatprep.subr.mxu0 0.0
    %1031 = vmatpush2.msra.mxu0 0.0
    %1032 = vmatprep.subr.mxu0 0.0
    %1033 = vmatpush2.msra.mxu0 0.0
    %1034 = vmatprep.subr.mxu0 0.0
    %1035 = vmatpush2.msra.mxu0 0.0
    %1036 = vmatprep.subr.mxu0 0.0
    %1037 = vmatpush2.msra.mxu0 0.0
    %1038 = vmatprep.subr.mxu0 0.0
    %1039 = vmatpush2.msra.mxu0 0.0
    %1040 = vmatprep.subr.mxu0 0.0
    %1041 = vmatpush2.msra.mxu0 0.0
    %1042 = vmatprep.subr.mxu0 0.0
    %1043 = vmatpush2.msra.mxu0 0.0
    %1044 = vmatprep.subr.mxu0 0.0
    %1045 = vmatpush2.msra.mxu0 0.0
    %1046 = vmatprep.subr.mxu0 0.0
    %1047 = vmatpush2.msra.mxu0 0.0
    %1048 = vmatprep.subr.mxu0 0.0
    %1049 = vmatpush2.msra.mxu0 0.0
    %1050 = vmatprep.subr.mxu0 0.0
    %1051 = vmatpush2.msra.mxu0 0.0
    %1052 = vmatprep.mubr.f32.mxu0 0.0
    %v1053 = vand.u32 %v568, 4294901760
    %1054 = vmatmul.mubr.f32.gmra.mxu0 %v1053
    %v1055 = vpop.f32.mrf.mxu0
    %v1056 = vadd.f32 %v978, %v1055
    %v1057 = vpop.f32.mrf.mxu0
    %1058 = vmatprep.mubr.f32.mxu0 0.0
    %v1059 = vand.u32 %v571, 4294901760
    %1060 = vmatmul.mubr.f32.gmra.mxu0 %v1059
    %v1061 = vpop.f32.mrf.mxu0
    %v1062 = vadd.f32 %v984, %v1061
    %v1063 = vpop.f32.mrf.mxu0
    %1064 = vdwg.mxu0
    %v1065 = vld [vmem:[%s4] sm:$0x1]
    %v1067 = vlaneseq
    %v1068 = vshrl.u32 %v1067, 7
    %v1069 = vsub.s32 0, %v1068
    %v1070 = vrot.slane %v1065, %v1069
    %v1072 = vadd.f32 %v1056, %v1070
    %v1073 = vadd.f32 %v1062, %v1070
    %v1074 = vmax.f32 %v1072, 0.0
    %v1075 = vmax.f32 %v1073, 0.0
    %v1076 = vld [vmem:[#allocation2] sm:$0xff]
    %v1077 = vld [vmem:[#allocation2 + $0x8] sm:$0xff]
    %v1078 = vld [vmem:[#allocation2 + $0x10] sm:$0xff]
    %v1079 = vld [vmem:[#allocation2 + $0x18] sm:$0xff]
    %v1080 = vld [vmem:[#allocation2 + $0x20] sm:$0xff]
    %v1081 = vld [vmem:[#allocation2 + $0x28] sm:$0xff]
    %v1082 = vld [vmem:[#allocation2 + $0x30] sm:$0xff]
    %v1083 = vld [vmem:[#allocation2 + $0x38] sm:$0xff]
    %v1084 = vld [vmem:[#allocation2 + $0x40] sm:$0xff]
    %v1085 = vld [vmem:[#allocation2 + $0x48] sm:$0xff]
    %v1086 = vld [vmem:[#allocation2 + $0x50] sm:$0xff]
    %v1087 = vld [vmem:[#allocation2 + $0x58] sm:$0xff]
    %v1088 = vld [vmem:[#allocation2 + $0x60] sm:$0xff]
    %v1089 = vld [vmem:[#allocation2 + $0x68] sm:$0xff]
    %v1090 = vld [vmem:[#allocation2 + $0x70] sm:$0xff]
    %v1091 = vld [vmem:[#allocation2 + $0x78] sm:$0xff]
    %v1092 = vld [vmem:[%s6] sm:$0x1]
    %v1094 = vlaneseq
    %v1095 = vshrl.u32 %v1094, 7
    %v1096 = vsub.s32 0, %v1095
    %v1097 = vrot.slane %v1092, %v1096
    %1099 = vmatprep.subr.mxu0 0.0
    %v1100 = vand.u32 %v1091, 4294901760
    %1101 = vmatpush1.msra.mxu0 %v1100
    %1102 = vmatprep.subr.mxu0 0.0
    %v1103 = vand.u32 %v1090, 4294901760
    %1104 = vmatpush1.msra.mxu0 %v1103
    %1105 = vmatprep.subr.mxu0 0.0
    %v1106 = vand.u32 %v1089, 4294901760
    %1107 = vmatpush1.msra.mxu0 %v1106
    %1108 = vmatprep.subr.mxu0 0.0
    %v1109 = vand.u32 %v1088, 4294901760
    %1110 = vmatpush1.msra.mxu0 %v1109
    %1111 = vmatprep.subr.mxu0 0.0
    %v1112 = vand.u32 %v1087, 4294901760
    %1113 = vmatpush1.msra.mxu0 %v1112
    %1114 = vmatprep.subr.mxu0 0.0
    %v1115 = vand.u32 %v1086, 4294901760
    %1116 = vmatpush1.msra.mxu0 %v1115
    %1117 = vmatprep.subr.mxu0 0.0
    %v1118 = vand.u32 %v1085, 4294901760
    %1119 = vmatpush1.msra.mxu0 %v1118
    %1120 = vmatprep.subr.mxu0 0.0
    %v1121 = vand.u32 %v1084, 4294901760
    %1122 = vmatpush1.msra.mxu0 %v1121
    %1123 = vmatprep.subr.mxu0 0.0
    %v1124 = vand.u32 %v1083, 4294901760
    %1125 = vmatpush1.msra.mxu0 %v1124
    %1126 = vmatprep.subr.mxu0 0.0
    %v1127 = vand.u32 %v1082, 4294901760
    %1128 = vmatpush1.msra.mxu0 %v1127
    %1129 = vmatprep.subr.mxu0 0.0
    %v1130 = vand.u32 %v1081, 4294901760
    %1131 = vmatpush1.msra.mxu0 %v1130
    %1132 = vmatprep.subr.mxu0 0.0
    %v1133 = vand.u32 %v1080, 4294901760
    %1134 = vmatpush1.msra.mxu0 %v1133
    %1135 = vmatprep.subr.mxu0 0.0
    %v1136 = vand.u32 %v1079, 4294901760
    %1137 = vmatpush1.msra.mxu0 %v1136
    %1138 = vmatprep.subr.mxu0 0.0
    %v1139 = vand.u32 %v1078, 4294901760
    %1140 = vmatpush1.msra.mxu0 %v1139
    %1141 = vmatprep.subr.mxu0 0.0
    %v1142 = vand.u32 %v1077, 4294901760
    %1143 = vmatpush1.msra.mxu0 %v1142
    %1144 = vmatprep.subr.mxu0 0.0
    %v1145 = vand.u32 %v1076, 4294901760
    %1146 = vmatpush1.msra.mxu0 %v1145
    %1147 = vmatprep.subr.mxu0 0.0
    %1148 = vmatpush2.msra.mxu0 0.0
    %1149 = vmatprep.subr.mxu0 0.0
    %1150 = vmatpush2.msra.mxu0 0.0
    %1151 = vmatprep.subr.mxu0 0.0
    %1152 = vmatpush2.msra.mxu0 0.0
    %1153 = vmatprep.subr.mxu0 0.0
    %1154 = vmatpush2.msra.mxu0 0.0
    %1155 = vmatprep.subr.mxu0 0.0
    %1156 = vmatpush2.msra.mxu0 0.0
    %1157 = vmatprep.subr.mxu0 0.0
    %1158 = vmatpush2.msra.mxu0 0.0
    %1159 = vmatprep.subr.mxu0 0.0
    %1160 = vmatpush2.msra.mxu0 0.0
    %1161 = vmatprep.subr.mxu0 0.0
    %1162 = vmatpush2.msra.mxu0 0.0
    %1163 = vmatprep.subr.mxu0 0.0
    %1164 = vmatpush2.msra.mxu0 0.0
    %1165 = vmatprep.subr.mxu0 0.0
    %1166 = vmatpush2.msra.mxu0 0.0
    %1167 = vmatprep.subr.mxu0 0.0
    %1168 = vmatpush2.msra.mxu0 0.0
    %1169 = vmatprep.subr.mxu0 0.0
    %1170 = vmatpush2.msra.mxu0 0.0
    %1171 = vmatprep.subr.mxu0 0.0
    %1172 = vmatpush2.msra.mxu0 0.0
    %1173 = vmatprep.subr.mxu0 0.0
    %1174 = vmatpush2.msra.mxu0 0.0
    %1175 = vmatprep.subr.mxu0 0.0
    %1176 = vmatpush2.msra.mxu0 0.0
    %1177 = vmatprep.subr.mxu0 0.0
    %1178 = vmatpush2.msra.mxu0 0.0
    %1179 = vmatprep.mubr.f32.mxu0 0.0
    %v1180 = vand.u32 %v1074, 4294901760
    %v1181 = vsub.f32 %v1074, %v1180
    %v1182 = vand.u32 %v1181, 4294901760
    %v1183 = vsub.f32 %v1181, %v1182
    %v1184 = vand.u32 %v1183, 4294901760
    %1185 = vmatmul.mubr.f32.gmra.mxu0 %v1184
    %v1186 = vpop.f32.mrf.mxu0
    %v1187 = vadd.f32 %v1097, %v1186
    %v1188 = vpop.f32.mrf.mxu0
    %1189 = vmatprep.mubr.f32.mxu0 0.0
    %v1190 = vand.u32 %v1075, 4294901760
    %v1191 = vsub.f32 %v1075, %v1190
    %v1192 = vand.u32 %v1191, 4294901760
    %v1193 = vsub.f32 %v1191, %v1192
    %v1194 = vand.u32 %v1193, 4294901760
    %1195 = vmatmul.mubr.f32.gmra.mxu0 %v1194
    %v1196 = vpop.f32.mrf.mxu0
    %v1197 = vadd.f32 %v1097, %v1196
    %v1198 = vpop.f32.mrf.mxu0
    %1199 = vdwg.mxu0
    %1200 = vmatprep.subr.mxu0 0.0
    %v1201 = vand.u32 %v1091, 4294901760
    %v1202 = vsub.f32 %v1091, %v1201
    %v1203 = vand.u32 %v1202, 4294901760
    %v1204 = vsub.f32 %v1202, %v1203
    %v1205 = vand.u32 %v1204, 4294901760
    %1206 = vmatpush1.msra.mxu0 %v1205
    %1207 = vmatprep.subr.mxu0 0.0
    %v1208 = vand.u32 %v1090, 4294901760
    %v1209 = vsub.f32 %v1090, %v1208
    %v1210 = vand.u32 %v1209, 4294901760
    %v1211 = vsub.f32 %v1209, %v1210
    %v1212 = vand.u32 %v1211, 4294901760
    %1213 = vmatpush1.msra.mxu0 %v1212
    %1214 = vmatprep.subr.mxu0 0.0
    %v1215 = vand.u32 %v1089, 4294901760
    %v1216 = vsub.f32 %v1089, %v1215
    %v1217 = vand.u32 %v1216, 4294901760
    %v1218 = vsub.f32 %v1216, %v1217
    %v1219 = vand.u32 %v1218, 4294901760
    %1220 = vmatpush1.msra.mxu0 %v1219
    %1221 = vmatprep.subr.mxu0 0.0
    %v1222 = vand.u32 %v1088, 4294901760
    %v1223 = vsub.f32 %v1088, %v1222
    %v1224 = vand.u32 %v1223, 4294901760
    %v1225 = vsub.f32 %v1223, %v1224
    %v1226 = vand.u32 %v1225, 4294901760
    %1227 = vmatpush1.msra.mxu0 %v1226
    %1228 = vmatprep.subr.mxu0 0.0
    %v1229 = vand.u32 %v1087, 4294901760
    %v1230 = vsub.f32 %v1087, %v1229
    %v1231 = vand.u32 %v1230, 4294901760
    %v1232 = vsub.f32 %v1230, %v1231
    %v1233 = vand.u32 %v1232, 4294901760
    %1234 = vmatpush1.msra.mxu0 %v1233
    %1235 = vmatprep.subr.mxu0 0.0
    %v1236 = vand.u32 %v1086, 4294901760
    %v1237 = vsub.f32 %v1086, %v1236
    %v1238 = vand.u32 %v1237, 4294901760
    %v1239 = vsub.f32 %v1237, %v1238
    %v1240 = vand.u32 %v1239, 4294901760
    %1241 = vmatpush1.msra.mxu0 %v1240
    %1242 = vmatprep.subr.mxu0 0.0
    %v1243 = vand.u32 %v1085, 4294901760
    %v1244 = vsub.f32 %v1085, %v1243
    %v1245 = vand.u32 %v1244, 4294901760
    %v1246 = vsub.f32 %v1244, %v1245
    %v1247 = vand.u32 %v1246, 4294901760
    %1248 = vmatpush1.msra.mxu0 %v1247
    %1249 = vmatprep.subr.mxu0 0.0
    %v1250 = vand.u32 %v1084, 4294901760
    %v1251 = vsub.f32 %v1084, %v1250
    %v1252 = vand.u32 %v1251, 4294901760
    %v1253 = vsub.f32 %v1251, %v1252
    %v1254 = vand.u32 %v1253, 4294901760
    %1255 = vmatpush1.msra.mxu0 %v1254
    %1256 = vmatprep.subr.mxu0 0.0
    %v1257 = vand.u32 %v1083, 4294901760
    %v1258 = vsub.f32 %v1083, %v1257
    %v1259 = vand.u32 %v1258, 4294901760
    %v1260 = vsub.f32 %v1258, %v1259
    %v1261 = vand.u32 %v1260, 4294901760
    %1262 = vmatpush1.msra.mxu0 %v1261
    %1263 = vmatprep.subr.mxu0 0.0
    %v1264 = vand.u32 %v1082, 4294901760
    %v1265 = vsub.f32 %v1082, %v1264
    %v1266 = vand.u32 %v1265, 4294901760
    %v1267 = vsub.f32 %v1265, %v1266
    %v1268 = vand.u32 %v1267, 4294901760
    %1269 = vmatpush1.msra.mxu0 %v1268
    %1270 = vmatprep.subr.mxu0 0.0
    %v1271 = vand.u32 %v1081, 4294901760
    %v1272 = vsub.f32 %v1081, %v1271
    %v1273 = vand.u32 %v1272, 4294901760
    %v1274 = vsub.f32 %v1272, %v1273
    %v1275 = vand.u32 %v1274, 4294901760
    %1276 = vmatpush1.msra.mxu0 %v1275
    %1277 = vmatprep.subr.mxu0 0.0
    %v1278 = vand.u32 %v1080, 4294901760
    %v1279 = vsub.f32 %v1080, %v1278
    %v1280 = vand.u32 %v1279, 4294901760
    %v1281 = vsub.f32 %v1279, %v1280
    %v1282 = vand.u32 %v1281, 4294901760
    %1283 = vmatpush1.msra.mxu0 %v1282
    %1284 = vmatprep.subr.mxu0 0.0
    %v1285 = vand.u32 %v1079, 4294901760
    %v1286 = vsub.f32 %v1079, %v1285
    %v1287 = vand.u32 %v1286, 4294901760
    %v1288 = vsub.f32 %v1286, %v1287
    %v1289 = vand.u32 %v1288, 4294901760
    %1290 = vmatpush1.msra.mxu0 %v1289
    %1291 = vmatprep.subr.mxu0 0.0
    %v1292 = vand.u32 %v1078, 4294901760
    %v1293 = vsub.f32 %v1078, %v1292
    %v1294 = vand.u32 %v1293, 4294901760
    %v1295 = vsub.f32 %v1293, %v1294
    %v1296 = vand.u32 %v1295, 4294901760
    %1297 = vmatpush1.msra.mxu0 %v1296
    %1298 = vmatprep.subr.mxu0 0.0
    %v1299 = vand.u32 %v1077, 4294901760
    %v1300 = vsub.f32 %v1077, %v1299
    %v1301 = vand.u32 %v1300, 4294901760
    %v1302 = vsub.f32 %v1300, %v1301
    %v1303 = vand.u32 %v1302, 4294901760
    %1304 = vmatpush1.msra.mxu0 %v1303
    %1305 = vmatprep.subr.mxu0 0.0
    %v1306 = vand.u32 %v1076, 4294901760
    %v1307 = vsub.f32 %v1076, %v1306
    %v1308 = vand.u32 %v1307, 4294901760
    %v1309 = vsub.f32 %v1307, %v1308
    %v1310 = vand.u32 %v1309, 4294901760
    %1311 = vmatpush1.msra.mxu0 %v1310
    %1312 = vmatprep.subr.mxu0 0.0
    %1313 = vmatpush2.msra.mxu0 0.0
    %1314 = vmatprep.subr.mxu0 0.0
    %1315 = vmatpush2.msra.mxu0 0.0
    %1316 = vmatprep.subr.mxu0 0.0
    %1317 = vmatpush2.msra.mxu0 0.0
    %1318 = vmatprep.subr.mxu0 0.0
    %1319 = vmatpush2.msra.mxu0 0.0
    %1320 = vmatprep.subr.mxu0 0.0
    %1321 = vmatpush2.msra.mxu0 0.0
    %1322 = vmatprep.subr.mxu0 0.0
    %1323 = vmatpush2.msra.mxu0 0.0
    %1324 = vmatprep.subr.mxu0 0.0
    %1325 = vmatpush2.msra.mxu0 0.0
    %1326 = vmatprep.subr.mxu0 0.0
    %1327 = vmatpush2.msra.mxu0 0.0
    %1328 = vmatprep.subr.mxu0 0.0
    %1329 = vmatpush2.msra.mxu0 0.0
    %1330 = vmatprep.subr.mxu0 0.0
    %1331 = vmatpush2.msra.mxu0 0.0
    %1332 = vmatprep.subr.mxu0 0.0
    %1333 = vmatpush2.msra.mxu0 0.0
    %1334 = vmatprep.subr.mxu0 0.0
    %1335 = vmatpush2.msra.mxu0 0.0
    %1336 = vmatprep.subr.mxu0 0.0
    %1337 = vmatpush2.msra.mxu0 0.0
    %1338 = vmatprep.subr.mxu0 0.0
    %1339 = vmatpush2.msra.mxu0 0.0
    %1340 = vmatprep.subr.mxu0 0.0
    %1341 = vmatpush2.msra.mxu0 0.0
    %1342 = vmatprep.subr.mxu0 0.0
    %1343 = vmatpush2.msra.mxu0 0.0
    %1344 = vmatprep.mubr.f32.mxu0 0.0
    %v1345 = vand.u32 %v1074, 4294901760
    %1346 = vmatmul.mubr.f32.gmra.mxu0 %v1345
    %v1347 = vpop.f32.mrf.mxu0
    %v1348 = vadd.f32 %v1187, %v1347
    %v1349 = vpop.f32.mrf.mxu0
    %1350 = vmatprep.mubr.f32.mxu0 0.0
    %v1351 = vand.u32 %v1075, 4294901760
    %1352 = vmatmul.mubr.f32.gmra.mxu0 %v1351
    %v1353 = vpop.f32.mrf.mxu0
    %v1354 = vadd.f32 %v1197, %v1353
    %v1355 = vpop.f32.mrf.mxu0
    %1356 = vdwg.mxu0
    %1357 = vmatprep.subr.mxu0 0.0
    %v1358 = vand.u32 %v1091, 4294901760
    %v1359 = vsub.f32 %v1091, %v1358
    %1360 = vmatpush1.msra.mxu0 %v1359
    %1361 = vmatprep.subr.mxu0 0.0
    %v1362 = vand.u32 %v1090, 4294901760
    %v1363 = vsub.f32 %v1090, %v1362
    %1364 = vmatpush1.msra.mxu0 %v1363
    %1365 = vmatprep.subr.mxu0 0.0
    %v1366 = vand.u32 %v1089, 4294901760
    %v1367 = vsub.f32 %v1089, %v1366
    %1368 = vmatpush1.msra.mxu0 %v1367
    %1369 = vmatprep.subr.mxu0 0.0
    %v1370 = vand.u32 %v1088, 4294901760
    %v1371 = vsub.f32 %v1088, %v1370
    %1372 = vmatpush1.msra.mxu0 %v1371
    %1373 = vmatprep.subr.mxu0 0.0
    %v1374 = vand.u32 %v1087, 4294901760
    %v1375 = vsub.f32 %v1087, %v1374
    %1376 = vmatpush1.msra.mxu0 %v1375
    %1377 = vmatprep.subr.mxu0 0.0
    %v1378 = vand.u32 %v1086, 4294901760
    %v1379 = vsub.f32 %v1086, %v1378
    %1380 = vmatpush1.msra.mxu0 %v1379
    %1381 = vmatprep.subr.mxu0 0.0
    %v1382 = vand.u32 %v1085, 4294901760
    %v1383 = vsub.f32 %v1085, %v1382
    %1384 = vmatpush1.msra.mxu0 %v1383
    %1385 = vmatprep.subr.mxu0 0.0
    %v1386 = vand.u32 %v1084, 4294901760
    %v1387 = vsub.f32 %v1084, %v1386
    %1388 = vmatpush1.msra.mxu0 %v1387
    %1389 = vmatprep.subr.mxu0 0.0
    %v1390 = vand.u32 %v1083, 4294901760
    %v1391 = vsub.f32 %v1083, %v1390
    %1392 = vmatpush1.msra.mxu0 %v1391
    %1393 = vmatprep.subr.mxu0 0.0
    %v1394 = vand.u32 %v1082, 4294901760
    %v1395 = vsub.f32 %v1082, %v1394
    %1396 = vmatpush1.msra.mxu0 %v1395
    %1397 = vmatprep.subr.mxu0 0.0
    %v1398 = vand.u32 %v1081, 4294901760
    %v1399 = vsub.f32 %v1081, %v1398
    %1400 = vmatpush1.msra.mxu0 %v1399
    %1401 = vmatprep.subr.mxu0 0.0
    %v1402 = vand.u32 %v1080, 4294901760
    %v1403 = vsub.f32 %v1080, %v1402
    %1404 = vmatpush1.msra.mxu0 %v1403
    %1405 = vmatprep.subr.mxu0 0.0
    %v1406 = vand.u32 %v1079, 4294901760
    %v1407 = vsub.f32 %v1079, %v1406
    %1408 = vmatpush1.msra.mxu0 %v1407
    %1409 = vmatprep.subr.mxu0 0.0
    %v1410 = vand.u32 %v1078, 4294901760
    %v1411 = vsub.f32 %v1078, %v1410
    %1412 = vmatpush1.msra.mxu0 %v1411
    %1413 = vmatprep.subr.mxu0 0.0
    %v1414 = vand.u32 %v1077, 4294901760
    %v1415 = vsub.f32 %v1077, %v1414
    %1416 = vmatpush1.msra.mxu0 %v1415
    %1417 = vmatprep.subr.mxu0 0.0
    %v1418 = vand.u32 %v1076, 4294901760
    %v1419 = vsub.f32 %v1076, %v1418
    %1420 = vmatpush1.msra.mxu0 %v1419
    %1421 = vmatprep.subr.mxu0 0.0
    %1422 = vmatpush2.msra.mxu0 0.0
    %1423 = vmatprep.subr.mxu0 0.0
    %1424 = vmatpush2.msra.mxu0 0.0
    %1425 = vmatprep.subr.mxu0 0.0
    %1426 = vmatpush2.msra.mxu0 0.0
    %1427 = vmatprep.subr.mxu0 0.0
    %1428 = vmatpush2.msra.mxu0 0.0
    %1429 = vmatprep.subr.mxu0 0.0
    %1430 = vmatpush2.msra.mxu0 0.0
    %1431 = vmatprep.subr.mxu0 0.0
    %1432 = vmatpush2.msra.mxu0 0.0
    %1433 = vmatprep.subr.mxu0 0.0
    %1434 = vmatpush2.msra.mxu0 0.0
    %1435 = vmatprep.subr.mxu0 0.0
    %1436 = vmatpush2.msra.mxu0 0.0
    %1437 = vmatprep.subr.mxu0 0.0
    %1438 = vmatpush2.msra.mxu0 0.0
    %1439 = vmatprep.subr.mxu0 0.0
    %1440 = vmatpush2.msra.mxu0 0.0
    %1441 = vmatprep.subr.mxu0 0.0
    %1442 = vmatpush2.msra.mxu0 0.0
    %1443 = vmatprep.subr.mxu0 0.0
    %1444 = vmatpush2.msra.mxu0 0.0
    %1445 = vmatprep.subr.mxu0 0.0
    %1446 = vmatpush2.msra.mxu0 0.0
    %1447 = vmatprep.subr.mxu0 0.0
    %1448 = vmatpush2.msra.mxu0 0.0
    %1449 = vmatprep.subr.mxu0 0.0
    %1450 = vmatpush2.msra.mxu0 0.0
    %1451 = vmatprep.subr.mxu0 0.0
    %1452 = vmatpush2.msra.mxu0 0.0
    %1453 = vmatprep.mubr.f32.mxu0 0.0
    %v1454 = vand.u32 %v1074, 4294901760
    %v1455 = vsub.f32 %v1074, %v1454
    %1456 = vmatmul.mubr.f32.gmra.mxu0 %v1455
    %v1457 = vpop.f32.mrf.mxu0
    %v1458 = vadd.f32 %v1348, %v1457
    %v1459 = vpop.f32.mrf.mxu0
    %1460 = vmatprep.mubr.f32.mxu0 0.0
    %v1461 = vand.u32 %v1075, 4294901760
    %v1462 = vsub.f32 %v1075, %v1461
    %1463 = vmatmul.mubr.f32.gmra.mxu0 %v1462
    %v1464 = vpop.f32.mrf.mxu0
    %v1465 = vadd.f32 %v1354, %v1464
    %v1466 = vpop.f32.mrf.mxu0
    %1467 = vdwg.mxu0
    %1468 = vmatprep.subr.mxu0 0.0
    %v1469 = vand.u32 %v1091, 4294901760
    %1470 = vmatpush1.msra.mxu0 %v1469
    %1471 = vmatprep.subr.mxu0 0.0
    %v1472 = vand.u32 %v1090, 4294901760
    %1473 = vmatpush1.msra.mxu0 %v1472
    %1474 = vmatprep.subr.mxu0 0.0
    %v1475 = vand.u32 %v1089, 4294901760
    %1476 = vmatpush1.msra.mxu0 %v1475
    %1477 = vmatprep.subr.mxu0 0.0
    %v1478 = vand.u32 %v1088, 4294901760
    %1479 = vmatpush1.msra.mxu0 %v1478
    %1480 = vmatprep.subr.mxu0 0.0
    %v1481 = vand.u32 %v1087, 4294901760
    %1482 = vmatpush1.msra.mxu0 %v1481
    %1483 = vmatprep.subr.mxu0 0.0
    %v1484 = vand.u32 %v1086, 4294901760
    %1485 = vmatpush1.msra.mxu0 %v1484
    %1486 = vmatprep.subr.mxu0 0.0
    %v1487 = vand.u32 %v1085, 4294901760
    %1488 = vmatpush1.msra.mxu0 %v1487
    %1489 = vmatprep.subr.mxu0 0.0
    %v1490 = vand.u32 %v1084, 4294901760
    %1491 = vmatpush1.msra.mxu0 %v1490
    %1492 = vmatprep.subr.mxu0 0.0
    %v1493 = vand.u32 %v1083, 4294901760
    %1494 = vmatpush1.msra.mxu0 %v1493
    %1495 = vmatprep.subr.mxu0 0.0
    %v1496 = vand.u32 %v1082, 4294901760
    %1497 = vmatpush1.msra.mxu0 %v1496
    %1498 = vmatprep.subr.mxu0 0.0
    %v1499 = vand.u32 %v1081, 4294901760
    %1500 = vmatpush1.msra.mxu0 %v1499
    %1501 = vmatprep.subr.mxu0 0.0
    %v1502 = vand.u32 %v1080, 4294901760
    %1503 = vmatpush1.msra.mxu0 %v1502
    %1504 = vmatprep.subr.mxu0 0.0
    %v1505 = vand.u32 %v1079, 4294901760
    %1506 = vmatpush1.msra.mxu0 %v1505
    %1507 = vmatprep.subr.mxu0 0.0
    %v1508 = vand.u32 %v1078, 4294901760
    %1509 = vmatpush1.msra.mxu0 %v1508
    %1510 = vmatprep.subr.mxu0 0.0
    %v1511 = vand.u32 %v1077, 4294901760
    %1512 = vmatpush1.msra.mxu0 %v1511
    %1513 = vmatprep.subr.mxu0 0.0
    %v1514 = vand.u32 %v1076, 4294901760
    %1515 = vmatpush1.msra.mxu0 %v1514
    %1516 = vmatprep.subr.mxu0 0.0
    %1517 = vmatpush2.msra.mxu0 0.0
    %1518 = vmatprep.subr.mxu0 0.0
    %1519 = vmatpush2.msra.mxu0 0.0
    %1520 = vmatprep.subr.mxu0 0.0
    %1521 = vmatpush2.msra.mxu0 0.0
    %1522 = vmatprep.subr.mxu0 0.0
    %1523 = vmatpush2.msra.mxu0 0.0
    %1524 = vmatprep.subr.mxu0 0.0
    %1525 = vmatpush2.msra.mxu0 0.0
    %1526 = vmatprep.subr.mxu0 0.0
    %1527 = vmatpush2.msra.mxu0 0.0
    %1528 = vmatprep.subr.mxu0 0.0
    %1529 = vmatpush2.msra.mxu0 0.0
    %1530 = vmatprep.subr.mxu0 0.0
    %1531 = vmatpush2.msra.mxu0 0.0
    %1532 = vmatprep.subr.mxu0 0.0
    %1533 = vmatpush2.msra.mxu0 0.0
    %1534 = vmatprep.subr.mxu0 0.0
    %1535 = vmatpush2.msra.mxu0 0.0
    %1536 = vmatprep.subr.mxu0 0.0
    %1537 = vmatpush2.msra.mxu0 0.0
    %1538 = vmatprep.subr.mxu0 0.0
    %1539 = vmatpush2.msra.mxu0 0.0
    %1540 = vmatprep.subr.mxu0 0.0
    %1541 = vmatpush2.msra.mxu0 0.0
    %1542 = vmatprep.subr.mxu0 0.0
    %1543 = vmatpush2.msra.mxu0 0.0
    %1544 = vmatprep.subr.mxu0 0.0
    %1545 = vmatpush2.msra.mxu0 0.0
    %1546 = vmatprep.subr.mxu0 0.0
    %1547 = vmatpush2.msra.mxu0 0.0
    %1548 = vmatprep.mubr.f32.mxu0 0.0
    %v1549 = vand.u32 %v1074, 4294901760
    %v1550 = vsub.f32 %v1074, %v1549
    %v1551 = vand.u32 %v1550, 4294901760
    %1552 = vmatmul.mubr.f32.gmra.mxu0 %v1551
    %v1553 = vpop.f32.mrf.mxu0
    %v1554 = vadd.f32 %v1458, %v1553
    %v1555 = vpop.f32.mrf.mxu0
    %1556 = vmatprep.mubr.f32.mxu0 0.0
    %v1557 = vand.u32 %v1075, 4294901760
    %v1558 = vsub.f32 %v1075, %v1557
    %v1559 = vand.u32 %v1558, 4294901760
    %1560 = vmatmul.mubr.f32.gmra.mxu0 %v1559
    %v1561 = vpop.f32.mrf.mxu0
    %v1562 = vadd.f32 %v1465, %v1561
    %v1563 = vpop.f32.mrf.mxu0
    %1564 = vdwg.mxu0
    %1565 = vmatprep.subr.mxu0 0.0
    %v1566 = vand.u32 %v1091, 4294901760
    %v1567 = vsub.f32 %v1091, %v1566
    %v1568 = vand.u32 %v1567, 4294901760
    %1569 = vmatpush1.msra.mxu0 %v1568
    %1570 = vmatprep.subr.mxu0 0.0
    %v1571 = vand.u32 %v1090, 4294901760
    %v1572 = vsub.f32 %v1090, %v1571
    %v1573 = vand.u32 %v1572, 4294901760
    %1574 = vmatpush1.msra.mxu0 %v1573
    %1575 = vmatprep.subr.mxu0 0.0
    %v1576 = vand.u32 %v1089, 4294901760
    %v1577 = vsub.f32 %v1089, %v1576
    %v1578 = vand.u32 %v1577, 4294901760
    %1579 = vmatpush1.msra.mxu0 %v1578
    %1580 = vmatprep.subr.mxu0 0.0
    %v1581 = vand.u32 %v1088, 4294901760
    %v1582 = vsub.f32 %v1088, %v1581
    %v1583 = vand.u32 %v1582, 4294901760
    %1584 = vmatpush1.msra.mxu0 %v1583
    %1585 = vmatprep.subr.mxu0 0.0
    %v1586 = vand.u32 %v1087, 4294901760
    %v1587 = vsub.f32 %v1087, %v1586
    %v1588 = vand.u32 %v1587, 4294901760
    %1589 = vmatpush1.msra.mxu0 %v1588
    %1590 = vmatprep.subr.mxu0 0.0
    %v1591 = vand.u32 %v1086, 4294901760
    %v1592 = vsub.f32 %v1086, %v1591
    %v1593 = vand.u32 %v1592, 4294901760
    %1594 = vmatpush1.msra.mxu0 %v1593
    %1595 = vmatprep.subr.mxu0 0.0
    %v1596 = vand.u32 %v1085, 4294901760
    %v1597 = vsub.f32 %v1085, %v1596
    %v1598 = vand.u32 %v1597, 4294901760
    %1599 = vmatpush1.msra.mxu0 %v1598
    %1600 = vmatprep.subr.mxu0 0.0
    %v1601 = vand.u32 %v1084, 4294901760
    %v1602 = vsub.f32 %v1084, %v1601
    %v1603 = vand.u32 %v1602, 4294901760
    %1604 = vmatpush1.msra.mxu0 %v1603
    %1605 = vmatprep.subr.mxu0 0.0
    %v1606 = vand.u32 %v1083, 4294901760
    %v1607 = vsub.f32 %v1083, %v1606
    %v1608 = vand.u32 %v1607, 4294901760
    %1609 = vmatpush1.msra.mxu0 %v1608
    %1610 = vmatprep.subr.mxu0 0.0
    %v1611 = vand.u32 %v1082, 4294901760
    %v1612 = vsub.f32 %v1082, %v1611
    %v1613 = vand.u32 %v1612, 4294901760
    %1614 = vmatpush1.msra.mxu0 %v1613
    %1615 = vmatprep.subr.mxu0 0.0
    %v1616 = vand.u32 %v1081, 4294901760
    %v1617 = vsub.f32 %v1081, %v1616
    %v1618 = vand.u32 %v1617, 4294901760
    %1619 = vmatpush1.msra.mxu0 %v1618
    %1620 = vmatprep.subr.mxu0 0.0
    %v1621 = vand.u32 %v1080, 4294901760
    %v1622 = vsub.f32 %v1080, %v1621
    %v1623 = vand.u32 %v1622, 4294901760
    %1624 = vmatpush1.msra.mxu0 %v1623
    %1625 = vmatprep.subr.mxu0 0.0
    %v1626 = vand.u32 %v1079, 4294901760
    %v1627 = vsub.f32 %v1079, %v1626
    %v1628 = vand.u32 %v1627, 4294901760
    %1629 = vmatpush1.msra.mxu0 %v1628
    %1630 = vmatprep.subr.mxu0 0.0
    %v1631 = vand.u32 %v1078, 4294901760
    %v1632 = vsub.f32 %v1078, %v1631
    %v1633 = vand.u32 %v1632, 4294901760
    %1634 = vmatpush1.msra.mxu0 %v1633
    %1635 = vmatprep.subr.mxu0 0.0
    %v1636 = vand.u32 %v1077, 4294901760
    %v1637 = vsub.f32 %v1077, %v1636
    %v1638 = vand.u32 %v1637, 4294901760
    %1639 = vmatpush1.msra.mxu0 %v1638
    %1640 = vmatprep.subr.mxu0 0.0
    %v1641 = vand.u32 %v1076, 4294901760
    %v1642 = vsub.f32 %v1076, %v1641
    %v1643 = vand.u32 %v1642, 4294901760
    %1644 = vmatpush1.msra.mxu0 %v1643
    %1645 = vmatprep.subr.mxu0 0.0
    %1646 = vmatpush2.msra.mxu0 0.0
    %1647 = vmatprep.subr.mxu0 0.0
    %1648 = vmatpush2.msra.mxu0 0.0
    %1649 = vmatprep.subr.mxu0 0.0
    %1650 = vmatpush2.msra.mxu0 0.0
    %1651 = vmatprep.subr.mxu0 0.0
    %1652 = vmatpush2.msra.mxu0 0.0
    %1653 = vmatprep.subr.mxu0 0.0
    %1654 = vmatpush2.msra.mxu0 0.0
    %1655 = vmatprep.subr.mxu0 0.0
    %1656 = vmatpush2.msra.mxu0 0.0
    %1657 = vmatprep.subr.mxu0 0.0
    %1658 = vmatpush2.msra.mxu0 0.0
    %1659 = vmatprep.subr.mxu0 0.0
    %1660 = vmatpush2.msra.mxu0 0.0
    %1661 = vmatprep.subr.mxu0 0.0
    %1662 = vmatpush2.msra.mxu0 0.0
    %1663 = vmatprep.subr.mxu0 0.0
    %1664 = vmatpush2.msra.mxu0 0.0
    %1665 = vmatprep.subr.mxu0 0.0
    %1666 = vmatpush2.msra.mxu0 0.0
    %1667 = vmatprep.subr.mxu0 0.0
    %1668 = vmatpush2.msra.mxu0 0.0
    %1669 = vmatprep.subr.mxu0 0.0
    %1670 = vmatpush2.msra.mxu0 0.0
    %1671 = vmatprep.subr.mxu0 0.0
    %1672 = vmatpush2.msra.mxu0 0.0
    %1673 = vmatprep.subr.mxu0 0.0
    %1674 = vmatpush2.msra.mxu0 0.0
    %1675 = vmatprep.subr.mxu0 0.0
    %1676 = vmatpush2.msra.mxu0 0.0
    %1677 = vmatprep.mubr.f32.mxu0 0.0
    %v1678 = vand.u32 %v1074, 4294901760
    %1679 = vmatmul.mubr.f32.gmra.mxu0 %v1678
    %v1680 = vpop.f32.mrf.mxu0
    %v1681 = vadd.f32 %v1554, %v1680
    %v1682 = vpop.f32.mrf.mxu0
    %1683 = vmatprep.mubr.f32.mxu0 0.0
    %v1684 = vand.u32 %v1075, 4294901760
    %1685 = vmatmul.mubr.f32.gmra.mxu0 %v1684
    %v1686 = vpop.f32.mrf.mxu0
    %v1687 = vadd.f32 %v1562, %v1686
    %v1688 = vpop.f32.mrf.mxu0
    %1689 = vdwg.mxu0
    %1690 = vmatprep.subr.mxu0 0.0
    %v1691 = vand.u32 %v1091, 4294901760
    %1692 = vmatpush1.msra.mxu0 %v1691
    %1693 = vmatprep.subr.mxu0 0.0
    %v1694 = vand.u32 %v1090, 4294901760
    %1695 = vmatpush1.msra.mxu0 %v1694
    %1696 = vmatprep.subr.mxu0 0.0
    %v1697 = vand.u32 %v1089, 4294901760
    %1698 = vmatpush1.msra.mxu0 %v1697
    %1699 = vmatprep.subr.mxu0 0.0
    %v1700 = vand.u32 %v1088, 4294901760
    %1701 = vmatpush1.msra.mxu0 %v1700
    %1702 = vmatprep.subr.mxu0 0.0
    %v1703 = vand.u32 %v1087, 4294901760
    %1704 = vmatpush1.msra.mxu0 %v1703
    %1705 = vmatprep.subr.mxu0 0.0
    %v1706 = vand.u32 %v1086, 4294901760
    %1707 = vmatpush1.msra.mxu0 %v1706
    %1708 = vmatprep.subr.mxu0 0.0
    %v1709 = vand.u32 %v1085, 4294901760
    %1710 = vmatpush1.msra.mxu0 %v1709
    %1711 = vmatprep.subr.mxu0 0.0
    %v1712 = vand.u32 %v1084, 4294901760
    %1713 = vmatpush1.msra.mxu0 %v1712
    %1714 = vmatprep.subr.mxu0 0.0
    %v1715 = vand.u32 %v1083, 4294901760
    %1716 = vmatpush1.msra.mxu0 %v1715
    %1717 = vmatprep.subr.mxu0 0.0
    %v1718 = vand.u32 %v1082, 4294901760
    %1719 = vmatpush1.msra.mxu0 %v1718
    %1720 = vmatprep.subr.mxu0 0.0
    %v1721 = vand.u32 %v1081, 4294901760
    %1722 = vmatpush1.msra.mxu0 %v1721
    %1723 = vmatprep.subr.mxu0 0.0
    %v1724 = vand.u32 %v1080, 4294901760
    %1725 = vmatpush1.msra.mxu0 %v1724
    %1726 = vmatprep.subr.mxu0 0.0
    %v1727 = vand.u32 %v1079, 4294901760
    %1728 = vmatpush1.msra.mxu0 %v1727
    %1729 = vmatprep.subr.mxu0 0.0
    %v1730 = vand.u32 %v1078, 4294901760
    %1731 = vmatpush1.msra.mxu0 %v1730
    %1732 = vmatprep.subr.mxu0 0.0
    %v1733 = vand.u32 %v1077, 4294901760
    %1734 = vmatpush1.msra.mxu0 %v1733
    %1735 = vmatprep.subr.mxu0 0.0
    %v1736 = vand.u32 %v1076, 4294901760
    %1737 = vmatpush1.msra.mxu0 %v1736
    %1738 = vmatprep.subr.mxu0 0.0
    %1739 = vmatpush2.msra.mxu0 0.0
    %1740 = vmatprep.subr.mxu0 0.0
    %1741 = vmatpush2.msra.mxu0 0.0
    %1742 = vmatprep.subr.mxu0 0.0
    %1743 = vmatpush2.msra.mxu0 0.0
    %1744 = vmatprep.subr.mxu0 0.0
    %1745 = vmatpush2.msra.mxu0 0.0
    %1746 = vmatprep.subr.mxu0 0.0
    %1747 = vmatpush2.msra.mxu0 0.0
    %1748 = vmatprep.subr.mxu0 0.0
    %1749 = vmatpush2.msra.mxu0 0.0
    %1750 = vmatprep.subr.mxu0 0.0
    %1751 = vmatpush2.msra.mxu0 0.0
    %1752 = vmatprep.subr.mxu0 0.0
    %1753 = vmatpush2.msra.mxu0 0.0
    %1754 = vmatprep.subr.mxu0 0.0
    %1755 = vmatpush2.msra.mxu0 0.0
    %1756 = vmatprep.subr.mxu0 0.0
    %1757 = vmatpush2.msra.mxu0 0.0
    %1758 = vmatprep.subr.mxu0 0.0
    %1759 = vmatpush2.msra.mxu0 0.0
    %1760 = vmatprep.subr.mxu0 0.0
    %1761 = vmatpush2.msra.mxu0 0.0
    %1762 = vmatprep.subr.mxu0 0.0
    %1763 = vmatpush2.msra.mxu0 0.0
    %1764 = vmatprep.subr.mxu0 0.0
    %1765 = vmatpush2.msra.mxu0 0.0
    %1766 = vmatprep.subr.mxu0 0.0
    %1767 = vmatpush2.msra.mxu0 0.0
    %1768 = vmatprep.subr.mxu0 0.0
    %1769 = vmatpush2.msra.mxu0 0.0
    %1770 = vmatprep.mubr.f32.mxu0 0.0
    %v1771 = vand.u32 %v1074, 4294901760
    %1772 = vmatmul.mubr.f32.gmra.mxu0 %v1771
    %v1773 = vpop.f32.mrf.mxu0
    %v1774 = vadd.f32 %v1681, %v1773
    %v1775 = vpop.f32.mrf.mxu0
    %1776 = vmatprep.mubr.f32.mxu0 0.0
    %v1777 = vand.u32 %v1075, 4294901760
    %1778 = vmatmul.mubr.f32.gmra.mxu0 %v1777
    %v1779 = vpop.f32.mrf.mxu0
    %v1780 = vadd.f32 %v1687, %v1779
    %v1781 = vpop.f32.mrf.mxu0
    %1782 = vdwg.mxu0
    %v1783 = vmax.f32 %v1774, 0.0
    %v1784 = vmax.f32 %v1780, 0.0
    %v1785 = vld [vmem:[#allocation5] sm:$0xff]
    %v1786 = vld [vmem:[#allocation5 + $0x8] sm:$0xff]
    %v1787 = vld [vmem:[#allocation5 + $0x10] sm:$0xff]
    %v1788 = vld [vmem:[#allocation5 + $0x18] sm:$0xff]
    %v1789 = vld [vmem:[#allocation5 + $0x20] sm:$0xff]
    %v1790 = vld [vmem:[#allocation5 + $0x28] sm:$0xff]
    %v1791 = vld [vmem:[#allocation5 + $0x30] sm:$0xff]
    %v1792 = vld [vmem:[#allocation5 + $0x38] sm:$0xff]
    %v1793 = vld [vmem:[#allocation5 + $0x40] sm:$0xff]
    %v1794 = vld [vmem:[#allocation5 + $0x48] sm:$0xff]
    %v1795 = vld [vmem:[#allocation5 + $0x50] sm:$0xff]
    %v1796 = vld [vmem:[#allocation5 + $0x58] sm:$0xff]
    %v1797 = vld [vmem:[#allocation5 + $0x60] sm:$0xff]
    %v1798 = vld [vmem:[#allocation5 + $0x68] sm:$0xff]
    %v1799 = vld [vmem:[#allocation5 + $0x70] sm:$0xff]
    %v1800 = vld [vmem:[#allocation5 + $0x78] sm:$0xff]
    %v1801 = vld [vmem:[%s8] sm:$0x1]
    %v1803 = vlaneseq
    %v1804 = vshrl.u32 %v1803, 7
    %v1805 = vsub.s32 0, %v1804
    %v1806 = vrot.slane %v1801, %v1805
    %1808 = vmatprep.subr.mxu0 0.0
    %v1809 = vand.u32 %v1800, 4294901760
    %1810 = vmatpush1.msra.mxu0 %v1809
    %1811 = vmatprep.subr.mxu0 0.0
    %v1812 = vand.u32 %v1799, 4294901760
    %1813 = vmatpush1.msra.mxu0 %v1812
    %1814 = vmatprep.subr.mxu0 0.0
    %v1815 = vand.u32 %v1798, 4294901760
    %1816 = vmatpush1.msra.mxu0 %v1815
    %1817 = vmatprep.subr.mxu0 0.0
    %v1818 = vand.u32 %v1797, 4294901760
    %1819 = vmatpush1.msra.mxu0 %v1818
    %1820 = vmatprep.subr.mxu0 0.0
    %v1821 = vand.u32 %v1796, 4294901760
    %1822 = vmatpush1.msra.mxu0 %v1821
    %1823 = vmatprep.subr.mxu0 0.0
    %v1824 = vand.u32 %v1795, 4294901760
    %1825 = vmatpush1.msra.mxu0 %v1824
    %1826 = vmatprep.subr.mxu0 0.0
    %v1827 = vand.u32 %v1794, 4294901760
    %1828 = vmatpush1.msra.mxu0 %v1827
    %1829 = vmatprep.subr.mxu0 0.0
    %v1830 = vand.u32 %v1793, 4294901760
    %1831 = vmatpush1.msra.mxu0 %v1830
    %1832 = vmatprep.subr.mxu0 0.0
    %v1833 = vand.u32 %v1792, 4294901760
    %1834 = vmatpush1.msra.mxu0 %v1833
    %1835 = vmatprep.subr.mxu0 0.0
    %v1836 = vand.u32 %v1791, 4294901760
    %1837 = vmatpush1.msra.mxu0 %v1836
    %1838 = vmatprep.subr.mxu0 0.0
    %v1839 = vand.u32 %v1790, 4294901760
    %1840 = vmatpush1.msra.mxu0 %v1839
    %1841 = vmatprep.subr.mxu0 0.0
    %v1842 = vand.u32 %v1789, 4294901760
    %1843 = vmatpush1.msra.mxu0 %v1842
    %1844 = vmatprep.subr.mxu0 0.0
    %v1845 = vand.u32 %v1788, 4294901760
    %1846 = vmatpush1.msra.mxu0 %v1845
    %1847 = vmatprep.subr.mxu0 0.0
    %v1848 = vand.u32 %v1787, 4294901760
    %1849 = vmatpush1.msra.mxu0 %v1848
    %1850 = vmatprep.subr.mxu0 0.0
    %v1851 = vand.u32 %v1786, 4294901760
    %1852 = vmatpush1.msra.mxu0 %v1851
    %1853 = vmatprep.subr.mxu0 0.0
    %v1854 = vand.u32 %v1785, 4294901760
    %1855 = vmatpush1.msra.mxu0 %v1854
    %1856 = vmatprep.subr.mxu0 0.0
    %1857 = vmatpush2.msra.mxu0 0.0
    %1858 = vmatprep.subr.mxu0 0.0
    %1859 = vmatpush2.msra.mxu0 0.0
    %1860 = vmatprep.subr.mxu0 0.0
    %1861 = vmatpush2.msra.mxu0 0.0
    %1862 = vmatprep.subr.mxu0 0.0
    %1863 = vmatpush2.msra.mxu0 0.0
    %1864 = vmatprep.subr.mxu0 0.0
    %1865 = vmatpush2.msra.mxu0 0.0
    %1866 = vmatprep.subr.mxu0 0.0
    %1867 = vmatpush2.msra.mxu0 0.0
    %1868 = vmatprep.subr.mxu0 0.0
    %1869 = vmatpush2.msra.mxu0 0.0
    %1870 = vmatprep.subr.mxu0 0.0
    %1871 = vmatpush2.msra.mxu0 0.0
    %1872 = vmatprep.subr.mxu0 0.0
    %1873 = vmatpush2.msra.mxu0 0.0
    %1874 = vmatprep.subr.mxu0 0.0
    %1875 = vmatpush2.msra.mxu0 0.0
    %1876 = vmatprep.subr.mxu0 0.0
    %1877 = vmatpush2.msra.mxu0 0.0
    %1878 = vmatprep.subr.mxu0 0.0
    %1879 = vmatpush2.msra.mxu0 0.0
    %1880 = vmatprep.subr.mxu0 0.0
    %1881 = vmatpush2.msra.mxu0 0.0
    %1882 = vmatprep.subr.mxu0 0.0
    %1883 = vmatpush2.msra.mxu0 0.0
    %1884 = vmatprep.subr.mxu0 0.0
    %1885 = vmatpush2.msra.mxu0 0.0
    %1886 = vmatprep.subr.mxu0 0.0
    %1887 = vmatpush2.msra.mxu0 0.0
    %1888 = vmatprep.mubr.f32.mxu0 0.0
    %v1889 = vand.u32 %v1783, 4294901760
    %v1890 = vsub.f32 %v1783, %v1889
    %v1891 = vand.u32 %v1890, 4294901760
    %v1892 = vsub.f32 %v1890, %v1891
    %v1893 = vand.u32 %v1892, 4294901760
    %1894 = vmatmul.mubr.f32.gmra.mxu0 %v1893
    %v1895 = vpop.f32.mrf.mxu0
    %v1896 = vadd.f32 %v1806, %v1895
    %v1897 = vpop.f32.mrf.mxu0
    %1898 = vmatprep.mubr.f32.mxu0 0.0
    %v1899 = vand.u32 %v1784, 4294901760
    %v1900 = vsub.f32 %v1784, %v1899
    %v1901 = vand.u32 %v1900, 4294901760
    %v1902 = vsub.f32 %v1900, %v1901
    %v1903 = vand.u32 %v1902, 4294901760
    %1904 = vmatmul.mubr.f32.gmra.mxu0 %v1903
    %v1905 = vpop.f32.mrf.mxu0
    %v1906 = vadd.f32 %v1806, %v1905
    %v1907 = vpop.f32.mrf.mxu0
    %1908 = vdwg.mxu0
    %1909 = vmatprep.subr.mxu0 0.0
    %v1910 = vand.u32 %v1800, 4294901760
    %v1911 = vsub.f32 %v1800, %v1910
    %v1912 = vand.u32 %v1911, 4294901760
    %v1913 = vsub.f32 %v1911, %v1912
    %v1914 = vand.u32 %v1913, 4294901760
    %1915 = vmatpush1.msra.mxu0 %v1914
    %1916 = vmatprep.subr.mxu0 0.0
    %v1917 = vand.u32 %v1799, 4294901760
    %v1918 = vsub.f32 %v1799, %v1917
    %v1919 = vand.u32 %v1918, 4294901760
    %v1920 = vsub.f32 %v1918, %v1919
    %v1921 = vand.u32 %v1920, 4294901760
    %1922 = vmatpush1.msra.mxu0 %v1921
    %1923 = vmatprep.subr.mxu0 0.0
    %v1924 = vand.u32 %v1798, 4294901760
    %v1925 = vsub.f32 %v1798, %v1924
    %v1926 = vand.u32 %v1925, 4294901760
    %v1927 = vsub.f32 %v1925, %v1926
    %v1928 = vand.u32 %v1927, 4294901760
    %1929 = vmatpush1.msra.mxu0 %v1928
    %1930 = vmatprep.subr.mxu0 0.0
    %v1931 = vand.u32 %v1797, 4294901760
    %v1932 = vsub.f32 %v1797, %v1931
    %v1933 = vand.u32 %v1932, 4294901760
    %v1934 = vsub.f32 %v1932, %v1933
    %v1935 = vand.u32 %v1934, 4294901760
    %1936 = vmatpush1.msra.mxu0 %v1935
    %1937 = vmatprep.subr.mxu0 0.0
    %v1938 = vand.u32 %v1796, 4294901760
    %v1939 = vsub.f32 %v1796, %v1938
    %v1940 = vand.u32 %v1939, 4294901760
    %v1941 = vsub.f32 %v1939, %v1940
    %v1942 = vand.u32 %v1941, 4294901760
    %1943 = vmatpush1.msra.mxu0 %v1942
    %1944 = vmatprep.subr.mxu0 0.0
    %v1945 = vand.u32 %v1795, 4294901760
    %v1946 = vsub.f32 %v1795, %v1945
    %v1947 = vand.u32 %v1946, 4294901760
    %v1948 = vsub.f32 %v1946, %v1947
    %v1949 = vand.u32 %v1948, 4294901760
    %1950 = vmatpush1.msra.mxu0 %v1949
    %1951 = vmatprep.subr.mxu0 0.0
    %v1952 = vand.u32 %v1794, 4294901760
    %v1953 = vsub.f32 %v1794, %v1952
    %v1954 = vand.u32 %v1953, 4294901760
    %v1955 = vsub.f32 %v1953, %v1954
    %v1956 = vand.u32 %v1955, 4294901760
    %1957 = vmatpush1.msra.mxu0 %v1956
    %1958 = vmatprep.subr.mxu0 0.0
    %v1959 = vand.u32 %v1793, 4294901760
    %v1960 = vsub.f32 %v1793, %v1959
    %v1961 = vand.u32 %v1960, 4294901760
    %v1962 = vsub.f32 %v1960, %v1961
    %v1963 = vand.u32 %v1962, 4294901760
    %1964 = vmatpush1.msra.mxu0 %v1963
    %1965 = vmatprep.subr.mxu0 0.0
    %v1966 = vand.u32 %v1792, 4294901760
    %v1967 = vsub.f32 %v1792, %v1966
    %v1968 = vand.u32 %v1967, 4294901760
    %v1969 = vsub.f32 %v1967, %v1968
    %v1970 = vand.u32 %v1969, 4294901760
    %1971 = vmatpush1.msra.mxu0 %v1970
    %1972 = vmatprep.subr.mxu0 0.0
    %v1973 = vand.u32 %v1791, 4294901760
    %v1974 = vsub.f32 %v1791, %v1973
    %v1975 = vand.u32 %v1974, 4294901760
    %v1976 = vsub.f32 %v1974, %v1975
    %v1977 = vand.u32 %v1976, 4294901760
    %1978 = vmatpush1.msra.mxu0 %v1977
    %1979 = vmatprep.subr.mxu0 0.0
    %v1980 = vand.u32 %v1790, 4294901760
    %v1981 = vsub.f32 %v1790, %v1980
    %v1982 = vand.u32 %v1981, 4294901760
    %v1983 = vsub.f32 %v1981, %v1982
    %v1984 = vand.u32 %v1983, 4294901760
    %1985 = vmatpush1.msra.mxu0 %v1984
    %1986 = vmatprep.subr.mxu0 0.0
    %v1987 = vand.u32 %v1789, 4294901760
    %v1988 = vsub.f32 %v1789, %v1987
    %v1989 = vand.u32 %v1988, 4294901760
    %v1990 = vsub.f32 %v1988, %v1989
    %v1991 = vand.u32 %v1990, 4294901760
    %1992 = vmatpush1.msra.mxu0 %v1991
    %1993 = vmatprep.subr.mxu0 0.0
    %v1994 = vand.u32 %v1788, 4294901760
    %v1995 = vsub.f32 %v1788, %v1994
    %v1996 = vand.u32 %v1995, 4294901760
    %v1997 = vsub.f32 %v1995, %v1996
    %v1998 = vand.u32 %v1997, 4294901760
    %1999 = vmatpush1.msra.mxu0 %v1998
    %2000 = vmatprep.subr.mxu0 0.0
    %v2001 = vand.u32 %v1787, 4294901760
    %v2002 = vsub.f32 %v1787, %v2001
    %v2003 = vand.u32 %v2002, 4294901760
    %v2004 = vsub.f32 %v2002, %v2003
    %v2005 = vand.u32 %v2004, 4294901760
    %2006 = vmatpush1.msra.mxu0 %v2005
    %2007 = vmatprep.subr.mxu0 0.0
    %v2008 = vand.u32 %v1786, 4294901760
    %v2009 = vsub.f32 %v1786, %v2008
    %v2010 = vand.u32 %v2009, 4294901760
    %v2011 = vsub.f32 %v2009, %v2010
    %v2012 = vand.u32 %v2011, 4294901760
    %2013 = vmatpush1.msra.mxu0 %v2012
    %2014 = vmatprep.subr.mxu0 0.0
    %v2015 = vand.u32 %v1785, 4294901760
    %v2016 = vsub.f32 %v1785, %v2015
    %v2017 = vand.u32 %v2016, 4294901760
    %v2018 = vsub.f32 %v2016, %v2017
    %v2019 = vand.u32 %v2018, 4294901760
    %2020 = vmatpush1.msra.mxu0 %v2019
    %2021 = vmatprep.subr.mxu0 0.0
    %2022 = vmatpush2.msra.mxu0 0.0
    %2023 = vmatprep.subr.mxu0 0.0
    %2024 = vmatpush2.msra.mxu0 0.0
    %2025 = vmatprep.subr.mxu0 0.0
    %2026 = vmatpush2.msra.mxu0 0.0
    %2027 = vmatprep.subr.mxu0 0.0
    %2028 = vmatpush2.msra.mxu0 0.0
    %2029 = vmatprep.subr.mxu0 0.0
    %2030 = vmatpush2.msra.mxu0 0.0
    %2031 = vmatprep.subr.mxu0 0.0
    %2032 = vmatpush2.msra.mxu0 0.0
    %2033 = vmatprep.subr.mxu0 0.0
    %2034 = vmatpush2.msra.mxu0 0.0
    %2035 = vmatprep.subr.mxu0 0.0
    %2036 = vmatpush2.msra.mxu0 0.0
    %2037 = vmatprep.subr.mxu0 0.0
    %2038 = vmatpush2.msra.mxu0 0.0
    %2039 = vmatprep.subr.mxu0 0.0
    %2040 = vmatpush2.msra.mxu0 0.0
    %2041 = vmatprep.subr.mxu0 0.0
    %2042 = vmatpush2.msra.mxu0 0.0
    %2043 = vmatprep.subr.mxu0 0.0
    %2044 = vmatpush2.msra.mxu0 0.0
    %2045 = vmatprep.subr.mxu0 0.0
    %2046 = vmatpush2.msra.mxu0 0.0
    %2047 = vmatprep.subr.mxu0 0.0
    %2048 = vmatpush2.msra.mxu0 0.0
    %2049 = vmatprep.subr.mxu0 0.0
    %2050 = vmatpush2.msra.mxu0 0.0
    %2051 = vmatprep.subr.mxu0 0.0
    %2052 = vmatpush2.msra.mxu0 0.0
    %2053 = vmatprep.mubr.f32.mxu0 0.0
    %v2054 = vand.u32 %v1783, 4294901760
    %2055 = vmatmul.mubr.f32.gmra.mxu0 %v2054
    %v2056 = vpop.f32.mrf.mxu0
    %v2057 = vadd.f32 %v1896, %v2056
    %v2058 = vpop.f32.mrf.mxu0
    %2059 = vmatprep.mubr.f32.mxu0 0.0
    %v2060 = vand.u32 %v1784, 4294901760
    %2061 = vmatmul.mubr.f32.gmra.mxu0 %v2060
    %v2062 = vpop.f32.mrf.mxu0
    %v2063 = vadd.f32 %v1906, %v2062
    %v2064 = vpop.f32.mrf.mxu0
    %2065 = vdwg.mxu0
    %2066 = vmatprep.subr.mxu0 0.0
    %v2067 = vand.u32 %v1800, 4294901760
    %v2068 = vsub.f32 %v1800, %v2067
    %2069 = vmatpush1.msra.mxu0 %v2068
    %2070 = vmatprep.subr.mxu0 0.0
    %v2071 = vand.u32 %v1799, 4294901760
    %v2072 = vsub.f32 %v1799, %v2071
    %2073 = vmatpush1.msra.mxu0 %v2072
    %2074 = vmatprep.subr.mxu0 0.0
    %v2075 = vand.u32 %v1798, 4294901760
    %v2076 = vsub.f32 %v1798, %v2075
    %2077 = vmatpush1.msra.mxu0 %v2076
    %2078 = vmatprep.subr.mxu0 0.0
    %v2079 = vand.u32 %v1797, 4294901760
    %v2080 = vsub.f32 %v1797, %v2079
    %2081 = vmatpush1.msra.mxu0 %v2080
    %2082 = vmatprep.subr.mxu0 0.0
    %v2083 = vand.u32 %v1796, 4294901760
    %v2084 = vsub.f32 %v1796, %v2083
    %2085 = vmatpush1.msra.mxu0 %v2084
    %2086 = vmatprep.subr.mxu0 0.0
    %v2087 = vand.u32 %v1795, 4294901760
    %v2088 = vsub.f32 %v1795, %v2087
    %2089 = vmatpush1.msra.mxu0 %v2088
    %2090 = vmatprep.subr.mxu0 0.0
    %v2091 = vand.u32 %v1794, 4294901760
    %v2092 = vsub.f32 %v1794, %v2091
    %2093 = vmatpush1.msra.mxu0 %v2092
    %2094 = vmatprep.subr.mxu0 0.0
    %v2095 = vand.u32 %v1793, 4294901760
    %v2096 = vsub.f32 %v1793, %v2095
    %2097 = vmatpush1.msra.mxu0 %v2096
    %2098 = vmatprep.subr.mxu0 0.0
    %v2099 = vand.u32 %v1792, 4294901760
    %v2100 = vsub.f32 %v1792, %v2099
    %2101 = vmatpush1.msra.mxu0 %v2100
    %2102 = vmatprep.subr.mxu0 0.0
    %v2103 = vand.u32 %v1791, 4294901760
    %v2104 = vsub.f32 %v1791, %v2103
    %2105 = vmatpush1.msra.mxu0 %v2104
    %2106 = vmatprep.subr.mxu0 0.0
    %v2107 = vand.u32 %v1790, 4294901760
    %v2108 = vsub.f32 %v1790, %v2107
    %2109 = vmatpush1.msra.mxu0 %v2108
    %2110 = vmatprep.subr.mxu0 0.0
    %v2111 = vand.u32 %v1789, 4294901760
    %v2112 = vsub.f32 %v1789, %v2111
    %2113 = vmatpush1.msra.mxu0 %v2112
    %2114 = vmatprep.subr.mxu0 0.0
    %v2115 = vand.u32 %v1788, 4294901760
    %v2116 = vsub.f32 %v1788, %v2115
    %2117 = vmatpush1.msra.mxu0 %v2116
    %2118 = vmatprep.subr.mxu0 0.0
    %v2119 = vand.u32 %v1787, 4294901760
    %v2120 = vsub.f32 %v1787, %v2119
    %2121 = vmatpush1.msra.mxu0 %v2120
    %2122 = vmatprep.subr.mxu0 0.0
    %v2123 = vand.u32 %v1786, 4294901760
    %v2124 = vsub.f32 %v1786, %v2123
    %2125 = vmatpush1.msra.mxu0 %v2124
    %2126 = vmatprep.subr.mxu0 0.0
    %v2127 = vand.u32 %v1785, 4294901760
    %v2128 = vsub.f32 %v1785, %v2127
    %2129 = vmatpush1.msra.mxu0 %v2128
    %2130 = vmatprep.subr.mxu0 0.0
    %2131 = vmatpush2.msra.mxu0 0.0
    %2132 = vmatprep.subr.mxu0 0.0
    %2133 = vmatpush2.msra.mxu0 0.0
    %2134 = vmatprep.subr.mxu0 0.0
    %2135 = vmatpush2.msra.mxu0 0.0
    %2136 = vmatprep.subr.mxu0 0.0
    %2137 = vmatpush2.msra.mxu0 0.0
    %2138 = vmatprep.subr.mxu0 0.0
    %2139 = vmatpush2.msra.mxu0 0.0
    %2140 = vmatprep.subr.mxu0 0.0
    %2141 = vmatpush2.msra.mxu0 0.0
    %2142 = vmatprep.subr.mxu0 0.0
    %2143 = vmatpush2.msra.mxu0 0.0
    %2144 = vmatprep.subr.mxu0 0.0
    %2145 = vmatpush2.msra.mxu0 0.0
    %2146 = vmatprep.subr.mxu0 0.0
    %2147 = vmatpush2.msra.mxu0 0.0
    %2148 = vmatprep.subr.mxu0 0.0
    %2149 = vmatpush2.msra.mxu0 0.0
    %2150 = vmatprep.subr.mxu0 0.0
    %2151 = vmatpush2.msra.mxu0 0.0
    %2152 = vmatprep.subr.mxu0 0.0
    %2153 = vmatpush2.msra.mxu0 0.0
    %2154 = vmatprep.subr.mxu0 0.0
    %2155 = vmatpush2.msra.mxu0 0.0
    %2156 = vmatprep.subr.mxu0 0.0
    %2157 = vmatpush2.msra.mxu0 0.0
    %2158 = vmatprep.subr.mxu0 0.0
    %2159 = vmatpush2.msra.mxu0 0.0
    %2160 = vmatprep.subr.mxu0 0.0
    %2161 = vmatpush2.msra.mxu0 0.0
    %2162 = vmatprep.mubr.f32.mxu0 0.0
    %v2163 = vand.u32 %v1783, 4294901760
    %v2164 = vsub.f32 %v1783, %v2163
    %2165 = vmatmul.mubr.f32.gmra.mxu0 %v2164
    %v2166 = vpop.f32.mrf.mxu0
    %v2167 = vadd.f32 %v2057, %v2166
    %v2168 = vpop.f32.mrf.mxu0
    %2169 = vmatprep.mubr.f32.mxu0 0.0
    %v2170 = vand.u32 %v1784, 4294901760
    %v2171 = vsub.f32 %v1784, %v2170
    %2172 = vmatmul.mubr.f32.gmra.mxu0 %v2171
    %v2173 = vpop.f32.mrf.mxu0
    %v2174 = vadd.f32 %v2063, %v2173
    %v2175 = vpop.f32.mrf.mxu0
    %2176 = vdwg.mxu0
    %2177 = vmatprep.subr.mxu0 0.0
    %v2178 = vand.u32 %v1800, 4294901760
    %2179 = vmatpush1.msra.mxu0 %v2178
    %2180 = vmatprep.subr.mxu0 0.0
    %v2181 = vand.u32 %v1799, 4294901760
    %2182 = vmatpush1.msra.mxu0 %v2181
    %2183 = vmatprep.subr.mxu0 0.0
    %v2184 = vand.u32 %v1798, 4294901760
    %2185 = vmatpush1.msra.mxu0 %v2184
    %2186 = vmatprep.subr.mxu0 0.0
    %v2187 = vand.u32 %v1797, 4294901760
    %2188 = vmatpush1.msra.mxu0 %v2187
    %2189 = vmatprep.subr.mxu0 0.0
    %v2190 = vand.u32 %v1796, 4294901760
    %2191 = vmatpush1.msra.mxu0 %v2190
    %2192 = vmatprep.subr.mxu0 0.0
    %v2193 = vand.u32 %v1795, 4294901760
    %2194 = vmatpush1.msra.mxu0 %v2193
    %2195 = vmatprep.subr.mxu0 0.0
    %v2196 = vand.u32 %v1794, 4294901760
    %2197 = vmatpush1.msra.mxu0 %v2196
    %2198 = vmatprep.subr.mxu0 0.0
    %v2199 = vand.u32 %v1793, 4294901760
    %2200 = vmatpush1.msra.mxu0 %v2199
    %2201 = vmatprep.subr.mxu0 0.0
    %v2202 = vand.u32 %v1792, 4294901760
    %2203 = vmatpush1.msra.mxu0 %v2202
    %2204 = vmatprep.subr.mxu0 0.0
    %v2205 = vand.u32 %v1791, 4294901760
    %2206 = vmatpush1.msra.mxu0 %v2205
    %2207 = vmatprep.subr.mxu0 0.0
    %v2208 = vand.u32 %v1790, 4294901760
    %2209 = vmatpush1.msra.mxu0 %v2208
    %2210 = vmatprep.subr.mxu0 0.0
    %v2211 = vand.u32 %v1789, 4294901760
    %2212 = vmatpush1.msra.mxu0 %v2211
    %2213 = vmatprep.subr.mxu0 0.0
    %v2214 = vand.u32 %v1788, 4294901760
    %2215 = vmatpush1.msra.mxu0 %v2214
    %2216 = vmatprep.subr.mxu0 0.0
    %v2217 = vand.u32 %v1787, 4294901760
    %2218 = vmatpush1.msra.mxu0 %v2217
    %2219 = vmatprep.subr.mxu0 0.0
    %v2220 = vand.u32 %v1786, 4294901760
    %2221 = vmatpush1.msra.mxu0 %v2220
    %2222 = vmatprep.subr.mxu0 0.0
    %v2223 = vand.u32 %v1785, 4294901760
    %2224 = vmatpush1.msra.mxu0 %v2223
    %2225 = vmatprep.subr.mxu0 0.0
    %2226 = vmatpush2.msra.mxu0 0.0
    %2227 = vmatprep.subr.mxu0 0.0
    %2228 = vmatpush2.msra.mxu0 0.0
    %2229 = vmatprep.subr.mxu0 0.0
    %2230 = vmatpush2.msra.mxu0 0.0
    %2231 = vmatprep.subr.mxu0 0.0
    %2232 = vmatpush2.msra.mxu0 0.0
    %2233 = vmatprep.subr.mxu0 0.0
    %2234 = vmatpush2.msra.mxu0 0.0
    %2235 = vmatprep.subr.mxu0 0.0
    %2236 = vmatpush2.msra.mxu0 0.0
    %2237 = vmatprep.subr.mxu0 0.0
    %2238 = vmatpush2.msra.mxu0 0.0
    %2239 = vmatprep.subr.mxu0 0.0
    %2240 = vmatpush2.msra.mxu0 0.0
    %2241 = vmatprep.subr.mxu0 0.0
    %2242 = vmatpush2.msra.mxu0 0.0
    %2243 = vmatprep.subr.mxu0 0.0
    %2244 = vmatpush2.msra.mxu0 0.0
    %2245 = vmatprep.subr.mxu0 0.0
    %2246 = vmatpush2.msra.mxu0 0.0
    %2247 = vmatprep.subr.mxu0 0.0
    %2248 = vmatpush2.msra.mxu0 0.0
    %2249 = vmatprep.subr.mxu0 0.0
    %2250 = vmatpush2.msra.mxu0 0.0
    %2251 = vmatprep.subr.mxu0 0.0
    %2252 = vmatpush2.msra.mxu0 0.0
    %2253 = vmatprep.subr.mxu0 0.0
    %2254 = vmatpush2.msra.mxu0 0.0
    %2255 = vmatprep.subr.mxu0 0.0
    %2256 = vmatpush2.msra.mxu0 0.0
    %2257 = vmatprep.mubr.f32.mxu0 0.0
    %v2258 = vand.u32 %v1783, 4294901760
    %v2259 = vsub.f32 %v1783, %v2258
    %v2260 = vand.u32 %v2259, 4294901760
    %2261 = vmatmul.mubr.f32.gmra.mxu0 %v2260
    %v2262 = vpop.f32.mrf.mxu0
    %v2263 = vadd.f32 %v2167, %v2262
    %v2264 = vpop.f32.mrf.mxu0
    %2265 = vmatprep.mubr.f32.mxu0 0.0
    %v2266 = vand.u32 %v1784, 4294901760
    %v2267 = vsub.f32 %v1784, %v2266
    %v2268 = vand.u32 %v2267, 4294901760
    %2269 = vmatmul.mubr.f32.gmra.mxu0 %v2268
    %v2270 = vpop.f32.mrf.mxu0
    %v2271 = vadd.f32 %v2174, %v2270
    %v2272 = vpop.f32.mrf.mxu0
    %2273 = vdwg.mxu0
    %2274 = vmatprep.subr.mxu0 0.0
    %v2275 = vand.u32 %v1800, 4294901760
    %v2276 = vsub.f32 %v1800, %v2275
    %v2277 = vand.u32 %v2276, 4294901760
    %2278 = vmatpush1.msra.mxu0 %v2277
    %2279 = vmatprep.subr.mxu0 0.0
    %v2280 = vand.u32 %v1799, 4294901760
    %v2281 = vsub.f32 %v1799, %v2280
    %v2282 = vand.u32 %v2281, 4294901760
    %2283 = vmatpush1.msra.mxu0 %v2282
    %2284 = vmatprep.subr.mxu0 0.0
    %v2285 = vand.u32 %v1798, 4294901760
    %v2286 = vsub.f32 %v1798, %v2285
    %v2287 = vand.u32 %v2286, 4294901760
    %2288 = vmatpush1.msra.mxu0 %v2287
    %2289 = vmatprep.subr.mxu0 0.0
    %v2290 = vand.u32 %v1797, 4294901760
    %v2291 = vsub.f32 %v1797, %v2290
    %v2292 = vand.u32 %v2291, 4294901760
    %2293 = vmatpush1.msra.mxu0 %v2292
    %2294 = vmatprep.subr.mxu0 0.0
    %v2295 = vand.u32 %v1796, 4294901760
    %v2296 = vsub.f32 %v1796, %v2295
    %v2297 = vand.u32 %v2296, 4294901760
    %2298 = vmatpush1.msra.mxu0 %v2297
    %2299 = vmatprep.subr.mxu0 0.0
    %v2300 = vand.u32 %v1795, 4294901760
    %v2301 = vsub.f32 %v1795, %v2300
    %v2302 = vand.u32 %v2301, 4294901760
    %2303 = vmatpush1.msra.mxu0 %v2302
    %2304 = vmatprep.subr.mxu0 0.0
    %v2305 = vand.u32 %v1794, 4294901760
    %v2306 = vsub.f32 %v1794, %v2305
    %v2307 = vand.u32 %v2306, 4294901760
    %2308 = vmatpush1.msra.mxu0 %v2307
    %2309 = vmatprep.subr.mxu0 0.0
    %v2310 = vand.u32 %v1793, 4294901760
    %v2311 = vsub.f32 %v1793, %v2310
    %v2312 = vand.u32 %v2311, 4294901760
    %2313 = vmatpush1.msra.mxu0 %v2312
    %2314 = vmatprep.subr.mxu0 0.0
    %v2315 = vand.u32 %v1792, 4294901760
    %v2316 = vsub.f32 %v1792, %v2315
    %v2317 = vand.u32 %v2316, 4294901760
    %2318 = vmatpush1.msra.mxu0 %v2317
    %2319 = vmatprep.subr.mxu0 0.0
    %v2320 = vand.u32 %v1791, 4294901760
    %v2321 = vsub.f32 %v1791, %v2320
    %v2322 = vand.u32 %v2321, 4294901760
    %2323 = vmatpush1.msra.mxu0 %v2322
    %2324 = vmatprep.subr.mxu0 0.0
    %v2325 = vand.u32 %v1790, 4294901760
    %v2326 = vsub.f32 %v1790, %v2325
    %v2327 = vand.u32 %v2326, 4294901760
    %2328 = vmatpush1.msra.mxu0 %v2327
    %2329 = vmatprep.subr.mxu0 0.0
    %v2330 = vand.u32 %v1789, 4294901760
    %v2331 = vsub.f32 %v1789, %v2330
    %v2332 = vand.u32 %v2331, 4294901760
    %2333 = vmatpush1.msra.mxu0 %v2332
    %2334 = vmatprep.subr.mxu0 0.0
    %v2335 = vand.u32 %v1788, 4294901760
    %v2336 = vsub.f32 %v1788, %v2335
    %v2337 = vand.u32 %v2336, 4294901760
    %2338 = vmatpush1.msra.mxu0 %v2337
    %2339 = vmatprep.subr.mxu0 0.0
    %v2340 = vand.u32 %v1787, 4294901760
    %v2341 = vsub.f32 %v1787, %v2340
    %v2342 = vand.u32 %v2341, 4294901760
    %2343 = vmatpush1.msra.mxu0 %v2342
    %2344 = vmatprep.subr.mxu0 0.0
    %v2345 = vand.u32 %v1786, 4294901760
    %v2346 = vsub.f32 %v1786, %v2345
    %v2347 = vand.u32 %v2346, 4294901760
    %2348 = vmatpush1.msra.mxu0 %v2347
    %2349 = vmatprep.subr.mxu0 0.0
    %v2350 = vand.u32 %v1785, 4294901760
    %v2351 = vsub.f32 %v1785, %v2350
    %v2352 = vand.u32 %v2351, 4294901760
    %2353 = vmatpush1.msra.mxu0 %v2352
    %2354 = vmatprep.subr.mxu0 0.0
    %2355 = vmatpush2.msra.mxu0 0.0
    %2356 = vmatprep.subr.mxu0 0.0
    %2357 = vmatpush2.msra.mxu0 0.0
    %2358 = vmatprep.subr.mxu0 0.0
    %2359 = vmatpush2.msra.mxu0 0.0
    %2360 = vmatprep.subr.mxu0 0.0
    %2361 = vmatpush2.msra.mxu0 0.0
    %2362 = vmatprep.subr.mxu0 0.0
    %2363 = vmatpush2.msra.mxu0 0.0
    %2364 = vmatprep.subr.mxu0 0.0
    %2365 = vmatpush2.msra.mxu0 0.0
    %2366 = vmatprep.subr.mxu0 0.0
    %2367 = vmatpush2.msra.mxu0 0.0
    %2368 = vmatprep.subr.mxu0 0.0
    %2369 = vmatpush2.msra.mxu0 0.0
    %2370 = vmatprep.subr.mxu0 0.0
    %2371 = vmatpush2.msra.mxu0 0.0
    %2372 = vmatprep.subr.mxu0 0.0
    %2373 = vmatpush2.msra.mxu0 0.0
    %2374 = vmatprep.subr.mxu0 0.0
    %2375 = vmatpush2.msra.mxu0 0.0
    %2376 = vmatprep.subr.mxu0 0.0
    %2377 = vmatpush2.msra.mxu0 0.0
    %2378 = vmatprep.subr.mxu0 0.0
    %2379 = vmatpush2.msra.mxu0 0.0
    %2380 = vmatprep.subr.mxu0 0.0
    %2381 = vmatpush2.msra.mxu0 0.0
    %2382 = vmatprep.subr.mxu0 0.0
    %2383 = vmatpush2.msra.mxu0 0.0
    %2384 = vmatprep.subr.mxu0 0.0
    %2385 = vmatpush2.msra.mxu0 0.0
    %2386 = vmatprep.mubr.f32.mxu0 0.0
    %v2387 = vand.u32 %v1783, 4294901760
    %2388 = vmatmul.mubr.f32.gmra.mxu0 %v2387
    %v2389 = vpop.f32.mrf.mxu0
    %v2390 = vadd.f32 %v2263, %v2389
    %v2391 = vpop.f32.mrf.mxu0
    %2392 = vmatprep.mubr.f32.mxu0 0.0
    %v2393 = vand.u32 %v1784, 4294901760
    %2394 = vmatmul.mubr.f32.gmra.mxu0 %v2393
    %v2395 = vpop.f32.mrf.mxu0
    %v2396 = vadd.f32 %v2271, %v2395
    %v2397 = vpop.f32.mrf.mxu0
    %2398 = vdwg.mxu0
    %2399 = vmatprep.subr.mxu0 0.0
    %v2400 = vand.u32 %v1800, 4294901760
    %2401 = vmatpush1.msra.mxu0 %v2400
    %2402 = vmatprep.subr.mxu0 0.0
    %v2403 = vand.u32 %v1799, 4294901760
    %2404 = vmatpush1.msra.mxu0 %v2403
    %2405 = vmatprep.subr.mxu0 0.0
    %v2406 = vand.u32 %v1798, 4294901760
    %2407 = vmatpush1.msra.mxu0 %v2406
    %2408 = vmatprep.subr.mxu0 0.0
    %v2409 = vand.u32 %v1797, 4294901760
    %2410 = vmatpush1.msra.mxu0 %v2409
    %2411 = vmatprep.subr.mxu0 0.0
    %v2412 = vand.u32 %v1796, 4294901760
    %2413 = vmatpush1.msra.mxu0 %v2412
    %2414 = vmatprep.subr.mxu0 0.0
    %v2415 = vand.u32 %v1795, 4294901760
    %2416 = vmatpush1.msra.mxu0 %v2415
    %2417 = vmatprep.subr.mxu0 0.0
    %v2418 = vand.u32 %v1794, 4294901760
    %2419 = vmatpush1.msra.mxu0 %v2418
    %2420 = vmatprep.subr.mxu0 0.0
    %v2421 = vand.u32 %v1793, 4294901760
    %2422 = vmatpush1.msra.mxu0 %v2421
    %2423 = vmatprep.subr.mxu0 0.0
    %v2424 = vand.u32 %v1792, 4294901760
    %2425 = vmatpush1.msra.mxu0 %v2424
    %2426 = vmatprep.subr.mxu0 0.0
    %v2427 = vand.u32 %v1791, 4294901760
    %2428 = vmatpush1.msra.mxu0 %v2427
    %2429 = vmatprep.subr.mxu0 0.0
    %v2430 = vand.u32 %v1790, 4294901760
    %2431 = vmatpush1.msra.mxu0 %v2430
    %2432 = vmatprep.subr.mxu0 0.0
    %v2433 = vand.u32 %v1789, 4294901760
    %2434 = vmatpush1.msra.mxu0 %v2433
    %2435 = vmatprep.subr.mxu0 0.0
    %v2436 = vand.u32 %v1788, 4294901760
    %2437 = vmatpush1.msra.mxu0 %v2436
    %2438 = vmatprep.subr.mxu0 0.0
    %v2439 = vand.u32 %v1787, 4294901760
    %2440 = vmatpush1.msra.mxu0 %v2439
    %2441 = vmatprep.subr.mxu0 0.0
    %v2442 = vand.u32 %v1786, 4294901760
    %2443 = vmatpush1.msra.mxu0 %v2442
    %2444 = vmatprep.subr.mxu0 0.0
    %v2445 = vand.u32 %v1785, 4294901760
    %2446 = vmatpush1.msra.mxu0 %v2445
    %2447 = vmatprep.subr.mxu0 0.0
    %2448 = vmatpush2.msra.mxu0 0.0
    %2449 = vmatprep.subr.mxu0 0.0
    %2450 = vmatpush2.msra.mxu0 0.0
    %2451 = vmatprep.subr.mxu0 0.0
    %2452 = vmatpush2.msra.mxu0 0.0
    %2453 = vmatprep.subr.mxu0 0.0
    %2454 = vmatpush2.msra.mxu0 0.0
    %2455 = vmatprep.subr.mxu0 0.0
    %2456 = vmatpush2.msra.mxu0 0.0
    %2457 = vmatprep.subr.mxu0 0.0
    %2458 = vmatpush2.msra.mxu0 0.0
    %2459 = vmatprep.subr.mxu0 0.0
    %2460 = vmatpush2.msra.mxu0 0.0
    %2461 = vmatprep.subr.mxu0 0.0
    %2462 = vmatpush2.msra.mxu0 0.0
    %2463 = vmatprep.subr.mxu0 0.0
    %2464 = vmatpush2.msra.mxu0 0.0
    %2465 = vmatprep.subr.mxu0 0.0
    %2466 = vmatpush2.msra.mxu0 0.0
    %2467 = vmatprep.subr.mxu0 0.0
    %2468 = vmatpush2.msra.mxu0 0.0
    %2469 = vmatprep.subr.mxu0 0.0
    %2470 = vmatpush2.msra.mxu0 0.0
    %2471 = vmatprep.subr.mxu0 0.0
    %2472 = vmatpush2.msra.mxu0 0.0
    %2473 = vmatprep.subr.mxu0 0.0
    %2474 = vmatpush2.msra.mxu0 0.0
    %2475 = vmatprep.subr.mxu0 0.0
    %2476 = vmatpush2.msra.mxu0 0.0
    %2477 = vmatprep.subr.mxu0 0.0
    %2478 = vmatpush2.msra.mxu0 0.0
    %2479 = vmatprep.mubr.f32.mxu0 0.0
    %v2480 = vand.u32 %v1783, 4294901760
    %2481 = vmatmul.mubr.f32.gmra.mxu0 %v2480
    %v2482 = vpop.f32.mrf.mxu0
    %v2483 = vadd.f32 %v2390, %v2482
    %v2484 = vpop.f32.mrf.mxu0
    %2485 = vmatprep.mubr.f32.mxu0 0.0
    %v2486 = vand.u32 %v1784, 4294901760
    %2487 = vmatmul.mubr.f32.gmra.mxu0 %v2486
    %v2488 = vpop.f32.mrf.mxu0
    %v2489 = vadd.f32 %v2396, %v2488
    %v2490 = vpop.f32.mrf.mxu0
    %2491 = vdwg.mxu0
    %2492 = vst [vmem:[#allocation7] sm:$0xff] %v2483
    %2493 = vst [vmem:[#allocation7 + $0x8] sm:$0xff] %v2489
    // Predicated region
    $region46: #{tpu_custom_call.1} parent=1 // pred_check
      _
    $region47: #{tpu_custom_call.1} parent=1 // pred_check_branch
      %2495 = sbr.rel (0) target = $region49
    $region48: #{tpu_custom_call.1} parent=1 // pred_region
      %s2497 = ssub.s32 256, 256
      %2498 = vsyncadd [#allocation4], %s2497
      %s2499 = sshll.u32 [#allocation7], 4
      %s2500 = int_to_ptr.vmem [resolvable:$true] %s2499
      %2505 = dma.vmem_to_hbm [thread:$0]  %s2500, 256, %s9, [#allocation4], 128, 128, 8
    $region49: #{tpu_custom_call.1} parent=1 // pred_fallthru
      _
    // Predicated region
    $region50: #{tpu_custom_call.1} parent=1 // pred_check
      _
    $region51: #{tpu_custom_call.1} parent=1 // pred_check_branch
      %2507 = sbr.rel (0) target = $region53
    $region52: #{tpu_custom_call.1} parent=1 // pred_region
      %2508 = dma.done [#allocation4], 256
    $region53: #{tpu_custom_call.1} parent=1 // pred_fallthru
      _
    %2509 = vsyncpa [#allocation3], 1
    %2510 = vsyncpa [#allocation6], 1
    %2511 = vsyncpa [#allocation4], 1

// kernel: tpu_custom_call.1
$region0: #{tpu_custom_call.1}
  #allocation0 [shape = 'u32[]', space=smem, size = 0x4, offset = 0x4, fixed_abs, tag = 'smem constant byte address 0x4 - core index']
  #allocation1 [shape = 'u32[144,128]{1,0:T(1,128)}', space=vmem, size = 0x12000, scoped, tag = 'internal scratch']
  %s0 = inlined_call_operand.vmem [shape: f32[16,3], index: 0, kind: input, shape index: {}]
  %s1 = inlined_call_operand.vmem [shape: f32[16,3], index: 1, kind: input, shape index: {}]
  %s2 = inlined_call_operand.vmem [shape: f32[3,128], index: 2, kind: input, shape index: {}]
  %s3 = inlined_call_operand.vmem [shape: f32[3,128], index: 3, kind: input, shape index: {}]
  %s4 = inlined_call_operand.vmem [shape: f32[1,128], index: 4, kind: input, shape index: {}]
  %s5 = inlined_call_operand.hbm [shape: f32[128,128], index: 5, kind: input, shape index: {}]
  %s6 = inlined_call_operand.vmem [shape: f32[1,128], index: 6, kind: input, shape index: {}]
  %s7 = inlined_call_operand.hbm [shape: f32[128,128], index: 7, kind: input, shape index: {}]
  %s8 = inlined_call_operand.vmem [shape: f32[1,128], index: 8, kind: input, shape index: {}]
  %s9 = inlined_call_operand.hbm [shape: f32[16,128], index: 9, kind: output, shape index: {}]
  %s10 = sld [smem:[#allocation0]]
  $region54: #{tpu_custom_call.1} parent=0
    _
  %s12 = ssub.s32 1, %s10
  %s13 = scalar_select 0, %s12, %s10
  $region1: #{tpu_custom_call.1} parent=0
    #allocation2 [shape = 'u8[65536]{0}', space=vmem, size = 0x10000, scoped, tag = 'input window, operand 5, single buffered']
    #allocation3 [shape = 's32[1]{0}', space=sflag, size = 0x4, scoped, tag = 'scoped memory for tpu_custom_call.1']
    #allocation4 [shape = 's32[1]{0}', space=sflag, size = 0x4, scoped, tag = 'scoped memory for tpu_custom_call.1']
    #allocation5 [shape = 'u8[65536]{0}', space=vmem, size = 0x10000, scoped, tag = 'input window, operand 7, single buffered']
    #allocation6 [shape = 's32[1]{0}', space=sflag, size = 0x4, scoped, tag = 'scoped memory for tpu_custom_call.1']
    #allocation7 [shape = 'u8[8192]{0}', space=vmem, size = 0x2000, scoped, tag = 'output window, operand 0, single buffered']
    %14 = vsyncpa [#allocation3], 0
    %15 = vsyncpa [#allocation6], 0
    %16 = vsyncpa [#allocation4], 0
    // Predicated region
    $region2: #{tpu_custom_call.1} parent=1 // pred_check
      _
    $region3: #{tpu_custom_call.1} parent=1 // pred_check_branch
      %18 = sbr.rel (0) target = $region5
    $region4: #{tpu_custom_call.1} parent=1 // pred_region
      _
    $region5: #{tpu_custom_call.1} parent=1 // pred_fallthru
      _
    // Predicated region
    $region6: #{tpu_custom_call.1} parent=1 // pred_check
      _
    $region7: #{tpu_custom_call.1} parent=1 // pred_check_branch
      %20 = sbr.rel (0) target = $region9
    $region8: #{tpu_custom_call.1} parent=1 // pred_region
      _
    $region9: #{tpu_custom_call.1} parent=1 // pred_fallthru
      _
    // Predicated region
    $region10: #{tpu_custom_call.1} parent=1 // pred_check
      _
    $region11: #{tpu_custom_call.1} parent=1 // pred_check_branch
      %22 = sbr.rel (0) target = $region13
    $region12: #{tpu_custom_call.1} parent=1 // pred_region
      _
    $region13: #{tpu_custom_call.1} parent=1 // pred_fallthru
      _
    // Predicated region
    $region14: #{tpu_custom_call.1} parent=1 // pred_check
      _
    $region15: #{tpu_custom_call.1} parent=1 // pred_check_branch
      %24 = sbr.rel (0) target = $region17
    $region16: #{tpu_custom_call.1} parent=1 // pred_region
      _
    $region17: #{tpu_custom_call.1} parent=1 // pred_fallthru
      _
    // Predicated region
    $region18: #{tpu_custom_call.1} parent=1 // pred_check
      _
    $region19: #{tpu_custom_call.1} parent=1 // pred_check_branch
      %26 = sbr.rel (0) target = $region21
    $region20: #{tpu_custom_call.1} parent=1 // pred_region
      _
    $region21: #{tpu_custom_call.1} parent=1 // pred_fallthru
      _
    // Predicated region
    $region22: #{tpu_custom_call.1} parent=1 // pred_check
      _
    $region23: #{tpu_custom_call.1} parent=1 // pred_check_branch
      %28 = sbr.rel (0) target = $region25
    $region24: #{tpu_custom_call.1} parent=1 // pred_region
      %s30 = ssub.s32 2048, 2048
      %31 = vsyncadd [#allocation3], %s30
      %s32 = sshll.u32 [#allocation2], 4
      %s33 = int_to_ptr.vmem [resolvable:$true] %s32
      %38 = dma.hbm_to_vmem [thread:$0]  %s5, 2048, %s33, [#allocation3], 128, 128, 8
    $region25: #{tpu_custom_call.1} parent=1 // pred_fallthru
      _
    // Predicated region
    $region26: #{tpu_custom_call.1} parent=1 // pred_check
      _
    $region27: #{tpu_custom_call.1} parent=1 // pred_check_branch
      %40 = sbr.rel (0) target = $region29
    $region28: #{tpu_custom_call.1} parent=1 // pred_region
      _
    $region29: #{tpu_custom_call.1} parent=1 // pred_fallthru
      _
    // Predicated region
    $region30: #{tpu_custom_call.1} parent=1 // pred_check
      _
    $region31: #{tpu_custom_call.1} parent=1 // pred_check_branch
      %42 = sbr.rel (0) target = $region33
    $region32: #{tpu_custom_call.1} parent=1 // pred_region
      %s44 = ssub.s32 2048, 2048
      %45 = vsyncadd [#allocation6], %s44
      %s46 = sshll.u32 [#allocation5], 4
      %s47 = int_to_ptr.vmem [resolvable:$true] %s46
      %52 = dma.hbm_to_vmem [thread:$0]  %s7, 2048, %s47, [#allocation6], 128, 128, 8
    $region33: #{tpu_custom_call.1} parent=1 // pred_fallthru
      _
    // Predicated region
    $region34: #{tpu_custom_call.1} parent=1 // pred_check
      _
    $region35: #{tpu_custom_call.1} parent=1 // pred_check_branch
      %54 = sbr.rel (0) target = $region37
    $region36: #{tpu_custom_call.1} parent=1 // pred_region
      _
    $region37: #{tpu_custom_call.1} parent=1 // pred_fallthru
      _
    // Predicated region
    $region38: #{tpu_custom_call.1} parent=1 // pred_check
      _
    $region39: #{tpu_custom_call.1} parent=1 // pred_check_branch
      %56 = sbr.rel (0) target = $region41
    $region40: #{tpu_custom_call.1} parent=1 // pred_region
      %57 = dma.done [#allocation3], 2048
    $region41: #{tpu_custom_call.1} parent=1 // pred_fallthru
      _
    // Predicated region
    $region42: #{tpu_custom_call.1} parent=1 // pred_check
      _
    $region43: #{tpu_custom_call.1} parent=1 // pred_check_branch
      %59 = sbr.rel (0) target = $region45
    $region44: #{tpu_custom_call.1} parent=1 // pred_region
      %60 = dma.done [#allocation6], 2048
    $region45: #{tpu_custom_call.1} parent=1 // pred_fallthru
      _
    %v61 = vld [vmem:[%s0] sm:$0xff]
    %v62 = vld [vmem:[%s0 + $0x8] sm:$0xff]
    %v63 = vld [vmem:[%s2] sm:$0x7]
    %v64 = vld [vmem:[%s1] sm:$0xff]
    %v65 = vld [vmem:[%s1 + $0x8] sm:$0xff]
    %v66 = vld [vmem:[%s3] sm:$0x7]
    %vm67 = vcmask 23552
    %v69 = vsel %vm67, %v64, 0
    %v72 = vsel %vm67, %v65, 0
    %vm74 = vcmask 1042432
    %v76 = vsel %vm74, %v66, 0
    %78 = vmatprep.subr.mxu0 0.0
    %79 = vmatpush1.msra.mxu0 0.0
    %80 = vmatprep.subr.mxu0 0.0
    %81 = vmatpush1.msra.mxu0 0.0
    %82 = vmatprep.subr.mxu0 0.0
    %83 = vmatpush1.msra.mxu0 0.0
    %84 = vmatprep.subr.mxu0 0.0
    %85 = vmatpush1.msra.mxu0 0.0
    %86 = vmatprep.subr.mxu0 0.0
    %87 = vmatpush1.msra.mxu0 0.0
    %88 = vmatprep.subr.mxu0 0.0
    %89 = vmatpush1.msra.mxu0 0.0
    %90 = vmatprep.subr.mxu0 0.0
    %91 = vmatpush1.msra.mxu0 0.0
    %92 = vmatprep.subr.mxu0 0.0
    %93 = vmatpush1.msra.mxu0 0.0
    %94 = vmatprep.subr.mxu0 0.0
    %95 = vmatpush1.msra.mxu0 0.0
    %96 = vmatprep.subr.mxu0 0.0
    %97 = vmatpush1.msra.mxu0 0.0
    %98 = vmatprep.subr.mxu0 0.0
    %99 = vmatpush1.msra.mxu0 0.0
    %100 = vmatprep.subr.mxu0 0.0
    %101 = vmatpush1.msra.mxu0 0.0
    %102 = vmatprep.subr.mxu0 0.0
    %103 = vmatpush1.msra.mxu0 0.0
    %104 = vmatprep.subr.mxu0 0.0
    %105 = vmatpush1.msra.mxu0 0.0
    %106 = vmatprep.subr.mxu0 0.0
    %107 = vmatpush1.msra.mxu0 0.0
    %108 = vmatprep.subr.mxu0 0.0
    %v109 = vand.u32 %v76, 4294901760
    %110 = vmatpush1.msra.mxu0 %v109
    %111 = vmatprep.subr.mxu0 0.0
    %112 = vmatpush2.msra.mxu0 0.0
    %113 = vmatprep.subr.mxu0 0.0
    %114 = vmatpush2.msra.mxu0 0.0
    %115 = vmatprep.subr.mxu0 0.0
    %116 = vmatpush2.msra.mxu0 0.0
    %117 = vmatprep.subr.mxu0 0.0
    %118 = vmatpush2.msra.mxu0 0.0
    %119 = vmatprep.subr.mxu0 0.0
    %120 = vmatpush2.msra.mxu0 0.0
    %121 = vmatprep.subr.mxu0 0.0
    %122 = vmatpush2.msra.mxu0 0.0
    %123 = vmatprep.subr.mxu0 0.0
    %124 = vmatpush2.msra.mxu0 0.0
    %125 = vmatprep.subr.mxu0 0.0
    %126 = vmatpush2.msra.mxu0 0.0
    %127 = vmatprep.subr.mxu0 0.0
    %128 = vmatpush2.msra.mxu0 0.0
    %129 = vmatprep.subr.mxu0 0.0
    %130 = vmatpush2.msra.mxu0 0.0
    %131 = vmatprep.subr.mxu0 0.0
    %132 = vmatpush2.msra.mxu0 0.0
    %133 = vmatprep.subr.mxu0 0.0
    %134 = vmatpush2.msra.mxu0 0.0
    %135 = vmatprep.subr.mxu0 0.0
    %136 = vmatpush2.msra.mxu0 0.0
    %137 = vmatprep.subr.mxu0 0.0
    %138 = vmatpush2.msra.mxu0 0.0
    %139 = vmatprep.subr.mxu0 0.0
    %140 = vmatpush2.msra.mxu0 0.0
    %141 = vmatprep.subr.mxu0 0.0
    %142 = vmatpush2.msra.mxu0 0.0
    %143 = vmatprep.mubr.f32.mxu0 0.0
    %v144 = vand.u32 %v69, 4294901760
    %v145 = vsub.f32 %v69, %v144
    %v146 = vand.u32 %v145, 4294901760
    %v147 = vsub.f32 %v145, %v146
    %v148 = vand.u32 %v147, 4294901760
    %149 = vmatmul.mubr.f32.gmra.mxu0 %v148
    %v150 = vpop.f32.mrf.mxu0
    %v151 = vadd.f32 0.0, %v150
    %v152 = vpop.f32.mrf.mxu0
    %153 = vmatprep.mubr.f32.mxu0 0.0
    %v154 = vand.u32 %v72, 4294901760
    %v155 = vsub.f32 %v72, %v154
    %v156 = vand.u32 %v155, 4294901760
    %v157 = vsub.f32 %v155, %v156
    %v158 = vand.u32 %v157, 4294901760
    %159 = vmatmul.mubr.f32.gmra.mxu0 %v158
    %v160 = vpop.f32.mrf.mxu0
    %v161 = vadd.f32 0.0, %v160
    %v162 = vpop.f32.mrf.mxu0
    %163 = vdwg.mxu0
    %164 = vmatprep.subr.mxu0 0.0
    %165 = vmatpush1.msra.mxu0 0.0
    %166 = vmatprep.subr.mxu0 0.0
    %167 = vmatpush1.msra.mxu0 0.0
    %168 = vmatprep.subr.mxu0 0.0
    %169 = vmatpush1.msra.mxu0 0.0
    %170 = vmatprep.subr.mxu0 0.0
    %171 = vmatpush1.msra.mxu0 0.0
    %172 = vmatprep.subr.mxu0 0.0
    %173 = vmatpush1.msra.mxu0 0.0
    %174 = vmatprep.subr.mxu0 0.0
    %175 = vmatpush1.msra.mxu0 0.0
    %176 = vmatprep.subr.mxu0 0.0
    %177 = vmatpush1.msra.mxu0 0.0
    %178 = vmatprep.subr.mxu0 0.0
    %179 = vmatpush1.msra.mxu0 0.0
    %180 = vmatprep.subr.mxu0 0.0
    %181 = vmatpush1.msra.mxu0 0.0
    %182 = vmatprep.subr.mxu0 0.0
    %183 = vmatpush1.msra.mxu0 0.0
    %184 = vmatprep.subr.mxu0 0.0
    %185 = vmatpush1.msra.mxu0 0.0
    %186 = vmatprep.subr.mxu0 0.0
    %187 = vmatpush1.msra.mxu0 0.0
    %188 = vmatprep.subr.mxu0 0.0
    %189 = vmatpush1.msra.mxu0 0.0
    %190 = vmatprep.subr.mxu0 0.0
    %191 = vmatpush1.msra.mxu0 0.0
    %192 = vmatprep.subr.mxu0 0.0
    %193 = vmatpush1.msra.mxu0 0.0
    %194 = vmatprep.subr.mxu0 0.0
    %v195 = vand.u32 %v76, 4294901760
    %v196 = vsub.f32 %v76, %v195
    %v197 = vand.u32 %v196, 4294901760
    %v198 = vsub.f32 %v196, %v197
    %v199 = vand.u32 %v198, 4294901760
    %200 = vmatpush1.msra.mxu0 %v199
    %201 = vmatprep.subr.mxu0 0.0
    %202 = vmatpush2.msra.mxu0 0.0
    %203 = vmatprep.subr.mxu0 0.0
    %204 = vmatpush2.msra.mxu0 0.0
    %205 = vmatprep.subr.mxu0 0.0
    %206 = vmatpush2.msra.mxu0 0.0
    %207 = vmatprep.subr.mxu0 0.0
    %208 = vmatpush2.msra.mxu0 0.0
    %209 = vmatprep.subr.mxu0 0.0
    %210 = vmatpush2.msra.mxu0 0.0
    %211 = vmatprep.subr.mxu0 0.0
    %212 = vmatpush2.msra.mxu0 0.0
    %213 = vmatprep.subr.mxu0 0.0
    %214 = vmatpush2.msra.mxu0 0.0
    %215 = vmatprep.subr.mxu0 0.0
    %216 = vmatpush2.msra.mxu0 0.0
    %217 = vmatprep.subr.mxu0 0.0
    %218 = vmatpush2.msra.mxu0 0.0
    %219 = vmatprep.subr.mxu0 0.0
    %220 = vmatpush2.msra.mxu0 0.0
    %221 = vmatprep.subr.mxu0 0.0
    %222 = vmatpush2.msra.mxu0 0.0
    %223 = vmatprep.subr.mxu0 0.0
    %224 = vmatpush2.msra.mxu0 0.0
    %225 = vmatprep.subr.mxu0 0.0
    %226 = vmatpush2.msra.mxu0 0.0
    %227 = vmatprep.subr.mxu0 0.0
    %228 = vmatpush2.msra.mxu0 0.0
    %229 = vmatprep.subr.mxu0 0.0
    %230 = vmatpush2.msra.mxu0 0.0
    %231 = vmatprep.subr.mxu0 0.0
    %232 = vmatpush2.msra.mxu0 0.0
    %233 = vmatprep.mubr.f32.mxu0 0.0
    %v234 = vand.u32 %v69, 4294901760
    %235 = vmatmul.mubr.f32.gmra.mxu0 %v234
    %v236 = vpop.f32.mrf.mxu0
    %v237 = vadd.f32 %v151, %v236
    %v238 = vpop.f32.mrf.mxu0
    %239 = vmatprep.mubr.f32.mxu0 0.0
    %v240 = vand.u32 %v72, 4294901760
    %241 = vmatmul.mubr.f32.gmra.mxu0 %v240
    %v242 = vpop.f32.mrf.mxu0
    %v243 = vadd.f32 %v161, %v242
    %v244 = vpop.f32.mrf.mxu0
    %245 = vdwg.mxu0
    %246 = vmatprep.subr.mxu0 0.0
    %247 = vmatpush1.msra.mxu0 0.0
    %248 = vmatprep.subr.mxu0 0.0
    %249 = vmatpush1.msra.mxu0 0.0
    %250 = vmatprep.subr.mxu0 0.0
    %251 = vmatpush1.msra.mxu0 0.0
    %252 = vmatprep.subr.mxu0 0.0
    %253 = vmatpush1.msra.mxu0 0.0
    %254 = vmatprep.subr.mxu0 0.0
    %255 = vmatpush1.msra.mxu0 0.0
    %256 = vmatprep.subr.mxu0 0.0
    %257 = vmatpush1.msra.mxu0 0.0
    %258 = vmatprep.subr.mxu0 0.0
    %259 = vmatpush1.msra.mxu0 0.0
    %260 = vmatprep.subr.mxu0 0.0
    %261 = vmatpush1.msra.mxu0 0.0
    %262 = vmatprep.subr.mxu0 0.0
    %263 = vmatpush1.msra.mxu0 0.0
    %264 = vmatprep.subr.mxu0 0.0
    %265 = vmatpush1.msra.mxu0 0.0
    %266 = vmatprep.subr.mxu0 0.0
    %267 = vmatpush1.msra.mxu0 0.0
    %268 = vmatprep.subr.mxu0 0.0
    %269 = vmatpush1.msra.mxu0 0.0
    %270 = vmatprep.subr.mxu0 0.0
    %271 = vmatpush1.msra.mxu0 0.0
    %272 = vmatprep.subr.mxu0 0.0
    %273 = vmatpush1.msra.mxu0 0.0
    %274 = vmatprep.subr.mxu0 0.0
    %275 = vmatpush1.msra.mxu0 0.0
    %276 = vmatprep.subr.mxu0 0.0
    %v277 = vand.u32 %v76, 4294901760
    %v278 = vsub.f32 %v76, %v277
    %279 = vmatpush1.msra.mxu0 %v278
    %280 = vmatprep.subr.mxu0 0.0
    %281 = vmatpush2.msra.mxu0 0.0
    %282 = vmatprep.subr.mxu0 0.0
    %283 = vmatpush2.msra.mxu0 0.0
    %284 = vmatprep.subr.mxu0 0.0
    %285 = vmatpush2.msra.mxu0 0.0
    %286 = vmatprep.subr.mxu0 0.0
    %287 = vmatpush2.msra.mxu0 0.0
    %288 = vmatprep.subr.mxu0 0.0
    %289 = vmatpush2.msra.mxu0 0.0
    %290 = vmatprep.subr.mxu0 0.0
    %291 = vmatpush2.msra.mxu0 0.0
    %292 = vmatprep.subr.mxu0 0.0
    %293 = vmatpush2.msra.mxu0 0.0
    %294 = vmatprep.subr.mxu0 0.0
    %295 = vmatpush2.msra.mxu0 0.0
    %296 = vmatprep.subr.mxu0 0.0
    %297 = vmatpush2.msra.mxu0 0.0
    %298 = vmatprep.subr.mxu0 0.0
    %299 = vmatpush2.msra.mxu0 0.0
    %300 = vmatprep.subr.mxu0 0.0
    %301 = vmatpush2.msra.mxu0 0.0
    %302 = vmatprep.subr.mxu0 0.0
    %303 = vmatpush2.msra.mxu0 0.0
    %304 = vmatprep.subr.mxu0 0.0
    %305 = vmatpush2.msra.mxu0 0.0
    %306 = vmatprep.subr.mxu0 0.0
    %307 = vmatpush2.msra.mxu0 0.0
    %308 = vmatprep.subr.mxu0 0.0
    %309 = vmatpush2.msra.mxu0 0.0
    %310 = vmatprep.subr.mxu0 0.0
    %311 = vmatpush2.msra.mxu0 0.0
    %312 = vmatprep.mubr.f32.mxu0 0.0
    %v313 = vand.u32 %v69, 4294901760
    %v314 = vsub.f32 %v69, %v313
    %315 = vmatmul.mubr.f32.gmra.mxu0 %v314
    %v316 = vpop.f32.mrf.mxu0
    %v317 = vadd.f32 %v237, %v316
    %v318 = vpop.f32.mrf.mxu0
    %319 = vmatprep.mubr.f32.mxu0 0.0
    %v320 = vand.u32 %v72, 4294901760
    %v321 = vsub.f32 %v72, %v320
    %322 = vmatmul.mubr.f32.gmra.mxu0 %v321
    %v323 = vpop.f32.mrf.mxu0
    %v324 = vadd.f32 %v243, %v323
    %v325 = vpop.f32.mrf.mxu0
    %326 = vdwg.mxu0
    %327 = vmatprep.subr.mxu0 0.0
    %328 = vmatpush1.msra.mxu0 0.0
    %329 = vmatprep.subr.mxu0 0.0
    %330 = vmatpush1.msra.mxu0 0.0
    %331 = vmatprep.subr.mxu0 0.0
    %332 = vmatpush1.msra.mxu0 0.0
    %333 = vmatprep.subr.mxu0 0.0
    %334 = vmatpush1.msra.mxu0 0.0
    %335 = vmatprep.subr.mxu0 0.0
    %336 = vmatpush1.msra.mxu0 0.0
    %337 = vmatprep.subr.mxu0 0.0
    %338 = vmatpush1.msra.mxu0 0.0
    %339 = vmatprep.subr.mxu0 0.0
    %340 = vmatpush1.msra.mxu0 0.0
    %341 = vmatprep.subr.mxu0 0.0
    %342 = vmatpush1.msra.mxu0 0.0
    %343 = vmatprep.subr.mxu0 0.0
    %344 = vmatpush1.msra.mxu0 0.0
    %345 = vmatprep.subr.mxu0 0.0
    %346 = vmatpush1.msra.mxu0 0.0
    %347 = vmatprep.subr.mxu0 0.0
    %348 = vmatpush1.msra.mxu0 0.0
    %349 = vmatprep.subr.mxu0 0.0
    %350 = vmatpush1.msra.mxu0 0.0
    %351 = vmatprep.subr.mxu0 0.0
    %352 = vmatpush1.msra.mxu0 0.0
    %353 = vmatprep.subr.mxu0 0.0
    %354 = vmatpush1.msra.mxu0 0.0
    %355 = vmatprep.subr.mxu0 0.0
    %356 = vmatpush1.msra.mxu0 0.0
    %357 = vmatprep.subr.mxu0 0.0
    %v358 = vand.u32 %v76, 4294901760
    %359 = vmatpush1.msra.mxu0 %v358
    %360 = vmatprep.subr.mxu0 0.0
    %361 = vmatpush2.msra.mxu0 0.0
    %362 = vmatprep.subr.mxu0 0.0
    %363 = vmatpush2.msra.mxu0 0.0
    %364 = vmatprep.subr.mxu0 0.0
    %365 = vmatpush2.msra.mxu0 0.0
    %366 = vmatprep.subr.mxu0 0.0
    %367 = vmatpush2.msra.mxu0 0.0
    %368 = vmatprep.subr.mxu0 0.0
    %369 = vmatpush2.msra.mxu0 0.0
    %370 = vmatprep.subr.mxu0 0.0
    %371 = vmatpush2.msra.mxu0 0.0
    %372 = vmatprep.subr.mxu0 0.0
    %373 = vmatpush2.msra.mxu0 0.0
    %374 = vmatprep.subr.mxu0 0.0
    %375 = vmatpush2.msra.mxu0 0.0
    %376 = vmatprep.subr.mxu0 0.0
    %377 = vmatpush2.msra.mxu0 0.0
    %378 = vmatprep.subr.mxu0 0.0
    %379 = vmatpush2.msra.mxu0 0.0
    %380 = vmatprep.subr.mxu0 0.0
    %381 = vmatpush2.msra.mxu0 0.0
    %382 = vmatprep.subr.mxu0 0.0
    %383 = vmatpush2.msra.mxu0 0.0
    %384 = vmatprep.subr.mxu0 0.0
    %385 = vmatpush2.msra.mxu0 0.0
    %386 = vmatprep.subr.mxu0 0.0
    %387 = vmatpush2.msra.mxu0 0.0
    %388 = vmatprep.subr.mxu0 0.0
    %389 = vmatpush2.msra.mxu0 0.0
    %390 = vmatprep.subr.mxu0 0.0
    %391 = vmatpush2.msra.mxu0 0.0
    %392 = vmatprep.mubr.f32.mxu0 0.0
    %v393 = vand.u32 %v69, 4294901760
    %v394 = vsub.f32 %v69, %v393
    %v395 = vand.u32 %v394, 4294901760
    %396 = vmatmul.mubr.f32.gmra.mxu0 %v395
    %v397 = vpop.f32.mrf.mxu0
    %v398 = vadd.f32 %v317, %v397
    %v399 = vpop.f32.mrf.mxu0
    %400 = vmatprep.mubr.f32.mxu0 0.0
    %v401 = vand.u32 %v72, 4294901760
    %v402 = vsub.f32 %v72, %v401
    %v403 = vand.u32 %v402, 4294901760
    %404 = vmatmul.mubr.f32.gmra.mxu0 %v403
    %v405 = vpop.f32.mrf.mxu0
    %v406 = vadd.f32 %v324, %v405
    %v407 = vpop.f32.mrf.mxu0
    %408 = vdwg.mxu0
    %409 = vmatprep.subr.mxu0 0.0
    %410 = vmatpush1.msra.mxu0 0.0
    %411 = vmatprep.subr.mxu0 0.0
    %412 = vmatpush1.msra.mxu0 0.0
    %413 = vmatprep.subr.mxu0 0.0
    %414 = vmatpush1.msra.mxu0 0.0
    %415 = vmatprep.subr.mxu0 0.0
    %416 = vmatpush1.msra.mxu0 0.0
    %417 = vmatprep.subr.mxu0 0.0
    %418 = vmatpush1.msra.mxu0 0.0
    %419 = vmatprep.subr.mxu0 0.0
    %420 = vmatpush1.msra.mxu0 0.0
    %421 = vmatprep.subr.mxu0 0.0
    %422 = vmatpush1.msra.mxu0 0.0
    %423 = vmatprep.subr.mxu0 0.0
    %424 = vmatpush1.msra.mxu0 0.0
    %425 = vmatprep.subr.mxu0 0.0
    %426 = vmatpush1.msra.mxu0 0.0
    %427 = vmatprep.subr.mxu0 0.0
    %428 = vmatpush1.msra.mxu0 0.0
    %429 = vmatprep.subr.mxu0 0.0
    %430 = vmatpush1.msra.mxu0 0.0
    %431 = vmatprep.subr.mxu0 0.0
    %432 = vmatpush1.msra.mxu0 0.0
    %433 = vmatprep.subr.mxu0 0.0
    %434 = vmatpush1.msra.mxu0 0.0
    %435 = vmatprep.subr.mxu0 0.0
    %436 = vmatpush1.msra.mxu0 0.0
    %437 = vmatprep.subr.mxu0 0.0
    %438 = vmatpush1.msra.mxu0 0.0
    %439 = vmatprep.subr.mxu0 0.0
    %v440 = vand.u32 %v76, 4294901760
    %v441 = vsub.f32 %v76, %v440
    %v442 = vand.u32 %v441, 4294901760
    %443 = vmatpush1.msra.mxu0 %v442
    %444 = vmatprep.subr.mxu0 0.0
    %445 = vmatpush2.msra.mxu0 0.0
    %446 = vmatprep.subr.mxu0 0.0
    %447 = vmatpush2.msra.mxu0 0.0
    %448 = vmatprep.subr.mxu0 0.0
    %449 = vmatpush2.msra.mxu0 0.0
    %450 = vmatprep.subr.mxu0 0.0
    %451 = vmatpush2.msra.mxu0 0.0
    %452 = vmatprep.subr.mxu0 0.0
    %453 = vmatpush2.msra.mxu0 0.0
    %454 = vmatprep.subr.mxu0 0.0
    %455 = vmatpush2.msra.mxu0 0.0
    %456 = vmatprep.subr.mxu0 0.0
    %457 = vmatpush2.msra.mxu0 0.0
    %458 = vmatprep.subr.mxu0 0.0
    %459 = vmatpush2.msra.mxu0 0.0
    %460 = vmatprep.subr.mxu0 0.0
    %461 = vmatpush2.msra.mxu0 0.0
    %462 = vmatprep.subr.mxu0 0.0
    %463 = vmatpush2.msra.mxu0 0.0
    %464 = vmatprep.subr.mxu0 0.0
    %465 = vmatpush2.msra.mxu0 0.0
    %466 = vmatprep.subr.mxu0 0.0
    %467 = vmatpush2.msra.mxu0 0.0
    %468 = vmatprep.subr.mxu0 0.0
    %469 = vmatpush2.msra.mxu0 0.0
    %470 = vmatprep.subr.mxu0 0.0
    %471 = vmatpush2.msra.mxu0 0.0
    %472 = vmatprep.subr.mxu0 0.0
    %473 = vmatpush2.msra.mxu0 0.0
    %474 = vmatprep.subr.mxu0 0.0
    %475 = vmatpush2.msra.mxu0 0.0
    %476 = vmatprep.mubr.f32.mxu0 0.0
    %v477 = vand.u32 %v69, 4294901760
    %478 = vmatmul.mubr.f32.gmra.mxu0 %v477
    %v479 = vpop.f32.mrf.mxu0
    %v480 = vadd.f32 %v398, %v479
    %v481 = vpop.f32.mrf.mxu0
    %482 = vmatprep.mubr.f32.mxu0 0.0
    %v483 = vand.u32 %v72, 4294901760
    %484 = vmatmul.mubr.f32.gmra.mxu0 %v483
    %v485 = vpop.f32.mrf.mxu0
    %v486 = vadd.f32 %v406, %v485
    %v487 = vpop.f32.mrf.mxu0
    %488 = vdwg.mxu0
    %489 = vmatprep.subr.mxu0 0.0
    %490 = vmatpush1.msra.mxu0 0.0
    %491 = vmatprep.subr.mxu0 0.0
    %492 = vmatpush1.msra.mxu0 0.0
    %493 = vmatprep.subr.mxu0 0.0
    %494 = vmatpush1.msra.mxu0 0.0
    %495 = vmatprep.subr.mxu0 0.0
    %496 = vmatpush1.msra.mxu0 0.0
    %497 = vmatprep.subr.mxu0 0.0
    %498 = vmatpush1.msra.mxu0 0.0
    %499 = vmatprep.subr.mxu0 0.0
    %500 = vmatpush1.msra.mxu0 0.0
    %501 = vmatprep.subr.mxu0 0.0
    %502 = vmatpush1.msra.mxu0 0.0
    %503 = vmatprep.subr.mxu0 0.0
    %504 = vmatpush1.msra.mxu0 0.0
    %505 = vmatprep.subr.mxu0 0.0
    %506 = vmatpush1.msra.mxu0 0.0
    %507 = vmatprep.subr.mxu0 0.0
    %508 = vmatpush1.msra.mxu0 0.0
    %509 = vmatprep.subr.mxu0 0.0
    %510 = vmatpush1.msra.mxu0 0.0
    %511 = vmatprep.subr.mxu0 0.0
    %512 = vmatpush1.msra.mxu0 0.0
    %513 = vmatprep.subr.mxu0 0.0
    %514 = vmatpush1.msra.mxu0 0.0
    %515 = vmatprep.subr.mxu0 0.0
    %516 = vmatpush1.msra.mxu0 0.0
    %517 = vmatprep.subr.mxu0 0.0
    %518 = vmatpush1.msra.mxu0 0.0
    %519 = vmatprep.subr.mxu0 0.0
    %v520 = vand.u32 %v76, 4294901760
    %521 = vmatpush1.msra.mxu0 %v520
    %522 = vmatprep.subr.mxu0 0.0
    %523 = vmatpush2.msra.mxu0 0.0
    %524 = vmatprep.subr.mxu0 0.0
    %525 = vmatpush2.msra.mxu0 0.0
    %526 = vmatprep.subr.mxu0 0.0
    %527 = vmatpush2.msra.mxu0 0.0
    %528 = vmatprep.subr.mxu0 0.0
    %529 = vmatpush2.msra.mxu0 0.0
    %530 = vmatprep.subr.mxu0 0.0
    %531 = vmatpush2.msra.mxu0 0.0
    %532 = vmatprep.subr.mxu0 0.0
    %533 = vmatpush2.msra.mxu0 0.0
    %534 = vmatprep.subr.mxu0 0.0
    %535 = vmatpush2.msra.mxu0 0.0
    %536 = vmatprep.subr.mxu0 0.0
    %537 = vmatpush2.msra.mxu0 0.0
    %538 = vmatprep.subr.mxu0 0.0
    %539 = vmatpush2.msra.mxu0 0.0
    %540 = vmatprep.subr.mxu0 0.0
    %541 = vmatpush2.msra.mxu0 0.0
    %542 = vmatprep.subr.mxu0 0.0
    %543 = vmatpush2.msra.mxu0 0.0
    %544 = vmatprep.subr.mxu0 0.0
    %545 = vmatpush2.msra.mxu0 0.0
    %546 = vmatprep.subr.mxu0 0.0
    %547 = vmatpush2.msra.mxu0 0.0
    %548 = vmatprep.subr.mxu0 0.0
    %549 = vmatpush2.msra.mxu0 0.0
    %550 = vmatprep.subr.mxu0 0.0
    %551 = vmatpush2.msra.mxu0 0.0
    %552 = vmatprep.subr.mxu0 0.0
    %553 = vmatpush2.msra.mxu0 0.0
    %554 = vmatprep.mubr.f32.mxu0 0.0
    %v555 = vand.u32 %v69, 4294901760
    %556 = vmatmul.mubr.f32.gmra.mxu0 %v555
    %v557 = vpop.f32.mrf.mxu0
    %v558 = vadd.f32 %v480, %v557
    %v559 = vpop.f32.mrf.mxu0
    %560 = vmatprep.mubr.f32.mxu0 0.0
    %v561 = vand.u32 %v72, 4294901760
    %562 = vmatmul.mubr.f32.gmra.mxu0 %v561
    %v563 = vpop.f32.mrf.mxu0
    %v564 = vadd.f32 %v486, %v563
    %v565 = vpop.f32.mrf.mxu0
    %566 = vdwg.mxu0
    %v568 = vsel %vm67, %v61, 0
    %v571 = vsel %vm67, %v62, 0
    %v574 = vsel %vm74, %v63, 0
    %576 = vmatprep.subr.mxu0 0.0
    %577 = vmatpush1.msra.mxu0 0.0
    %578 = vmatprep.subr.mxu0 0.0
    %579 = vmatpush1.msra.mxu0 0.0
    %580 = vmatprep.subr.mxu0 0.0
    %581 = vmatpush1.msra.mxu0 0.0
    %582 = vmatprep.subr.mxu0 0.0
    %583 = vmatpush1.msra.mxu0 0.0
    %584 = vmatprep.subr.mxu0 0.0
    %585 = vmatpush1.msra.mxu0 0.0
    %586 = vmatprep.subr.mxu0 0.0
    %587 = vmatpush1.msra.mxu0 0.0
    %588 = vmatprep.subr.mxu0 0.0
    %589 = vmatpush1.msra.mxu0 0.0
    %590 = vmatprep.subr.mxu0 0.0
    %591 = vmatpush1.msra.mxu0 0.0
    %592 = vmatprep.subr.mxu0 0.0
    %593 = vmatpush1.msra.mxu0 0.0
    %594 = vmatprep.subr.mxu0 0.0
    %595 = vmatpush1.msra.mxu0 0.0
    %596 = vmatprep.subr.mxu0 0.0
    %597 = vmatpush1.msra.mxu0 0.0
    %598 = vmatprep.subr.mxu0 0.0
    %599 = vmatpush1.msra.mxu0 0.0
    %600 = vmatprep.subr.mxu0 0.0
    %601 = vmatpush1.msra.mxu0 0.0
    %602 = vmatprep.subr.mxu0 0.0
    %603 = vmatpush1.msra.mxu0 0.0
    %604 = vmatprep.subr.mxu0 0.0
    %605 = vmatpush1.msra.mxu0 0.0
    %606 = vmatprep.subr.mxu0 0.0
    %v607 = vand.u32 %v574, 4294901760
    %608 = vmatpush1.msra.mxu0 %v607
    %609 = vmatprep.subr.mxu0 0.0
    %610 = vmatpush2.msra.mxu0 0.0
    %611 = vmatprep.subr.mxu0 0.0
    %612 = vmatpush2.msra.mxu0 0.0
    %613 = vmatprep.subr.mxu0 0.0
    %614 = vmatpush2.msra.mxu0 0.0
    %615 = vmatprep.subr.mxu0 0.0
    %616 = vmatpush2.msra.mxu0 0.0
    %617 = vmatprep.subr.mxu0 0.0
    %618 = vmatpush2.msra.mxu0 0.0
    %619 = vmatprep.subr.mxu0 0.0
    %620 = vmatpush2.msra.mxu0 0.0
    %621 = vmatprep.subr.mxu0 0.0
    %622 = vmatpush2.msra.mxu0 0.0
    %623 = vmatprep.subr.mxu0 0.0
    %624 = vmatpush2.msra.mxu0 0.0
    %625 = vmatprep.subr.mxu0 0.0
    %626 = vmatpush2.msra.mxu0 0.0
    %627 = vmatprep.subr.mxu0 0.0
    %628 = vmatpush2.msra.mxu0 0.0
    %629 = vmatprep.subr.mxu0 0.0
    %630 = vmatpush2.msra.mxu0 0.0
    %631 = vmatprep.subr.mxu0 0.0
    %632 = vmatpush2.msra.mxu0 0.0
    %633 = vmatprep.subr.mxu0 0.0
    %634 = vmatpush2.msra.mxu0 0.0
    %635 = vmatprep.subr.mxu0 0.0
    %636 = vmatpush2.msra.mxu0 0.0
    %637 = vmatprep.subr.mxu0 0.0
    %638 = vmatpush2.msra.mxu0 0.0
    %639 = vmatprep.subr.mxu0 0.0
    %640 = vmatpush2.msra.mxu0 0.0
    %641 = vmatprep.mubr.f32.mxu0 0.0
    %v642 = vand.u32 %v568, 4294901760
    %v643 = vsub.f32 %v568, %v642
    %v644 = vand.u32 %v643, 4294901760
    %v645 = vsub.f32 %v643, %v644
    %v646 = vand.u32 %v645, 4294901760
    %647 = vmatmul.mubr.f32.gmra.mxu0 %v646
    %v648 = vpop.f32.mrf.mxu0
    %v649 = vadd.f32 %v558, %v648
    %v650 = vpop.f32.mrf.mxu0
    %651 = vmatprep.mubr.f32.mxu0 0.0
    %v652 = vand.u32 %v571, 4294901760
    %v653 = vsub.f32 %v571, %v652
    %v654 = vand.u32 %v653, 4294901760
    %v655 = vsub.f32 %v653, %v654
    %v656 = vand.u32 %v655, 4294901760
    %657 = vmatmul.mubr.f32.gmra.mxu0 %v656
    %v658 = vpop.f32.mrf.mxu0
    %v659 = vadd.f32 %v564, %v658
    %v660 = vpop.f32.mrf.mxu0
    %661 = vdwg.mxu0
    %662 = vmatprep.subr.mxu0 0.0
    %663 = vmatpush1.msra.mxu0 0.0
    %664 = vmatprep.subr.mxu0 0.0
    %665 = vmatpush1.msra.mxu0 0.0
    %666 = vmatprep.subr.mxu0 0.0
    %667 = vmatpush1.msra.mxu0 0.0
    %668 = vmatprep.subr.mxu0 0.0
    %669 = vmatpush1.msra.mxu0 0.0
    %670 = vmatprep.subr.mxu0 0.0
    %671 = vmatpush1.msra.mxu0 0.0
    %672 = vmatprep.subr.mxu0 0.0
    %673 = vmatpush1.msra.mxu0 0.0
    %674 = vmatprep.subr.mxu0 0.0
    %675 = vmatpush1.msra.mxu0 0.0
    %676 = vmatprep.subr.mxu0 0.0
    %677 = vmatpush1.msra.mxu0 0.0
    %678 = vmatprep.subr.mxu0 0.0
    %679 = vmatpush1.msra.mxu0 0.0
    %680 = vmatprep.subr.mxu0 0.0
    %681 = vmatpush1.msra.mxu0 0.0
    %682 = vmatprep.subr.mxu0 0.0
    %683 = vmatpush1.msra.mxu0 0.0
    %684 = vmatprep.subr.mxu0 0.0
    %685 = vmatpush1.msra.mxu0 0.0
    %686 = vmatprep.subr.mxu0 0.0
    %687 = vmatpush1.msra.mxu0 0.0
    %688 = vmatprep.subr.mxu0 0.0
    %689 = vmatpush1.msra.mxu0 0.0
    %690 = vmatprep.subr.mxu0 0.0
    %691 = vmatpush1.msra.mxu0 0.0
    %692 = vmatprep.subr.mxu0 0.0
    %v693 = vand.u32 %v574, 4294901760
    %v694 = vsub.f32 %v574, %v693
    %v695 = vand.u32 %v694, 4294901760
    %v696 = vsub.f32 %v694, %v695
    %v697 = vand.u32 %v696, 4294901760
    %698 = vmatpush1.msra.mxu0 %v697
    %699 = vmatprep.subr.mxu0 0.0
    %700 = vmatpush2.msra.mxu0 0.0
    %701 = vmatprep.subr.mxu0 0.0
    %702 = vmatpush2.msra.mxu0 0.0
    %703 = vmatprep.subr.mxu0 0.0
    %704 = vmatpush2.msra.mxu0 0.0
    %705 = vmatprep.subr.mxu0 0.0
    %706 = vmatpush2.msra.mxu0 0.0
    %707 = vmatprep.subr.mxu0 0.0
    %708 = vmatpush2.msra.mxu0 0.0
    %709 = vmatprep.subr.mxu0 0.0
    %710 = vmatpush2.msra.mxu0 0.0
    %711 = vmatprep.subr.mxu0 0.0
    %712 = vmatpush2.msra.mxu0 0.0
    %713 = vmatprep.subr.mxu0 0.0
    %714 = vmatpush2.msra.mxu0 0.0
    %715 = vmatprep.subr.mxu0 0.0
    %716 = vmatpush2.msra.mxu0 0.0
    %717 = vmatprep.subr.mxu0 0.0
    %718 = vmatpush2.msra.mxu0 0.0
    %719 = vmatprep.subr.mxu0 0.0
    %720 = vmatpush2.msra.mxu0 0.0
    %721 = vmatprep.subr.mxu0 0.0
    %722 = vmatpush2.msra.mxu0 0.0
    %723 = vmatprep.subr.mxu0 0.0
    %724 = vmatpush2.msra.mxu0 0.0
    %725 = vmatprep.subr.mxu0 0.0
    %726 = vmatpush2.msra.mxu0 0.0
    %727 = vmatprep.subr.mxu0 0.0
    %728 = vmatpush2.msra.mxu0 0.0
    %729 = vmatprep.subr.mxu0 0.0
    %730 = vmatpush2.msra.mxu0 0.0
    %731 = vmatprep.mubr.f32.mxu0 0.0
    %v732 = vand.u32 %v568, 4294901760
    %733 = vmatmul.mubr.f32.gmra.mxu0 %v732
    %v734 = vpop.f32.mrf.mxu0
    %v735 = vadd.f32 %v649, %v734
    %v736 = vpop.f32.mrf.mxu0
    %737 = vmatprep.mubr.f32.mxu0 0.0
    %v738 = vand.u32 %v571, 4294901760
    %739 = vmatmul.mubr.f32.gmra.mxu0 %v738
    %v740 = vpop.f32.mrf.mxu0
    %v741 = vadd.f32 %v659, %v740
    %v742 = vpop.f32.mrf.mxu0
    %743 = vdwg.mxu0
    %744 = vmatprep.subr.mxu0 0.0
    %745 = vmatpush1.msra.mxu0 0.0
    %746 = vmatprep.subr.mxu0 0.0
    %747 = vmatpush1.msra.mxu0 0.0
    %748 = vmatprep.subr.mxu0 0.0
    %749 = vmatpush1.msra.mxu0 0.0
    %750 = vmatprep.subr.mxu0 0.0
    %751 = vmatpush1.msra.mxu0 0.0
    %752 = vmatprep.subr.mxu0 0.0
    %753 = vmatpush1.msra.mxu0 0.0
    %754 = vmatprep.subr.mxu0 0.0
    %755 = vmatpush1.msra.mxu0 0.0
    %756 = vmatprep.subr.mxu0 0.0
    %757 = vmatpush1.msra.mxu0 0.0
    %758 = vmatprep.subr.mxu0 0.0
    %759 = vmatpush1.msra.mxu0 0.0
    %760 = vmatprep.subr.mxu0 0.0
    %761 = vmatpush1.msra.mxu0 0.0
    %762 = vmatprep.subr.mxu0 0.0
    %763 = vmatpush1.msra.mxu0 0.0
    %764 = vmatprep.subr.mxu0 0.0
    %765 = vmatpush1.msra.mxu0 0.0
    %766 = vmatprep.subr.mxu0 0.0
    %767 = vmatpush1.msra.mxu0 0.0
    %768 = vmatprep.subr.mxu0 0.0
    %769 = vmatpush1.msra.mxu0 0.0
    %770 = vmatprep.subr.mxu0 0.0
    %771 = vmatpush1.msra.mxu0 0.0
    %772 = vmatprep.subr.mxu0 0.0
    %773 = vmatpush1.msra.mxu0 0.0
    %774 = vmatprep.subr.mxu0 0.0
    %v775 = vand.u32 %v574, 4294901760
    %v776 = vsub.f32 %v574, %v775
    %777 = vmatpush1.msra.mxu0 %v776
    %778 = vmatprep.subr.mxu0 0.0
    %779 = vmatpush2.msra.mxu0 0.0
    %780 = vmatprep.subr.mxu0 0.0
    %781 = vmatpush2.msra.mxu0 0.0
    %782 = vmatprep.subr.mxu0 0.0
    %783 = vmatpush2.msra.mxu0 0.0
    %784 = vmatprep.subr.mxu0 0.0
    %785 = vmatpush2.msra.mxu0 0.0
    %786 = vmatprep.subr.mxu0 0.0
    %787 = vmatpush2.msra.mxu0 0.0
    %788 = vmatprep.subr.mxu0 0.0
    %789 = vmatpush2.msra.mxu0 0.0
    %790 = vmatprep.subr.mxu0 0.0
    %791 = vmatpush2.msra.mxu0 0.0
    %792 = vmatprep.subr.mxu0 0.0
    %793 = vmatpush2.msra.mxu0 0.0
    %794 = vmatprep.subr.mxu0 0.0
    %795 = vmatpush2.msra.mxu0 0.0
    %796 = vmatprep.subr.mxu0 0.0
    %797 = vmatpush2.msra.mxu0 0.0
    %798 = vmatprep.subr.mxu0 0.0
    %799 = vmatpush2.msra.mxu0 0.0
    %800 = vmatprep.subr.mxu0 0.0
    %801 = vmatpush2.msra.mxu0 0.0
    %802 = vmatprep.subr.mxu0 0.0
    %803 = vmatpush2.msra.mxu0 0.0
    %804 = vmatprep.subr.mxu0 0.0
    %805 = vmatpush2.msra.mxu0 0.0
    %806 = vmatprep.subr.mxu0 0.0
    %807 = vmatpush2.msra.mxu0 0.0
    %808 = vmatprep.subr.mxu0 0.0
    %809 = vmatpush2.msra.mxu0 0.0
    %810 = vmatprep.mubr.f32.mxu0 0.0
    %v811 = vand.u32 %v568, 4294901760
    %v812 = vsub.f32 %v568, %v811
    %813 = vmatmul.mubr.f32.gmra.mxu0 %v812
    %v814 = vpop.f32.mrf.mxu0
    %v815 = vadd.f32 %v735, %v814
    %v816 = vpop.f32.mrf.mxu0
    %817 = vmatprep.mubr.f32.mxu0 0.0
    %v818 = vand.u32 %v571, 4294901760
    %v819 = vsub.f32 %v571, %v818
    %820 = vmatmul.mubr.f32.gmra.mxu0 %v819
    %v821 = vpop.f32.mrf.mxu0
    %v822 = vadd.f32 %v741, %v821
    %v823 = vpop.f32.mrf.mxu0
    %824 = vdwg.mxu0
    %825 = vmatprep.subr.mxu0 0.0
    %826 = vmatpush1.msra.mxu0 0.0
    %827 = vmatprep.subr.mxu0 0.0
    %828 = vmatpush1.msra.mxu0 0.0
    %829 = vmatprep.subr.mxu0 0.0
    %830 = vmatpush1.msra.mxu0 0.0
    %831 = vmatprep.subr.mxu0 0.0
    %832 = vmatpush1.msra.mxu0 0.0
    %833 = vmatprep.subr.mxu0 0.0
    %834 = vmatpush1.msra.mxu0 0.0
    %835 = vmatprep.subr.mxu0 0.0
    %836 = vmatpush1.msra.mxu0 0.0
    %837 = vmatprep.subr.mxu0 0.0
    %838 = vmatpush1.msra.mxu0 0.0
    %839 = vmatprep.subr.mxu0 0.0
    %840 = vmatpush1.msra.mxu0 0.0
    %841 = vmatprep.subr.mxu0 0.0
    %842 = vmatpush1.msra.mxu0 0.0
    %843 = vmatprep.subr.mxu0 0.0
    %844 = vmatpush1.msra.mxu0 0.0
    %845 = vmatprep.subr.mxu0 0.0
    %846 = vmatpush1.msra.mxu0 0.0
    %847 = vmatprep.subr.mxu0 0.0
    %848 = vmatpush1.msra.mxu0 0.0
    %849 = vmatprep.subr.mxu0 0.0
    %850 = vmatpush1.msra.mxu0 0.0
    %851 = vmatprep.subr.mxu0 0.0
    %852 = vmatpush1.msra.mxu0 0.0
    %853 = vmatprep.subr.mxu0 0.0
    %854 = vmatpush1.msra.mxu0 0.0
    %855 = vmatprep.subr.mxu0 0.0
    %v856 = vand.u32 %v574, 4294901760
    %857 = vmatpush1.msra.mxu0 %v856
    %858 = vmatprep.subr.mxu0 0.0
    %859 = vmatpush2.msra.mxu0 0.0
    %860 = vmatprep.subr.mxu0 0.0
    %861 = vmatpush2.msra.mxu0 0.0
    %862 = vmatprep.subr.mxu0 0.0
    %863 = vmatpush2.msra.mxu0 0.0
    %864 = vmatprep.subr.mxu0 0.0
    %865 = vmatpush2.msra.mxu0 0.0
    %866 = vmatprep.subr.mxu0 0.0
    %867 = vmatpush2.msra.mxu0 0.0
    %868 = vmatprep.subr.mxu0 0.0
    %869 = vmatpush2.msra.mxu0 0.0
    %870 = vmatprep.subr.mxu0 0.0
    %871 = vmatpush2.msra.mxu0 0.0
    %872 = vmatprep.subr.mxu0 0.0
    %873 = vmatpush2.msra.mxu0 0.0
    %874 = vmatprep.subr.mxu0 0.0
    %875 = vmatpush2.msra.mxu0 0.0
    %876 = vmatprep.subr.mxu0 0.0
    %877 = vmatpush2.msra.mxu0 0.0
    %878 = vmatprep.subr.mxu0 0.0
    %879 = vmatpush2.msra.mxu0 0.0
    %880 = vmatprep.subr.mxu0 0.0
    %881 = vmatpush2.msra.mxu0 0.0
    %882 = vmatprep.subr.mxu0 0.0
    %883 = vmatpush2.msra.mxu0 0.0
    %884 = vmatprep.subr.mxu0 0.0
    %885 = vmatpush2.msra.mxu0 0.0
    %886 = vmatprep.subr.mxu0 0.0
    %887 = vmatpush2.msra.mxu0 0.0
    %888 = vmatprep.subr.mxu0 0.0
    %889 = vmatpush2.msra.mxu0 0.0
    %890 = vmatprep.mubr.f32.mxu0 0.0
    %v891 = vand.u32 %v568, 4294901760
    %v892 = vsub.f32 %v568, %v891
    %v893 = vand.u32 %v892, 4294901760
    %894 = vmatmul.mubr.f32.gmra.mxu0 %v893
    %v895 = vpop.f32.mrf.mxu0
    %v896 = vadd.f32 %v815, %v895
    %v897 = vpop.f32.mrf.mxu0
    %898 = vmatprep.mubr.f32.mxu0 0.0
    %v899 = vand.u32 %v571, 4294901760
    %v900 = vsub.f32 %v571, %v899
    %v901 = vand.u32 %v900, 4294901760
    %902 = vmatmul.mubr.f32.gmra.mxu0 %v901
    %v903 = vpop.f32.mrf.mxu0
    %v904 = vadd.f32 %v822, %v903
    %v905 = vpop.f32.mrf.mxu0
    %906 = vdwg.mxu0
    %907 = vmatprep.subr.mxu0 0.0
    %908 = vmatpush1.msra.mxu0 0.0
    %909 = vmatprep.subr.mxu0 0.0
    %910 = vmatpush1.msra.mxu0 0.0
    %911 = vmatprep.subr.mxu0 0.0
    %912 = vmatpush1.msra.mxu0 0.0
    %913 = vmatprep.subr.mxu0 0.0
    %914 = vmatpush1.msra.mxu0 0.0
    %915 = vmatprep.subr.mxu0 0.0
    %916 = vmatpush1.msra.mxu0 0.0
    %917 = vmatprep.subr.mxu0 0.0
    %918 = vmatpush1.msra.mxu0 0.0
    %919 = vmatprep.subr.mxu0 0.0
    %920 = vmatpush1.msra.mxu0 0.0
    %921 = vmatprep.subr.mxu0 0.0
    %922 = vmatpush1.msra.mxu0 0.0
    %923 = vmatprep.subr.mxu0 0.0
    %924 = vmatpush1.msra.mxu0 0.0
    %925 = vmatprep.subr.mxu0 0.0
    %926 = vmatpush1.msra.mxu0 0.0
    %927 = vmatprep.subr.mxu0 0.0
    %928 = vmatpush1.msra.mxu0 0.0
    %929 = vmatprep.subr.mxu0 0.0
    %930 = vmatpush1.msra.mxu0 0.0
    %931 = vmatprep.subr.mxu0 0.0
    %932 = vmatpush1.msra.mxu0 0.0
    %933 = vmatprep.subr.mxu0 0.0
    %934 = vmatpush1.msra.mxu0 0.0
    %935 = vmatprep.subr.mxu0 0.0
    %936 = vmatpush1.msra.mxu0 0.0
    %937 = vmatprep.subr.mxu0 0.0
    %v938 = vand.u32 %v574, 4294901760
    %v939 = vsub.f32 %v574, %v938
    %v940 = vand.u32 %v939, 4294901760
    %941 = vmatpush1.msra.mxu0 %v940
    %942 = vmatprep.subr.mxu0 0.0
    %943 = vmatpush2.msra.mxu0 0.0
    %944 = vmatprep.subr.mxu0 0.0
    %945 = vmatpush2.msra.mxu0 0.0
    %946 = vmatprep.subr.mxu0 0.0
    %947 = vmatpush2.msra.mxu0 0.0
    %948 = vmatprep.subr.mxu0 0.0
    %949 = vmatpush2.msra.mxu0 0.0
    %950 = vmatprep.subr.mxu0 0.0
    %951 = vmatpush2.msra.mxu0 0.0
    %952 = vmatprep.subr.mxu0 0.0
    %953 = vmatpush2.msra.mxu0 0.0
    %954 = vmatprep.subr.mxu0 0.0
    %955 = vmatpush2.msra.mxu0 0.0
    %956 = vmatprep.subr.mxu0 0.0
    %957 = vmatpush2.msra.mxu0 0.0
    %958 = vmatprep.subr.mxu0 0.0
    %959 = vmatpush2.msra.mxu0 0.0
    %960 = vmatprep.subr.mxu0 0.0
    %961 = vmatpush2.msra.mxu0 0.0
    %962 = vmatprep.subr.mxu0 0.0
    %963 = vmatpush2.msra.mxu0 0.0
    %964 = vmatprep.subr.mxu0 0.0
    %965 = vmatpush2.msra.mxu0 0.0
    %966 = vmatprep.subr.mxu0 0.0
    %967 = vmatpush2.msra.mxu0 0.0
    %968 = vmatprep.subr.mxu0 0.0
    %969 = vmatpush2.msra.mxu0 0.0
    %970 = vmatprep.subr.mxu0 0.0
    %971 = vmatpush2.msra.mxu0 0.0
    %972 = vmatprep.subr.mxu0 0.0
    %973 = vmatpush2.msra.mxu0 0.0
    %974 = vmatprep.mubr.f32.mxu0 0.0
    %v975 = vand.u32 %v568, 4294901760
    %976 = vmatmul.mubr.f32.gmra.mxu0 %v975
    %v977 = vpop.f32.mrf.mxu0
    %v978 = vadd.f32 %v896, %v977
    %v979 = vpop.f32.mrf.mxu0
    %980 = vmatprep.mubr.f32.mxu0 0.0
    %v981 = vand.u32 %v571, 4294901760
    %982 = vmatmul.mubr.f32.gmra.mxu0 %v981
    %v983 = vpop.f32.mrf.mxu0
    %v984 = vadd.f32 %v904, %v983
    %v985 = vpop.f32.mrf.mxu0
    %986 = vdwg.mxu0
    %987 = vmatprep.subr.mxu0 0.0
    %988 = vmatpush1.msra.mxu0 0.0
    %989 = vmatprep.subr.mxu0 0.0
    %990 = vmatpush1.msra.mxu0 0.0
    %991 = vmatprep.subr.mxu0 0.0
    %992 = vmatpush1.msra.mxu0 0.0
    %993 = vmatprep.subr.mxu0 0.0
    %994 = vmatpush1.msra.mxu0 0.0
    %995 = vmatprep.subr.mxu0 0.0
    %996 = vmatpush1.msra.mxu0 0.0
    %997 = vmatprep.subr.mxu0 0.0
    %998 = vmatpush1.msra.mxu0 0.0
    %999 = vmatprep.subr.mxu0 0.0
    %1000 = vmatpush1.msra.mxu0 0.0
    %1001 = vmatprep.subr.mxu0 0.0
    %1002 = vmatpush1.msra.mxu0 0.0
    %1003 = vmatprep.subr.mxu0 0.0
    %1004 = vmatpush1.msra.mxu0 0.0
    %1005 = vmatprep.subr.mxu0 0.0
    %1006 = vmatpush1.msra.mxu0 0.0
    %1007 = vmatprep.subr.mxu0 0.0
    %1008 = vmatpush1.msra.mxu0 0.0
    %1009 = vmatprep.subr.mxu0 0.0
    %1010 = vmatpush1.msra.mxu0 0.0
    %1011 = vmatprep.subr.mxu0 0.0
    %1012 = vmatpush1.msra.mxu0 0.0
    %1013 = vmatprep.subr.mxu0 0.0
    %1014 = vmatpush1.msra.mxu0 0.0
    %1015 = vmatprep.subr.mxu0 0.0
    %1016 = vmatpush1.msra.mxu0 0.0
    %1017 = vmatprep.subr.mxu0 0.0
    %v1018 = vand.u32 %v574, 4294901760
    %1019 = vmatpush1.msra.mxu0 %v1018
    %1020 = vmatprep.subr.mxu0 0.0
    %1021 = vmatpush2.msra.mxu0 0.0
    %1022 = vmatprep.subr.mxu0 0.0
    %1023 = vmatpush2.msra.mxu0 0.0
    %1024 = vmatprep.subr.mxu0 0.0
    %1025 = vmatpush2.msra.mxu0 0.0
    %1026 = vmatprep.subr.mxu0 0.0
    %1027 = vmatpush2.msra.mxu0 0.0
    %1028 = vmatprep.subr.mxu0 0.0
    %1029 = vmatpush2.msra.mxu0 0.0
    %1030 = vmatprep.subr.mxu0 0.0
    %1031 = vmatpush2.msra.mxu0 0.0
    %1032 = vmatprep.subr.mxu0 0.0
    %1033 = vmatpush2.msra.mxu0 0.0
    %1034 = vmatprep.subr.mxu0 0.0
    %1035 = vmatpush2.msra.mxu0 0.0
    %1036 = vmatprep.subr.mxu0 0.0
    %1037 = vmatpush2.msra.mxu0 0.0
    %1038 = vmatprep.subr.mxu0 0.0
    %1039 = vmatpush2.msra.mxu0 0.0
    %1040 = vmatprep.subr.mxu0 0.0
    %1041 = vmatpush2.msra.mxu0 0.0
    %1042 = vmatprep.subr.mxu0 0.0
    %1043 = vmatpush2.msra.mxu0 0.0
    %1044 = vmatprep.subr.mxu0 0.0
    %1045 = vmatpush2.msra.mxu0 0.0
    %1046 = vmatprep.subr.mxu0 0.0
    %1047 = vmatpush2.msra.mxu0 0.0
    %1048 = vmatprep.subr.mxu0 0.0
    %1049 = vmatpush2.msra.mxu0 0.0
    %1050 = vmatprep.subr.mxu0 0.0
    %1051 = vmatpush2.msra.mxu0 0.0
    %1052 = vmatprep.mubr.f32.mxu0 0.0
    %v1053 = vand.u32 %v568, 4294901760
    %1054 = vmatmul.mubr.f32.gmra.mxu0 %v1053
    %v1055 = vpop.f32.mrf.mxu0
    %v1056 = vadd.f32 %v978, %v1055
    %v1057 = vpop.f32.mrf.mxu0
    %1058 = vmatprep.mubr.f32.mxu0 0.0
    %v1059 = vand.u32 %v571, 4294901760
    %1060 = vmatmul.mubr.f32.gmra.mxu0 %v1059
    %v1061 = vpop.f32.mrf.mxu0
    %v1062 = vadd.f32 %v984, %v1061
    %v1063 = vpop.f32.mrf.mxu0
    %1064 = vdwg.mxu0
    %v1065 = vld [vmem:[%s4] sm:$0x1]
    %v1067 = vlaneseq
    %v1068 = vshrl.u32 %v1067, 7
    %v1069 = vsub.s32 0, %v1068
    %v1070 = vrot.slane %v1065, %v1069
    %v1072 = vadd.f32 %v1056, %v1070
    %v1073 = vadd.f32 %v1062, %v1070
    %v1074 = vmax.f32 %v1072, 0.0
    %v1075 = vmax.f32 %v1073, 0.0
    %v1076 = vld [vmem:[#allocation2] sm:$0xff]
    %v1077 = vld [vmem:[#allocation2 + $0x8] sm:$0xff]
    %v1078 = vld [vmem:[#allocation2 + $0x10] sm:$0xff]
    %v1079 = vld [vmem:[#allocation2 + $0x18] sm:$0xff]
    %v1080 = vld [vmem:[#allocation2 + $0x20] sm:$0xff]
    %v1081 = vld [vmem:[#allocation2 + $0x28] sm:$0xff]
    %v1082 = vld [vmem:[#allocation2 + $0x30] sm:$0xff]
    %v1083 = vld [vmem:[#allocation2 + $0x38] sm:$0xff]
    %v1084 = vld [vmem:[#allocation2 + $0x40] sm:$0xff]
    %v1085 = vld [vmem:[#allocation2 + $0x48] sm:$0xff]
    %v1086 = vld [vmem:[#allocation2 + $0x50] sm:$0xff]
    %v1087 = vld [vmem:[#allocation2 + $0x58] sm:$0xff]
    %v1088 = vld [vmem:[#allocation2 + $0x60] sm:$0xff]
    %v1089 = vld [vmem:[#allocation2 + $0x68] sm:$0xff]
    %v1090 = vld [vmem:[#allocation2 + $0x70] sm:$0xff]
    %v1091 = vld [vmem:[#allocation2 + $0x78] sm:$0xff]
    %v1092 = vld [vmem:[%s6] sm:$0x1]
    %v1094 = vlaneseq
    %v1095 = vshrl.u32 %v1094, 7
    %v1096 = vsub.s32 0, %v1095
    %v1097 = vrot.slane %v1092, %v1096
    %1099 = vmatprep.subr.mxu0 0.0
    %v1100 = vand.u32 %v1091, 4294901760
    %1101 = vmatpush1.msra.mxu0 %v1100
    %1102 = vmatprep.subr.mxu0 0.0
    %v1103 = vand.u32 %v1090, 4294901760
    %1104 = vmatpush1.msra.mxu0 %v1103
    %1105 = vmatprep.subr.mxu0 0.0
    %v1106 = vand.u32 %v1089, 4294901760
    %1107 = vmatpush1.msra.mxu0 %v1106
    %1108 = vmatprep.subr.mxu0 0.0
    %v1109 = vand.u32 %v1088, 4294901760
    %1110 = vmatpush1.msra.mxu0 %v1109
    %1111 = vmatprep.subr.mxu0 0.0
    %v1112 = vand.u32 %v1087, 4294901760
    %1113 = vmatpush1.msra.mxu0 %v1112
    %1114 = vmatprep.subr.mxu0 0.0
    %v1115 = vand.u32 %v1086, 4294901760
    %1116 = vmatpush1.msra.mxu0 %v1115
    %1117 = vmatprep.subr.mxu0 0.0
    %v1118 = vand.u32 %v1085, 4294901760
    %1119 = vmatpush1.msra.mxu0 %v1118
    %1120 = vmatprep.subr.mxu0 0.0
    %v1121 = vand.u32 %v1084, 4294901760
    %1122 = vmatpush1.msra.mxu0 %v1121
    %1123 = vmatprep.subr.mxu0 0.0
    %v1124 = vand.u32 %v1083, 4294901760
    %1125 = vmatpush1.msra.mxu0 %v1124
    %1126 = vmatprep.subr.mxu0 0.0
    %v1127 = vand.u32 %v1082, 4294901760
    %1128 = vmatpush1.msra.mxu0 %v1127
    %1129 = vmatprep.subr.mxu0 0.0
    %v1130 = vand.u32 %v1081, 4294901760
    %1131 = vmatpush1.msra.mxu0 %v1130
    %1132 = vmatprep.subr.mxu0 0.0
    %v1133 = vand.u32 %v1080, 4294901760
    %1134 = vmatpush1.msra.mxu0 %v1133
    %1135 = vmatprep.subr.mxu0 0.0
    %v1136 = vand.u32 %v1079, 4294901760
    %1137 = vmatpush1.msra.mxu0 %v1136
    %1138 = vmatprep.subr.mxu0 0.0
    %v1139 = vand.u32 %v1078, 4294901760
    %1140 = vmatpush1.msra.mxu0 %v1139
    %1141 = vmatprep.subr.mxu0 0.0
    %v1142 = vand.u32 %v1077, 4294901760
    %1143 = vmatpush1.msra.mxu0 %v1142
    %1144 = vmatprep.subr.mxu0 0.0
    %v1145 = vand.u32 %v1076, 4294901760
    %1146 = vmatpush1.msra.mxu0 %v1145
    %1147 = vmatprep.subr.mxu0 0.0
    %1148 = vmatpush2.msra.mxu0 0.0
    %1149 = vmatprep.subr.mxu0 0.0
    %1150 = vmatpush2.msra.mxu0 0.0
    %1151 = vmatprep.subr.mxu0 0.0
    %1152 = vmatpush2.msra.mxu0 0.0
    %1153 = vmatprep.subr.mxu0 0.0
    %1154 = vmatpush2.msra.mxu0 0.0
    %1155 = vmatprep.subr.mxu0 0.0
    %1156 = vmatpush2.msra.mxu0 0.0
    %1157 = vmatprep.subr.mxu0 0.0
    %1158 = vmatpush2.msra.mxu0 0.0
    %1159 = vmatprep.subr.mxu0 0.0
    %1160 = vmatpush2.msra.mxu0 0.0
    %1161 = vmatprep.subr.mxu0 0.0
    %1162 = vmatpush2.msra.mxu0 0.0
    %1163 = vmatprep.subr.mxu0 0.0
    %1164 = vmatpush2.msra.mxu0 0.0
    %1165 = vmatprep.subr.mxu0 0.0
    %1166 = vmatpush2.msra.mxu0 0.0
    %1167 = vmatprep.subr.mxu0 0.0
    %1168 = vmatpush2.msra.mxu0 0.0
    %1169 = vmatprep.subr.mxu0 0.0
    %1170 = vmatpush2.msra.mxu0 0.0
    %1171 = vmatprep.subr.mxu0 0.0
    %1172 = vmatpush2.msra.mxu0 0.0
    %1173 = vmatprep.subr.mxu0 0.0
    %1174 = vmatpush2.msra.mxu0 0.0
    %1175 = vmatprep.subr.mxu0 0.0
    %1176 = vmatpush2.msra.mxu0 0.0
    %1177 = vmatprep.subr.mxu0 0.0
    %1178 = vmatpush2.msra.mxu0 0.0
    %1179 = vmatprep.mubr.f32.mxu0 0.0
    %v1180 = vand.u32 %v1074, 4294901760
    %v1181 = vsub.f32 %v1074, %v1180
    %v1182 = vand.u32 %v1181, 4294901760
    %v1183 = vsub.f32 %v1181, %v1182
    %v1184 = vand.u32 %v1183, 4294901760
    %1185 = vmatmul.mubr.f32.gmra.mxu0 %v1184
    %v1186 = vpop.f32.mrf.mxu0
    %v1187 = vadd.f32 %v1097, %v1186
    %v1188 = vpop.f32.mrf.mxu0
    %1189 = vmatprep.mubr.f32.mxu0 0.0
    %v1190 = vand.u32 %v1075, 4294901760
    %v1191 = vsub.f32 %v1075, %v1190
    %v1192 = vand.u32 %v1191, 4294901760
    %v1193 = vsub.f32 %v1191, %v1192
    %v1194 = vand.u32 %v1193, 4294901760
    %1195 = vmatmul.mubr.f32.gmra.mxu0 %v1194
    %v1196 = vpop.f32.mrf.mxu0
    %v1197 = vadd.f32 %v1097, %v1196
    %v1198 = vpop.f32.mrf.mxu0
    %1199 = vdwg.mxu0
    %1200 = vmatprep.subr.mxu0 0.0
    %v1201 = vand.u32 %v1091, 4294901760
    %v1202 = vsub.f32 %v1091, %v1201
    %v1203 = vand.u32 %v1202, 4294901760
    %v1204 = vsub.f32 %v1202, %v1203
    %v1205 = vand.u32 %v1204, 4294901760
    %1206 = vmatpush1.msra.mxu0 %v1205
    %1207 = vmatprep.subr.mxu0 0.0
    %v1208 = vand.u32 %v1090, 4294901760
    %v1209 = vsub.f32 %v1090, %v1208
    %v1210 = vand.u32 %v1209, 4294901760
    %v1211 = vsub.f32 %v1209, %v1210
    %v1212 = vand.u32 %v1211, 4294901760
    %1213 = vmatpush1.msra.mxu0 %v1212
    %1214 = vmatprep.subr.mxu0 0.0
    %v1215 = vand.u32 %v1089, 4294901760
    %v1216 = vsub.f32 %v1089, %v1215
    %v1217 = vand.u32 %v1216, 4294901760
    %v1218 = vsub.f32 %v1216, %v1217
    %v1219 = vand.u32 %v1218, 4294901760
    %1220 = vmatpush1.msra.mxu0 %v1219
    %1221 = vmatprep.subr.mxu0 0.0
    %v1222 = vand.u32 %v1088, 4294901760
    %v1223 = vsub.f32 %v1088, %v1222
    %v1224 = vand.u32 %v1223, 4294901760
    %v1225 = vsub.f32 %v1223, %v1224
    %v1226 = vand.u32 %v1225, 4294901760
    %1227 = vmatpush1.msra.mxu0 %v1226
    %1228 = vmatprep.subr.mxu0 0.0
    %v1229 = vand.u32 %v1087, 4294901760
    %v1230 = vsub.f32 %v1087, %v1229
    %v1231 = vand.u32 %v1230, 4294901760
    %v1232 = vsub.f32 %v1230, %v1231
    %v1233 = vand.u32 %v1232, 4294901760
    %1234 = vmatpush1.msra.mxu0 %v1233
    %1235 = vmatprep.subr.mxu0 0.0
    %v1236 = vand.u32 %v1086, 4294901760
    %v1237 = vsub.f32 %v1086, %v1236
    %v1238 = vand.u32 %v1237, 4294901760
    %v1239 = vsub.f32 %v1237, %v1238
    %v1240 = vand.u32 %v1239, 4294901760
    %1241 = vmatpush1.msra.mxu0 %v1240
    %1242 = vmatprep.subr.mxu0 0.0
    %v1243 = vand.u32 %v1085, 4294901760
    %v1244 = vsub.f32 %v1085, %v1243
    %v1245 = vand.u32 %v1244, 4294901760
    %v1246 = vsub.f32 %v1244, %v1245
    %v1247 = vand.u32 %v1246, 4294901760
    %1248 = vmatpush1.msra.mxu0 %v1247
    %1249 = vmatprep.subr.mxu0 0.0
    %v1250 = vand.u32 %v1084, 4294901760
    %v1251 = vsub.f32 %v1084, %v1250
    %v1252 = vand.u32 %v1251, 4294901760
    %v1253 = vsub.f32 %v1251, %v1252
    %v1254 = vand.u32 %v1253, 4294901760
    %1255 = vmatpush1.msra.mxu0 %v1254
    %1256 = vmatprep.subr.mxu0 0.0
    %v1257 = vand.u32 %v1083, 4294901760
    %v1258 = vsub.f32 %v1083, %v1257
    %v1259 = vand.u32 %v1258, 4294901760
    %v1260 = vsub.f32 %v1258, %v1259
    %v1261 = vand.u32 %v1260, 4294901760
    %1262 = vmatpush1.msra.mxu0 %v1261
    %1263 = vmatprep.subr.mxu0 0.0
    %v1264 = vand.u32 %v1082, 4294901760
    %v1265 = vsub.f32 %v1082, %v1264
    %v1266 = vand.u32 %v1265, 4294901760
    %v1267 = vsub.f32 %v1265, %v1266
    %v1268 = vand.u32 %v1267, 4294901760
    %1269 = vmatpush1.msra.mxu0 %v1268
    %1270 = vmatprep.subr.mxu0 0.0
    %v1271 = vand.u32 %v1081, 4294901760
    %v1272 = vsub.f32 %v1081, %v1271
    %v1273 = vand.u32 %v1272, 4294901760
    %v1274 = vsub.f32 %v1272, %v1273
    %v1275 = vand.u32 %v1274, 4294901760
    %1276 = vmatpush1.msra.mxu0 %v1275
    %1277 = vmatprep.subr.mxu0 0.0
    %v1278 = vand.u32 %v1080, 4294901760
    %v1279 = vsub.f32 %v1080, %v1278
    %v1280 = vand.u32 %v1279, 4294901760
    %v1281 = vsub.f32 %v1279, %v1280
    %v1282 = vand.u32 %v1281, 4294901760
    %1283 = vmatpush1.msra.mxu0 %v1282
    %1284 = vmatprep.subr.mxu0 0.0
    %v1285 = vand.u32 %v1079, 4294901760
    %v1286 = vsub.f32 %v1079, %v1285
    %v1287 = vand.u32 %v1286, 4294901760
    %v1288 = vsub.f32 %v1286, %v1287
    %v1289 = vand.u32 %v1288, 4294901760
    %1290 = vmatpush1.msra.mxu0 %v1289
    %1291 = vmatprep.subr.mxu0 0.0
    %v1292 = vand.u32 %v1078, 4294901760
    %v1293 = vsub.f32 %v1078, %v1292
    %v1294 = vand.u32 %v1293, 4294901760
    %v1295 = vsub.f32 %v1293, %v1294
    %v1296 = vand.u32 %v1295, 4294901760
    %1297 = vmatpush1.msra.mxu0 %v1296
    %1298 = vmatprep.subr.mxu0 0.0
    %v1299 = vand.u32 %v1077, 4294901760
    %v1300 = vsub.f32 %v1077, %v1299
    %v1301 = vand.u32 %v1300, 4294901760
    %v1302 = vsub.f32 %v1300, %v1301
    %v1303 = vand.u32 %v1302, 4294901760
    %1304 = vmatpush1.msra.mxu0 %v1303
    %1305 = vmatprep.subr.mxu0 0.0
    %v1306 = vand.u32 %v1076, 4294901760
    %v1307 = vsub.f32 %v1076, %v1306
    %v1308 = vand.u32 %v1307, 4294901760
    %v1309 = vsub.f32 %v1307, %v1308
    %v1310 = vand.u32 %v1309, 4294901760
    %1311 = vmatpush1.msra.mxu0 %v1310
    %1312 = vmatprep.subr.mxu0 0.0
    %1313 = vmatpush2.msra.mxu0 0.0
    %1314 = vmatprep.subr.mxu0 0.0
    %1315 = vmatpush2.msra.mxu0 0.0
    %1316 = vmatprep.subr.mxu0 0.0
    %1317 = vmatpush2.msra.mxu0 0.0
    %1318 = vmatprep.subr.mxu0 0.0
    %1319 = vmatpush2.msra.mxu0 0.0
    %1320 = vmatprep.subr.mxu0 0.0
    %1321 = vmatpush2.msra.mxu0 0.0
    %1322 = vmatprep.subr.mxu0 0.0
    %1323 = vmatpush2.msra.mxu0 0.0
    %1324 = vmatprep.subr.mxu0 0.0
    %1325 = vmatpush2.msra.mxu0 0.0
    %1326 = vmatprep.subr.mxu0 0.0
    %1327 = vmatpush2.msra.mxu0 0.0
    %1328 = vmatprep.subr.mxu0 0.0
    %1329 = vmatpush2.msra.mxu0 0.0
    %1330 = vmatprep.subr.mxu0 0.0
    %1331 = vmatpush2.msra.mxu0 0.0
    %1332 = vmatprep.subr.mxu0 0.0
    %1333 = vmatpush2.msra.mxu0 0.0
    %1334 = vmatprep.subr.mxu0 0.0
    %1335 = vmatpush2.msra.mxu0 0.0
    %1336 = vmatprep.subr.mxu0 0.0
    %1337 = vmatpush2.msra.mxu0 0.0
    %1338 = vmatprep.subr.mxu0 0.0
    %1339 = vmatpush2.msra.mxu0 0.0
    %1340 = vmatprep.subr.mxu0 0.0
    %1341 = vmatpush2.msra.mxu0 0.0
    %1342 = vmatprep.subr.mxu0 0.0
    %1343 = vmatpush2.msra.mxu0 0.0
    %1344 = vmatprep.mubr.f32.mxu0 0.0
    %v1345 = vand.u32 %v1074, 4294901760
    %1346 = vmatmul.mubr.f32.gmra.mxu0 %v1345
    %v1347 = vpop.f32.mrf.mxu0
    %v1348 = vadd.f32 %v1187, %v1347
    %v1349 = vpop.f32.mrf.mxu0
    %1350 = vmatprep.mubr.f32.mxu0 0.0
    %v1351 = vand.u32 %v1075, 4294901760
    %1352 = vmatmul.mubr.f32.gmra.mxu0 %v1351
    %v1353 = vpop.f32.mrf.mxu0
    %v1354 = vadd.f32 %v1197, %v1353
    %v1355 = vpop.f32.mrf.mxu0
    %1356 = vdwg.mxu0
    %1357 = vmatprep.subr.mxu0 0.0
    %v1358 = vand.u32 %v1091, 4294901760
    %v1359 = vsub.f32 %v1091, %v1358
    %1360 = vmatpush1.msra.mxu0 %v1359
    %1361 = vmatprep.subr.mxu0 0.0
    %v1362 = vand.u32 %v1090, 4294901760
    %v1363 = vsub.f32 %v1090, %v1362
    %1364 = vmatpush1.msra.mxu0 %v1363
    %1365 = vmatprep.subr.mxu0 0.0
    %v1366 = vand.u32 %v1089, 4294901760
    %v1367 = vsub.f32 %v1089, %v1366
    %1368 = vmatpush1.msra.mxu0 %v1367
    %1369 = vmatprep.subr.mxu0 0.0
    %v1370 = vand.u32 %v1088, 4294901760
    %v1371 = vsub.f32 %v1088, %v1370
    %1372 = vmatpush1.msra.mxu0 %v1371
    %1373 = vmatprep.subr.mxu0 0.0
    %v1374 = vand.u32 %v1087, 4294901760
    %v1375 = vsub.f32 %v1087, %v1374
    %1376 = vmatpush1.msra.mxu0 %v1375
    %1377 = vmatprep.subr.mxu0 0.0
    %v1378 = vand.u32 %v1086, 4294901760
    %v1379 = vsub.f32 %v1086, %v1378
    %1380 = vmatpush1.msra.mxu0 %v1379
    %1381 = vmatprep.subr.mxu0 0.0
    %v1382 = vand.u32 %v1085, 4294901760
    %v1383 = vsub.f32 %v1085, %v1382
    %1384 = vmatpush1.msra.mxu0 %v1383
    %1385 = vmatprep.subr.mxu0 0.0
    %v1386 = vand.u32 %v1084, 4294901760
    %v1387 = vsub.f32 %v1084, %v1386
    %1388 = vmatpush1.msra.mxu0 %v1387
    %1389 = vmatprep.subr.mxu0 0.0
    %v1390 = vand.u32 %v1083, 4294901760
    %v1391 = vsub.f32 %v1083, %v1390
    %1392 = vmatpush1.msra.mxu0 %v1391
    %1393 = vmatprep.subr.mxu0 0.0
    %v1394 = vand.u32 %v1082, 4294901760
    %v1395 = vsub.f32 %v1082, %v1394
    %1396 = vmatpush1.msra.mxu0 %v1395
    %1397 = vmatprep.subr.mxu0 0.0
    %v1398 = vand.u32 %v1081, 4294901760
    %v1399 = vsub.f32 %v1081, %v1398
    %1400 = vmatpush1.msra.mxu0 %v1399
    %1401 = vmatprep.subr.mxu0 0.0
    %v1402 = vand.u32 %v1080, 4294901760
    %v1403 = vsub.f32 %v1080, %v1402
    %1404 = vmatpush1.msra.mxu0 %v1403
    %1405 = vmatprep.subr.mxu0 0.0
    %v1406 = vand.u32 %v1079, 4294901760
    %v1407 = vsub.f32 %v1079, %v1406
    %1408 = vmatpush1.msra.mxu0 %v1407
    %1409 = vmatprep.subr.mxu0 0.0
    %v1410 = vand.u32 %v1078, 4294901760
    %v1411 = vsub.f32 %v1078, %v1410
    %1412 = vmatpush1.msra.mxu0 %v1411
    %1413 = vmatprep.subr.mxu0 0.0
    %v1414 = vand.u32 %v1077, 4294901760
    %v1415 = vsub.f32 %v1077, %v1414
    %1416 = vmatpush1.msra.mxu0 %v1415
    %1417 = vmatprep.subr.mxu0 0.0
    %v1418 = vand.u32 %v1076, 4294901760
    %v1419 = vsub.f32 %v1076, %v1418
    %1420 = vmatpush1.msra.mxu0 %v1419
    %1421 = vmatprep.subr.mxu0 0.0
    %1422 = vmatpush2.msra.mxu0 0.0
    %1423 = vmatprep.subr.mxu0 0.0
    %1424 = vmatpush2.msra.mxu0 0.0
    %1425 = vmatprep.subr.mxu0 0.0
    %1426 = vmatpush2.msra.mxu0 0.0
    %1427 = vmatprep.subr.mxu0 0.0
    %1428 = vmatpush2.msra.mxu0 0.0
    %1429 = vmatprep.subr.mxu0 0.0
    %1430 = vmatpush2.msra.mxu0 0.0
    %1431 = vmatprep.subr.mxu0 0.0
    %1432 = vmatpush2.msra.mxu0 0.0
    %1433 = vmatprep.subr.mxu0 0.0
    %1434 = vmatpush2.msra.mxu0 0.0
    %1435 = vmatprep.subr.mxu0 0.0
    %1436 = vmatpush2.msra.mxu0 0.0
    %1437 = vmatprep.subr.mxu0 0.0
    %1438 = vmatpush2.msra.mxu0 0.0
    %1439 = vmatprep.subr.mxu0 0.0
    %1440 = vmatpush2.msra.mxu0 0.0
    %1441 = vmatprep.subr.mxu0 0.0
    %1442 = vmatpush2.msra.mxu0 0.0
    %1443 = vmatprep.subr.mxu0 0.0
    %1444 = vmatpush2.msra.mxu0 0.0
    %1445 = vmatprep.subr.mxu0 0.0
    %1446 = vmatpush2.msra.mxu0 0.0
    %1447 = vmatprep.subr.mxu0 0.0
    %1448 = vmatpush2.msra.mxu0 0.0
    %1449 = vmatprep.subr.mxu0 0.0
    %1450 = vmatpush2.msra.mxu0 0.0
    %1451 = vmatprep.subr.mxu0 0.0
    %1452 = vmatpush2.msra.mxu0 0.0
    %1453 = vmatprep.mubr.f32.mxu0 0.0
    %v1454 = vand.u32 %v1074, 4294901760
    %v1455 = vsub.f32 %v1074, %v1454
    %1456 = vmatmul.mubr.f32.gmra.mxu0 %v1455
    %v1457 = vpop.f32.mrf.mxu0
    %v1458 = vadd.f32 %v1348, %v1457
    %v1459 = vpop.f32.mrf.mxu0
    %1460 = vmatprep.mubr.f32.mxu0 0.0
    %v1461 = vand.u32 %v1075, 4294901760
    %v1462 = vsub.f32 %v1075, %v1461
    %1463 = vmatmul.mubr.f32.gmra.mxu0 %v1462
    %v1464 = vpop.f32.mrf.mxu0
    %v1465 = vadd.f32 %v1354, %v1464
    %v1466 = vpop.f32.mrf.mxu0
    %1467 = vdwg.mxu0
    %1468 = vmatprep.subr.mxu0 0.0
    %v1469 = vand.u32 %v1091, 4294901760
    %1470 = vmatpush1.msra.mxu0 %v1469
    %1471 = vmatprep.subr.mxu0 0.0
    %v1472 = vand.u32 %v1090, 4294901760
    %1473 = vmatpush1.msra.mxu0 %v1472
    %1474 = vmatprep.subr.mxu0 0.0
    %v1475 = vand.u32 %v1089, 4294901760
    %1476 = vmatpush1.msra.mxu0 %v1475
    %1477 = vmatprep.subr.mxu0 0.0
    %v1478 = vand.u32 %v1088, 4294901760
    %1479 = vmatpush1.msra.mxu0 %v1478
    %1480 = vmatprep.subr.mxu0 0.0
    %v1481 = vand.u32 %v1087, 4294901760
    %1482 = vmatpush1.msra.mxu0 %v1481
    %1483 = vmatprep.subr.mxu0 0.0
    %v1484 = vand.u32 %v1086, 4294901760
    %1485 = vmatpush1.msra.mxu0 %v1484
    %1486 = vmatprep.subr.mxu0 0.0
    %v1487 = vand.u32 %v1085, 4294901760
    %1488 = vmatpush1.msra.mxu0 %v1487
    %1489 = vmatprep.subr.mxu0 0.0
    %v1490 = vand.u32 %v1084, 4294901760
    %1491 = vmatpush1.msra.mxu0 %v1490
    %1492 = vmatprep.subr.mxu0 0.0
    %v1493 = vand.u32 %v1083, 4294901760
    %1494 = vmatpush1.msra.mxu0 %v1493
    %1495 = vmatprep.subr.mxu0 0.0
    %v1496 = vand.u32 %v1082, 4294901760
    %1497 = vmatpush1.msra.mxu0 %v1496
    %1498 = vmatprep.subr.mxu0 0.0
    %v1499 = vand.u32 %v1081, 4294901760
    %1500 = vmatpush1.msra.mxu0 %v1499
    %1501 = vmatprep.subr.mxu0 0.0
    %v1502 = vand.u32 %v1080, 4294901760
    %1503 = vmatpush1.msra.mxu0 %v1502
    %1504 = vmatprep.subr.mxu0 0.0
    %v1505 = vand.u32 %v1079, 4294901760
    %1506 = vmatpush1.msra.mxu0 %v1505
    %1507 = vmatprep.subr.mxu0 0.0
    %v1508 = vand.u32 %v1078, 4294901760
    %1509 = vmatpush1.msra.mxu0 %v1508
    %1510 = vmatprep.subr.mxu0 0.0
    %v1511 = vand.u32 %v1077, 4294901760
    %1512 = vmatpush1.msra.mxu0 %v1511
    %1513 = vmatprep.subr.mxu0 0.0
    %v1514 = vand.u32 %v1076, 4294901760
    %1515 = vmatpush1.msra.mxu0 %v1514
    %1516 = vmatprep.subr.mxu0 0.0
    %1517 = vmatpush2.msra.mxu0 0.0
    %1518 = vmatprep.subr.mxu0 0.0
    %1519 = vmatpush2.msra.mxu0 0.0
    %1520 = vmatprep.subr.mxu0 0.0
    %1521 = vmatpush2.msra.mxu0 0.0
    %1522 = vmatprep.subr.mxu0 0.0
    %1523 = vmatpush2.msra.mxu0 0.0
    %1524 = vmatprep.subr.mxu0 0.0
    %1525 = vmatpush2.msra.mxu0 0.0
    %1526 = vmatprep.subr.mxu0 0.0
    %1527 = vmatpush2.msra.mxu0 0.0
    %1528 = vmatprep.subr.mxu0 0.0
    %1529 = vmatpush2.msra.mxu0 0.0
    %1530 = vmatprep.subr.mxu0 0.0
    %1531 = vmatpush2.msra.mxu0 0.0
    %1532 = vmatprep.subr.mxu0 0.0
    %1533 = vmatpush2.msra.mxu0 0.0
    %1534 = vmatprep.subr.mxu0 0.0
    %1535 = vmatpush2.msra.mxu0 0.0
    %1536 = vmatprep.subr.mxu0 0.0
    %1537 = vmatpush2.msra.mxu0 0.0
    %1538 = vmatprep.subr.mxu0 0.0
    %1539 = vmatpush2.msra.mxu0 0.0
    %1540 = vmatprep.subr.mxu0 0.0
    %1541 = vmatpush2.msra.mxu0 0.0
    %1542 = vmatprep.subr.mxu0 0.0
    %1543 = vmatpush2.msra.mxu0 0.0
    %1544 = vmatprep.subr.mxu0 0.0
    %1545 = vmatpush2.msra.mxu0 0.0
    %1546 = vmatprep.subr.mxu0 0.0
    %1547 = vmatpush2.msra.mxu0 0.0
    %1548 = vmatprep.mubr.f32.mxu0 0.0
    %v1549 = vand.u32 %v1074, 4294901760
    %v1550 = vsub.f32 %v1074, %v1549
    %v1551 = vand.u32 %v1550, 4294901760
    %1552 = vmatmul.mubr.f32.gmra.mxu0 %v1551
    %v1553 = vpop.f32.mrf.mxu0
    %v1554 = vadd.f32 %v1458, %v1553
    %v1555 = vpop.f32.mrf.mxu0
    %1556 = vmatprep.mubr.f32.mxu0 0.0
    %v1557 = vand.u32 %v1075, 4294901760
    %v1558 = vsub.f32 %v1075, %v1557
    %v1559 = vand.u32 %v1558, 4294901760
    %1560 = vmatmul.mubr.f32.gmra.mxu0 %v1559
    %v1561 = vpop.f32.mrf.mxu0
    %v1562 = vadd.f32 %v1465, %v1561
    %v1563 = vpop.f32.mrf.mxu0
    %1564 = vdwg.mxu0
    %1565 = vmatprep.subr.mxu0 0.0
    %v1566 = vand.u32 %v1091, 4294901760
    %v1567 = vsub.f32 %v1091, %v1566
    %v1568 = vand.u32 %v1567, 4294901760
    %1569 = vmatpush1.msra.mxu0 %v1568
    %1570 = vmatprep.subr.mxu0 0.0
    %v1571 = vand.u32 %v1090, 4294901760
    %v1572 = vsub.f32 %v1090, %v1571
    %v1573 = vand.u32 %v1572, 4294901760
    %1574 = vmatpush1.msra.mxu0 %v1573
    %1575 = vmatprep.subr.mxu0 0.0
    %v1576 = vand.u32 %v1089, 4294901760
    %v1577 = vsub.f32 %v1089, %v1576
    %v1578 = vand.u32 %v1577, 4294901760
    %1579 = vmatpush1.msra.mxu0 %v1578
    %1580 = vmatprep.subr.mxu0 0.0
    %v1581 = vand.u32 %v1088, 4294901760
    %v1582 = vsub.f32 %v1088, %v1581
    %v1583 = vand.u32 %v1582, 4294901760
    %1584 = vmatpush1.msra.mxu0 %v1583
    %1585 = vmatprep.subr.mxu0 0.0
    %v1586 = vand.u32 %v1087, 4294901760
    %v1587 = vsub.f32 %v1087, %v1586
    %v1588 = vand.u32 %v1587, 4294901760
    %1589 = vmatpush1.msra.mxu0 %v1588
    %1590 = vmatprep.subr.mxu0 0.0
    %v1591 = vand.u32 %v1086, 4294901760
    %v1592 = vsub.f32 %v1086, %v1591
    %v1593 = vand.u32 %v1592, 4294901760
    %1594 = vmatpush1.msra.mxu0 %v1593
    %1595 = vmatprep.subr.mxu0 0.0
    %v1596 = vand.u32 %v1085, 4294901760
    %v1597 = vsub.f32 %v1085, %v1596
    %v1598 = vand.u32 %v1597, 4294901760
    %1599 = vmatpush1.msra.mxu0 %v1598
    %1600 = vmatprep.subr.mxu0 0.0
    %v1601 = vand.u32 %v1084, 4294901760
    %v1602 = vsub.f32 %v1084, %v1601
    %v1603 = vand.u32 %v1602, 4294901760
    %1604 = vmatpush1.msra.mxu0 %v1603
    %1605 = vmatprep.subr.mxu0 0.0
    %v1606 = vand.u32 %v1083, 4294901760
    %v1607 = vsub.f32 %v1083, %v1606
    %v1608 = vand.u32 %v1607, 4294901760
    %1609 = vmatpush1.msra.mxu0 %v1608
    %1610 = vmatprep.subr.mxu0 0.0
    %v1611 = vand.u32 %v1082, 4294901760
    %v1612 = vsub.f32 %v1082, %v1611
    %v1613 = vand.u32 %v1612, 4294901760
    %1614 = vmatpush1.msra.mxu0 %v1613
    %1615 = vmatprep.subr.mxu0 0.0
    %v1616 = vand.u32 %v1081, 4294901760
    %v1617 = vsub.f32 %v1081, %v1616
    %v1618 = vand.u32 %v1617, 4294901760
    %1619 = vmatpush1.msra.mxu0 %v1618
    %1620 = vmatprep.subr.mxu0 0.0
    %v1621 = vand.u32 %v1080, 4294901760
    %v1622 = vsub.f32 %v1080, %v1621
    %v1623 = vand.u32 %v1622, 4294901760
    %1624 = vmatpush1.msra.mxu0 %v1623
    %1625 = vmatprep.subr.mxu0 0.0
    %v1626 = vand.u32 %v1079, 4294901760
    %v1627 = vsub.f32 %v1079, %v1626
    %v1628 = vand.u32 %v1627, 4294901760
    %1629 = vmatpush1.msra.mxu0 %v1628
    %1630 = vmatprep.subr.mxu0 0.0
    %v1631 = vand.u32 %v1078, 4294901760
    %v1632 = vsub.f32 %v1078, %v1631
    %v1633 = vand.u32 %v1632, 4294901760
    %1634 = vmatpush1.msra.mxu0 %v1633
    %1635 = vmatprep.subr.mxu0 0.0
    %v1636 = vand.u32 %v1077, 4294901760
    %v1637 = vsub.f32 %v1077, %v1636
    %v1638 = vand.u32 %v1637, 4294901760
    %1639 = vmatpush1.msra.mxu0 %v1638
    %1640 = vmatprep.subr.mxu0 0.0
    %v1641 = vand.u32 %v1076, 4294901760
    %v1642 = vsub.f32 %v1076, %v1641
    %v1643 = vand.u32 %v1642, 4294901760
    %1644 = vmatpush1.msra.mxu0 %v1643
    %1645 = vmatprep.subr.mxu0 0.0
    %1646 = vmatpush2.msra.mxu0 0.0
    %1647 = vmatprep.subr.mxu0 0.0
    %1648 = vmatpush2.msra.mxu0 0.0
    %1649 = vmatprep.subr.mxu0 0.0
    %1650 = vmatpush2.msra.mxu0 0.0
    %1651 = vmatprep.subr.mxu0 0.0
    %1652 = vmatpush2.msra.mxu0 0.0
    %1653 = vmatprep.subr.mxu0 0.0
    %1654 = vmatpush2.msra.mxu0 0.0
    %1655 = vmatprep.subr.mxu0 0.0
    %1656 = vmatpush2.msra.mxu0 0.0
    %1657 = vmatprep.subr.mxu0 0.0
    %1658 = vmatpush2.msra.mxu0 0.0
    %1659 = vmatprep.subr.mxu0 0.0
    %1660 = vmatpush2.msra.mxu0 0.0
    %1661 = vmatprep.subr.mxu0 0.0
    %1662 = vmatpush2.msra.mxu0 0.0
    %1663 = vmatprep.subr.mxu0 0.0
    %1664 = vmatpush2.msra.mxu0 0.0
    %1665 = vmatprep.subr.mxu0 0.0
    %1666 = vmatpush2.msra.mxu0 0.0
    %1667 = vmatprep.subr.mxu0 0.0
    %1668 = vmatpush2.msra.mxu0 0.0
    %1669 = vmatprep.subr.mxu0 0.0
    %1670 = vmatpush2.msra.mxu0 0.0
    %1671 = vmatprep.subr.mxu0 0.0
    %1672 = vmatpush2.msra.mxu0 0.0
    %1673 = vmatprep.subr.mxu0 0.0
    %1674 = vmatpush2.msra.mxu0 0.0
    %1675 = vmatprep.subr.mxu0 0.0
    %1676 = vmatpush2.msra.mxu0 0.0
    %1677 = vmatprep.mubr.f32.mxu0 0.0
    %v1678 = vand.u32 %v1074, 4294901760
    %1679 = vmatmul.mubr.f32.gmra.mxu0 %v1678
    %v1680 = vpop.f32.mrf.mxu0
    %v1681 = vadd.f32 %v1554, %v1680
    %v1682 = vpop.f32.mrf.mxu0
    %1683 = vmatprep.mubr.f32.mxu0 0.0
    %v1684 = vand.u32 %v1075, 4294901760
    %1685 = vmatmul.mubr.f32.gmra.mxu0 %v1684
    %v1686 = vpop.f32.mrf.mxu0
    %v1687 = vadd.f32 %v1562, %v1686
    %v1688 = vpop.f32.mrf.mxu0
    %1689 = vdwg.mxu0
    %1690 = vmatprep.subr.mxu0 0.0
    %v1691 = vand.u32 %v1091, 4294901760
    %1692 = vmatpush1.msra.mxu0 %v1691
    %1693 = vmatprep.subr.mxu0 0.0
    %v1694 = vand.u32 %v1090, 4294901760
    %1695 = vmatpush1.msra.mxu0 %v1694
    %1696 = vmatprep.subr.mxu0 0.0
    %v1697 = vand.u32 %v1089, 4294901760
    %1698 = vmatpush1.msra.mxu0 %v1697
    %1699 = vmatprep.subr.mxu0 0.0
    %v1700 = vand.u32 %v1088, 4294901760
    %1701 = vmatpush1.msra.mxu0 %v1700
    %1702 = vmatprep.subr.mxu0 0.0
    %v1703 = vand.u32 %v1087, 4294901760
    %1704 = vmatpush1.msra.mxu0 %v1703
    %1705 = vmatprep.subr.mxu0 0.0
    %v1706 = vand.u32 %v1086, 4294901760
    %1707 = vmatpush1.msra.mxu0 %v1706
    %1708 = vmatprep.subr.mxu0 0.0
    %v1709 = vand.u32 %v1085, 4294901760
    %1710 = vmatpush1.msra.mxu0 %v1709
    %1711 = vmatprep.subr.mxu0 0.0
    %v1712 = vand.u32 %v1084, 4294901760
    %1713 = vmatpush1.msra.mxu0 %v1712
    %1714 = vmatprep.subr.mxu0 0.0
    %v1715 = vand.u32 %v1083, 4294901760
    %1716 = vmatpush1.msra.mxu0 %v1715
    %1717 = vmatprep.subr.mxu0 0.0
    %v1718 = vand.u32 %v1082, 4294901760
    %1719 = vmatpush1.msra.mxu0 %v1718
    %1720 = vmatprep.subr.mxu0 0.0
    %v1721 = vand.u32 %v1081, 4294901760
    %1722 = vmatpush1.msra.mxu0 %v1721
    %1723 = vmatprep.subr.mxu0 0.0
    %v1724 = vand.u32 %v1080, 4294901760
    %1725 = vmatpush1.msra.mxu0 %v1724
    %1726 = vmatprep.subr.mxu0 0.0
    %v1727 = vand.u32 %v1079, 4294901760
    %1728 = vmatpush1.msra.mxu0 %v1727
    %1729 = vmatprep.subr.mxu0 0.0
    %v1730 = vand.u32 %v1078, 4294901760
    %1731 = vmatpush1.msra.mxu0 %v1730
    %1732 = vmatprep.subr.mxu0 0.0
    %v1733 = vand.u32 %v1077, 4294901760
    %1734 = vmatpush1.msra.mxu0 %v1733
    %1735 = vmatprep.subr.mxu0 0.0
    %v1736 = vand.u32 %v1076, 4294901760
    %1737 = vmatpush1.msra.mxu0 %v1736
    %1738 = vmatprep.subr.mxu0 0.0
    %1739 = vmatpush2.msra.mxu0 0.0
    %1740 = vmatprep.subr.mxu0 0.0
    %1741 = vmatpush2.msra.mxu0 0.0
    %1742 = vmatprep.subr.mxu0 0.0
    %1743 = vmatpush2.msra.mxu0 0.0
    %1744 = vmatprep.subr.mxu0 0.0
    %1745 = vmatpush2.msra.mxu0 0.0
    %1746 = vmatprep.subr.mxu0 0.0
    %1747 = vmatpush2.msra.mxu0 0.0
    %1748 = vmatprep.subr.mxu0 0.0
    %1749 = vmatpush2.msra.mxu0 0.0
    %1750 = vmatprep.subr.mxu0 0.0
    %1751 = vmatpush2.msra.mxu0 0.0
    %1752 = vmatprep.subr.mxu0 0.0
    %1753 = vmatpush2.msra.mxu0 0.0
    %1754 = vmatprep.subr.mxu0 0.0
    %1755 = vmatpush2.msra.mxu0 0.0
    %1756 = vmatprep.subr.mxu0 0.0
    %1757 = vmatpush2.msra.mxu0 0.0
    %1758 = vmatprep.subr.mxu0 0.0
    %1759 = vmatpush2.msra.mxu0 0.0
    %1760 = vmatprep.subr.mxu0 0.0
    %1761 = vmatpush2.msra.mxu0 0.0
    %1762 = vmatprep.subr.mxu0 0.0
    %1763 = vmatpush2.msra.mxu0 0.0
    %1764 = vmatprep.subr.mxu0 0.0
    %1765 = vmatpush2.msra.mxu0 0.0
    %1766 = vmatprep.subr.mxu0 0.0
    %1767 = vmatpush2.msra.mxu0 0.0
    %1768 = vmatprep.subr.mxu0 0.0
    %1769 = vmatpush2.msra.mxu0 0.0
    %1770 = vmatprep.mubr.f32.mxu0 0.0
    %v1771 = vand.u32 %v1074, 4294901760
    %1772 = vmatmul.mubr.f32.gmra.mxu0 %v1771
    %v1773 = vpop.f32.mrf.mxu0
    %v1774 = vadd.f32 %v1681, %v1773
    %v1775 = vpop.f32.mrf.mxu0
    %1776 = vmatprep.mubr.f32.mxu0 0.0
    %v1777 = vand.u32 %v1075, 4294901760
    %1778 = vmatmul.mubr.f32.gmra.mxu0 %v1777
    %v1779 = vpop.f32.mrf.mxu0
    %v1780 = vadd.f32 %v1687, %v1779
    %v1781 = vpop.f32.mrf.mxu0
    %1782 = vdwg.mxu0
    %v1783 = vmax.f32 %v1774, 0.0
    %v1784 = vmax.f32 %v1780, 0.0
    %v1785 = vld [vmem:[#allocation5] sm:$0xff]
    %v1786 = vld [vmem:[#allocation5 + $0x8] sm:$0xff]
    %v1787 = vld [vmem:[#allocation5 + $0x10] sm:$0xff]
    %v1788 = vld [vmem:[#allocation5 + $0x18] sm:$0xff]
    %v1789 = vld [vmem:[#allocation5 + $0x20] sm:$0xff]
    %v1790 = vld [vmem:[#allocation5 + $0x28] sm:$0xff]
    %v1791 = vld [vmem:[#allocation5 + $0x30] sm:$0xff]
    %v1792 = vld [vmem:[#allocation5 + $0x38] sm:$0xff]
    %v1793 = vld [vmem:[#allocation5 + $0x40] sm:$0xff]
    %v1794 = vld [vmem:[#allocation5 + $0x48] sm:$0xff]
    %v1795 = vld [vmem:[#allocation5 + $0x50] sm:$0xff]
    %v1796 = vld [vmem:[#allocation5 + $0x58] sm:$0xff]
    %v1797 = vld [vmem:[#allocation5 + $0x60] sm:$0xff]
    %v1798 = vld [vmem:[#allocation5 + $0x68] sm:$0xff]
    %v1799 = vld [vmem:[#allocation5 + $0x70] sm:$0xff]
    %v1800 = vld [vmem:[#allocation5 + $0x78] sm:$0xff]
    %v1801 = vld [vmem:[%s8] sm:$0x1]
    %v1803 = vlaneseq
    %v1804 = vshrl.u32 %v1803, 7
    %v1805 = vsub.s32 0, %v1804
    %v1806 = vrot.slane %v1801, %v1805
    %1808 = vmatprep.subr.mxu0 0.0
    %v1809 = vand.u32 %v1800, 4294901760
    %1810 = vmatpush1.msra.mxu0 %v1809
    %1811 = vmatprep.subr.mxu0 0.0
    %v1812 = vand.u32 %v1799, 4294901760
    %1813 = vmatpush1.msra.mxu0 %v1812
    %1814 = vmatprep.subr.mxu0 0.0
    %v1815 = vand.u32 %v1798, 4294901760
    %1816 = vmatpush1.msra.mxu0 %v1815
    %1817 = vmatprep.subr.mxu0 0.0
    %v1818 = vand.u32 %v1797, 4294901760
    %1819 = vmatpush1.msra.mxu0 %v1818
    %1820 = vmatprep.subr.mxu0 0.0
    %v1821 = vand.u32 %v1796, 4294901760
    %1822 = vmatpush1.msra.mxu0 %v1821
    %1823 = vmatprep.subr.mxu0 0.0
    %v1824 = vand.u32 %v1795, 4294901760
    %1825 = vmatpush1.msra.mxu0 %v1824
    %1826 = vmatprep.subr.mxu0 0.0
    %v1827 = vand.u32 %v1794, 4294901760
    %1828 = vmatpush1.msra.mxu0 %v1827
    %1829 = vmatprep.subr.mxu0 0.0
    %v1830 = vand.u32 %v1793, 4294901760
    %1831 = vmatpush1.msra.mxu0 %v1830
    %1832 = vmatprep.subr.mxu0 0.0
    %v1833 = vand.u32 %v1792, 4294901760
    %1834 = vmatpush1.msra.mxu0 %v1833
    %1835 = vmatprep.subr.mxu0 0.0
    %v1836 = vand.u32 %v1791, 4294901760
    %1837 = vmatpush1.msra.mxu0 %v1836
    %1838 = vmatprep.subr.mxu0 0.0
    %v1839 = vand.u32 %v1790, 4294901760
    %1840 = vmatpush1.msra.mxu0 %v1839
    %1841 = vmatprep.subr.mxu0 0.0
    %v1842 = vand.u32 %v1789, 4294901760
    %1843 = vmatpush1.msra.mxu0 %v1842
    %1844 = vmatprep.subr.mxu0 0.0
    %v1845 = vand.u32 %v1788, 4294901760
    %1846 = vmatpush1.msra.mxu0 %v1845
    %1847 = vmatprep.subr.mxu0 0.0
    %v1848 = vand.u32 %v1787, 4294901760
    %1849 = vmatpush1.msra.mxu0 %v1848
    %1850 = vmatprep.subr.mxu0 0.0
    %v1851 = vand.u32 %v1786, 4294901760
    %1852 = vmatpush1.msra.mxu0 %v1851
    %1853 = vmatprep.subr.mxu0 0.0
    %v1854 = vand.u32 %v1785, 4294901760
    %1855 = vmatpush1.msra.mxu0 %v1854
    %1856 = vmatprep.subr.mxu0 0.0
    %1857 = vmatpush2.msra.mxu0 0.0
    %1858 = vmatprep.subr.mxu0 0.0
    %1859 = vmatpush2.msra.mxu0 0.0
    %1860 = vmatprep.subr.mxu0 0.0
    %1861 = vmatpush2.msra.mxu0 0.0
    %1862 = vmatprep.subr.mxu0 0.0
    %1863 = vmatpush2.msra.mxu0 0.0
    %1864 = vmatprep.subr.mxu0 0.0
    %1865 = vmatpush2.msra.mxu0 0.0
    %1866 = vmatprep.subr.mxu0 0.0
    %1867 = vmatpush2.msra.mxu0 0.0
    %1868 = vmatprep.subr.mxu0 0.0
    %1869 = vmatpush2.msra.mxu0 0.0
    %1870 = vmatprep.subr.mxu0 0.0
    %1871 = vmatpush2.msra.mxu0 0.0
    %1872 = vmatprep.subr.mxu0 0.0
    %1873 = vmatpush2.msra.mxu0 0.0
    %1874 = vmatprep.subr.mxu0 0.0
    %1875 = vmatpush2.msra.mxu0 0.0
    %1876 = vmatprep.subr.mxu0 0.0
    %1877 = vmatpush2.msra.mxu0 0.0
    %1878 = vmatprep.subr.mxu0 0.0
    %1879 = vmatpush2.msra.mxu0 0.0
    %1880 = vmatprep.subr.mxu0 0.0
    %1881 = vmatpush2.msra.mxu0 0.0
    %1882 = vmatprep.subr.mxu0 0.0
    %1883 = vmatpush2.msra.mxu0 0.0
    %1884 = vmatprep.subr.mxu0 0.0
    %1885 = vmatpush2.msra.mxu0 0.0
    %1886 = vmatprep.subr.mxu0 0.0
    %1887 = vmatpush2.msra.mxu0 0.0
    %1888 = vmatprep.mubr.f32.mxu0 0.0
    %v1889 = vand.u32 %v1783, 4294901760
    %v1890 = vsub.f32 %v1783, %v1889
    %v1891 = vand.u32 %v1890, 4294901760
    %v1892 = vsub.f32 %v1890, %v1891
    %v1893 = vand.u32 %v1892, 4294901760
    %1894 = vmatmul.mubr.f32.gmra.mxu0 %v1893
    %v1895 = vpop.f32.mrf.mxu0
    %v1896 = vadd.f32 %v1806, %v1895
    %v1897 = vpop.f32.mrf.mxu0
    %1898 = vmatprep.mubr.f32.mxu0 0.0
    %v1899 = vand.u32 %v1784, 4294901760
    %v1900 = vsub.f32 %v1784, %v1899
    %v1901 = vand.u32 %v1900, 4294901760
    %v1902 = vsub.f32 %v1900, %v1901
    %v1903 = vand.u32 %v1902, 4294901760
    %1904 = vmatmul.mubr.f32.gmra.mxu0 %v1903
    %v1905 = vpop.f32.mrf.mxu0
    %v1906 = vadd.f32 %v1806, %v1905
    %v1907 = vpop.f32.mrf.mxu0
    %1908 = vdwg.mxu0
    %1909 = vmatprep.subr.mxu0 0.0
    %v1910 = vand.u32 %v1800, 4294901760
    %v1911 = vsub.f32 %v1800, %v1910
    %v1912 = vand.u32 %v1911, 4294901760
    %v1913 = vsub.f32 %v1911, %v1912
    %v1914 = vand.u32 %v1913, 4294901760
    %1915 = vmatpush1.msra.mxu0 %v1914
    %1916 = vmatprep.subr.mxu0 0.0
    %v1917 = vand.u32 %v1799, 4294901760
    %v1918 = vsub.f32 %v1799, %v1917
    %v1919 = vand.u32 %v1918, 4294901760
    %v1920 = vsub.f32 %v1918, %v1919
    %v1921 = vand.u32 %v1920, 4294901760
    %1922 = vmatpush1.msra.mxu0 %v1921
    %1923 = vmatprep.subr.mxu0 0.0
    %v1924 = vand.u32 %v1798, 4294901760
    %v1925 = vsub.f32 %v1798, %v1924
    %v1926 = vand.u32 %v1925, 4294901760
    %v1927 = vsub.f32 %v1925, %v1926
    %v1928 = vand.u32 %v1927, 4294901760
    %1929 = vmatpush1.msra.mxu0 %v1928
    %1930 = vmatprep.subr.mxu0 0.0
    %v1931 = vand.u32 %v1797, 4294901760
    %v1932 = vsub.f32 %v1797, %v1931
    %v1933 = vand.u32 %v1932, 4294901760
    %v1934 = vsub.f32 %v1932, %v1933
    %v1935 = vand.u32 %v1934, 4294901760
    %1936 = vmatpush1.msra.mxu0 %v1935
    %1937 = vmatprep.subr.mxu0 0.0
    %v1938 = vand.u32 %v1796, 4294901760
    %v1939 = vsub.f32 %v1796, %v1938
    %v1940 = vand.u32 %v1939, 4294901760
    %v1941 = vsub.f32 %v1939, %v1940
    %v1942 = vand.u32 %v1941, 4294901760
    %1943 = vmatpush1.msra.mxu0 %v1942
    %1944 = vmatprep.subr.mxu0 0.0
    %v1945 = vand.u32 %v1795, 4294901760
    %v1946 = vsub.f32 %v1795, %v1945
    %v1947 = vand.u32 %v1946, 4294901760
    %v1948 = vsub.f32 %v1946, %v1947
    %v1949 = vand.u32 %v1948, 4294901760
    %1950 = vmatpush1.msra.mxu0 %v1949
    %1951 = vmatprep.subr.mxu0 0.0
    %v1952 = vand.u32 %v1794, 4294901760
    %v1953 = vsub.f32 %v1794, %v1952
    %v1954 = vand.u32 %v1953, 4294901760
    %v1955 = vsub.f32 %v1953, %v1954
    %v1956 = vand.u32 %v1955, 4294901760
    %1957 = vmatpush1.msra.mxu0 %v1956
    %1958 = vmatprep.subr.mxu0 0.0
    %v1959 = vand.u32 %v1793, 4294901760
    %v1960 = vsub.f32 %v1793, %v1959
    %v1961 = vand.u32 %v1960, 4294901760
    %v1962 = vsub.f32 %v1960, %v1961
    %v1963 = vand.u32 %v1962, 4294901760
    %1964 = vmatpush1.msra.mxu0 %v1963
    %1965 = vmatprep.subr.mxu0 0.0
    %v1966 = vand.u32 %v1792, 4294901760
    %v1967 = vsub.f32 %v1792, %v1966
    %v1968 = vand.u32 %v1967, 4294901760
    %v1969 = vsub.f32 %v1967, %v1968
    %v1970 = vand.u32 %v1969, 4294901760
    %1971 = vmatpush1.msra.mxu0 %v1970
    %1972 = vmatprep.subr.mxu0 0.0
    %v1973 = vand.u32 %v1791, 4294901760
    %v1974 = vsub.f32 %v1791, %v1973
    %v1975 = vand.u32 %v1974, 4294901760
    %v1976 = vsub.f32 %v1974, %v1975
    %v1977 = vand.u32 %v1976, 4294901760
    %1978 = vmatpush1.msra.mxu0 %v1977
    %1979 = vmatprep.subr.mxu0 0.0
    %v1980 = vand.u32 %v1790, 4294901760
    %v1981 = vsub.f32 %v1790, %v1980
    %v1982 = vand.u32 %v1981, 4294901760
    %v1983 = vsub.f32 %v1981, %v1982
    %v1984 = vand.u32 %v1983, 4294901760
    %1985 = vmatpush1.msra.mxu0 %v1984
    %1986 = vmatprep.subr.mxu0 0.0
    %v1987 = vand.u32 %v1789, 4294901760
    %v1988 = vsub.f32 %v1789, %v1987
    %v1989 = vand.u32 %v1988, 4294901760
    %v1990 = vsub.f32 %v1988, %v1989
    %v1991 = vand.u32 %v1990, 4294901760
    %1992 = vmatpush1.msra.mxu0 %v1991
    %1993 = vmatprep.subr.mxu0 0.0
    %v1994 = vand.u32 %v1788, 4294901760
    %v1995 = vsub.f32 %v1788, %v1994
    %v1996 = vand.u32 %v1995, 4294901760
    %v1997 = vsub.f32 %v1995, %v1996
    %v1998 = vand.u32 %v1997, 4294901760
    %1999 = vmatpush1.msra.mxu0 %v1998
    %2000 = vmatprep.subr.mxu0 0.0
    %v2001 = vand.u32 %v1787, 4294901760
    %v2002 = vsub.f32 %v1787, %v2001
    %v2003 = vand.u32 %v2002, 4294901760
    %v2004 = vsub.f32 %v2002, %v2003
    %v2005 = vand.u32 %v2004, 4294901760
    %2006 = vmatpush1.msra.mxu0 %v2005
    %2007 = vmatprep.subr.mxu0 0.0
    %v2008 = vand.u32 %v1786, 4294901760
    %v2009 = vsub.f32 %v1786, %v2008
    %v2010 = vand.u32 %v2009, 4294901760
    %v2011 = vsub.f32 %v2009, %v2010
    %v2012 = vand.u32 %v2011, 4294901760
    %2013 = vmatpush1.msra.mxu0 %v2012
    %2014 = vmatprep.subr.mxu0 0.0
    %v2015 = vand.u32 %v1785, 4294901760
    %v2016 = vsub.f32 %v1785, %v2015
    %v2017 = vand.u32 %v2016, 4294901760
    %v2018 = vsub.f32 %v2016, %v2017
    %v2019 = vand.u32 %v2018, 4294901760
    %2020 = vmatpush1.msra.mxu0 %v2019
    %2021 = vmatprep.subr.mxu0 0.0
    %2022 = vmatpush2.msra.mxu0 0.0
    %2023 = vmatprep.subr.mxu0 0.0
    %2024 = vmatpush2.msra.mxu0 0.0
    %2025 = vmatprep.subr.mxu0 0.0
    %2026 = vmatpush2.msra.mxu0 0.0
    %2027 = vmatprep.subr.mxu0 0.0
    %2028 = vmatpush2.msra.mxu0 0.0
    %2029 = vmatprep.subr.mxu0 0.0
    %2030 = vmatpush2.msra.mxu0 0.0
    %2031 = vmatprep.subr.mxu0 0.0
    %2032 = vmatpush2.msra.mxu0 0.0
    %2033 = vmatprep.subr.mxu0 0.0
    %2034 = vmatpush2.msra.mxu0 0.0
    %2035 = vmatprep.subr.mxu0 0.0
    %2036 = vmatpush2.msra.mxu0 0.0
    %2037 = vmatprep.subr.mxu0 0.0
    %2038 = vmatpush2.msra.mxu0 0.0
    %2039 = vmatprep.subr.mxu0 0.0
    %2040 = vmatpush2.msra.mxu0 0.0
    %2041 = vmatprep.subr.mxu0 0.0
    %2042 = vmatpush2.msra.mxu0 0.0
    %2043 = vmatprep.subr.mxu0 0.0
    %2044 = vmatpush2.msra.mxu0 0.0
    %2045 = vmatprep.subr.mxu0 0.0
    %2046 = vmatpush2.msra.mxu0 0.0
    %2047 = vmatprep.subr.mxu0 0.0
    %2048 = vmatpush2.msra.mxu0 0.0
    %2049 = vmatprep.subr.mxu0 0.0
    %2050 = vmatpush2.msra.mxu0 0.0
    %2051 = vmatprep.subr.mxu0 0.0
    %2052 = vmatpush2.msra.mxu0 0.0
    %2053 = vmatprep.mubr.f32.mxu0 0.0
    %v2054 = vand.u32 %v1783, 4294901760
    %2055 = vmatmul.mubr.f32.gmra.mxu0 %v2054
    %v2056 = vpop.f32.mrf.mxu0
    %v2057 = vadd.f32 %v1896, %v2056
    %v2058 = vpop.f32.mrf.mxu0
    %2059 = vmatprep.mubr.f32.mxu0 0.0
    %v2060 = vand.u32 %v1784, 4294901760
    %2061 = vmatmul.mubr.f32.gmra.mxu0 %v2060
    %v2062 = vpop.f32.mrf.mxu0
    %v2063 = vadd.f32 %v1906, %v2062
    %v2064 = vpop.f32.mrf.mxu0
    %2065 = vdwg.mxu0
    %2066 = vmatprep.subr.mxu0 0.0
    %v2067 = vand.u32 %v1800, 4294901760
    %v2068 = vsub.f32 %v1800, %v2067
    %2069 = vmatpush1.msra.mxu0 %v2068
    %2070 = vmatprep.subr.mxu0 0.0
    %v2071 = vand.u32 %v1799, 4294901760
    %v2072 = vsub.f32 %v1799, %v2071
    %2073 = vmatpush1.msra.mxu0 %v2072
    %2074 = vmatprep.subr.mxu0 0.0
    %v2075 = vand.u32 %v1798, 4294901760
    %v2076 = vsub.f32 %v1798, %v2075
    %2077 = vmatpush1.msra.mxu0 %v2076
    %2078 = vmatprep.subr.mxu0 0.0
    %v2079 = vand.u32 %v1797, 4294901760
    %v2080 = vsub.f32 %v1797, %v2079
    %2081 = vmatpush1.msra.mxu0 %v2080
    %2082 = vmatprep.subr.mxu0 0.0
    %v2083 = vand.u32 %v1796, 4294901760
    %v2084 = vsub.f32 %v1796, %v2083
    %2085 = vmatpush1.msra.mxu0 %v2084
    %2086 = vmatprep.subr.mxu0 0.0
    %v2087 = vand.u32 %v1795, 4294901760
    %v2088 = vsub.f32 %v1795, %v2087
    %2089 = vmatpush1.msra.mxu0 %v2088
    %2090 = vmatprep.subr.mxu0 0.0
    %v2091 = vand.u32 %v1794, 4294901760
    %v2092 = vsub.f32 %v1794, %v2091
    %2093 = vmatpush1.msra.mxu0 %v2092
    %2094 = vmatprep.subr.mxu0 0.0
    %v2095 = vand.u32 %v1793, 4294901760
    %v2096 = vsub.f32 %v1793, %v2095
    %2097 = vmatpush1.msra.mxu0 %v2096
    %2098 = vmatprep.subr.mxu0 0.0
    %v2099 = vand.u32 %v1792, 4294901760
    %v2100 = vsub.f32 %v1792, %v2099
    %2101 = vmatpush1.msra.mxu0 %v2100
    %2102 = vmatprep.subr.mxu0 0.0
    %v2103 = vand.u32 %v1791, 4294901760
    %v2104 = vsub.f32 %v1791, %v2103
    %2105 = vmatpush1.msra.mxu0 %v2104
    %2106 = vmatprep.subr.mxu0 0.0
    %v2107 = vand.u32 %v1790, 4294901760
    %v2108 = vsub.f32 %v1790, %v2107
    %2109 = vmatpush1.msra.mxu0 %v2108
    %2110 = vmatprep.subr.mxu0 0.0
    %v2111 = vand.u32 %v1789, 4294901760
    %v2112 = vsub.f32 %v1789, %v2111
    %2113 = vmatpush1.msra.mxu0 %v2112
    %2114 = vmatprep.subr.mxu0 0.0
    %v2115 = vand.u32 %v1788, 4294901760
    %v2116 = vsub.f32 %v1788, %v2115
    %2117 = vmatpush1.msra.mxu0 %v2116
    %2118 = vmatprep.subr.mxu0 0.0
    %v2119 = vand.u32 %v1787, 4294901760
    %v2120 = vsub.f32 %v1787, %v2119
    %2121 = vmatpush1.msra.mxu0 %v2120
    %2122 = vmatprep.subr.mxu0 0.0
    %v2123 = vand.u32 %v1786, 4294901760
    %v2124 = vsub.f32 %v1786, %v2123
    %2125 = vmatpush1.msra.mxu0 %v2124
    %2126 = vmatprep.subr.mxu0 0.0
    %v2127 = vand.u32 %v1785, 4294901760
    %v2128 = vsub.f32 %v1785, %v2127
    %2129 = vmatpush1.msra.mxu0 %v2128
    %2130 = vmatprep.subr.mxu0 0.0
    %2131 = vmatpush2.msra.mxu0 0.0
    %2132 = vmatprep.subr.mxu0 0.0
    %2133 = vmatpush2.msra.mxu0 0.0
    %2134 = vmatprep.subr.mxu0 0.0
    %2135 = vmatpush2.msra.mxu0 0.0
    %2136 = vmatprep.subr.mxu0 0.0
    %2137 = vmatpush2.msra.mxu0 0.0
    %2138 = vmatprep.subr.mxu0 0.0
    %2139 = vmatpush2.msra.mxu0 0.0
    %2140 = vmatprep.subr.mxu0 0.0
    %2141 = vmatpush2.msra.mxu0 0.0
    %2142 = vmatprep.subr.mxu0 0.0
    %2143 = vmatpush2.msra.mxu0 0.0
    %2144 = vmatprep.subr.mxu0 0.0
    %2145 = vmatpush2.msra.mxu0 0.0
    %2146 = vmatprep.subr.mxu0 0.0
    %2147 = vmatpush2.msra.mxu0 0.0
    %2148 = vmatprep.subr.mxu0 0.0
    %2149 = vmatpush2.msra.mxu0 0.0
    %2150 = vmatprep.subr.mxu0 0.0
    %2151 = vmatpush2.msra.mxu0 0.0
    %2152 = vmatprep.subr.mxu0 0.0
    %2153 = vmatpush2.msra.mxu0 0.0
    %2154 = vmatprep.subr.mxu0 0.0
    %2155 = vmatpush2.msra.mxu0 0.0
    %2156 = vmatprep.subr.mxu0 0.0
    %2157 = vmatpush2.msra.mxu0 0.0
    %2158 = vmatprep.subr.mxu0 0.0
    %2159 = vmatpush2.msra.mxu0 0.0
    %2160 = vmatprep.subr.mxu0 0.0
    %2161 = vmatpush2.msra.mxu0 0.0
    %2162 = vmatprep.mubr.f32.mxu0 0.0
    %v2163 = vand.u32 %v1783, 4294901760
    %v2164 = vsub.f32 %v1783, %v2163
    %2165 = vmatmul.mubr.f32.gmra.mxu0 %v2164
    %v2166 = vpop.f32.mrf.mxu0
    %v2167 = vadd.f32 %v2057, %v2166
    %v2168 = vpop.f32.mrf.mxu0
    %2169 = vmatprep.mubr.f32.mxu0 0.0
    %v2170 = vand.u32 %v1784, 4294901760
    %v2171 = vsub.f32 %v1784, %v2170
    %2172 = vmatmul.mubr.f32.gmra.mxu0 %v2171
    %v2173 = vpop.f32.mrf.mxu0
    %v2174 = vadd.f32 %v2063, %v2173
    %v2175 = vpop.f32.mrf.mxu0
    %2176 = vdwg.mxu0
    %2177 = vmatprep.subr.mxu0 0.0
    %v2178 = vand.u32 %v1800, 4294901760
    %2179 = vmatpush1.msra.mxu0 %v2178
    %2180 = vmatprep.subr.mxu0 0.0
    %v2181 = vand.u32 %v1799, 4294901760
    %2182 = vmatpush1.msra.mxu0 %v2181
    %2183 = vmatprep.subr.mxu0 0.0
    %v2184 = vand.u32 %v1798, 4294901760
    %2185 = vmatpush1.msra.mxu0 %v2184
    %2186 = vmatprep.subr.mxu0 0.0
    %v2187 = vand.u32 %v1797, 4294901760
    %2188 = vmatpush1.msra.mxu0 %v2187
    %2189 = vmatprep.subr.mxu0 0.0
    %v2190 = vand.u32 %v1796, 4294901760
    %2191 = vmatpush1.msra.mxu0 %v2190
    %2192 = vmatprep.subr.mxu0 0.0
    %v2193 = vand.u32 %v1795, 4294901760
    %2194 = vmatpush1.msra.mxu0 %v2193
    %2195 = vmatprep.subr.mxu0 0.0
    %v2196 = vand.u32 %v1794, 4294901760
    %2197 = vmatpush1.msra.mxu0 %v2196
    %2198 = vmatprep.subr.mxu0 0.0
    %v2199 = vand.u32 %v1793, 4294901760
    %2200 = vmatpush1.msra.mxu0 %v2199
    %2201 = vmatprep.subr.mxu0 0.0
    %v2202 = vand.u32 %v1792, 4294901760
    %2203 = vmatpush1.msra.mxu0 %v2202
    %2204 = vmatprep.subr.mxu0 0.0
    %v2205 = vand.u32 %v1791, 4294901760
    %2206 = vmatpush1.msra.mxu0 %v2205
    %2207 = vmatprep.subr.mxu0 0.0
    %v2208 = vand.u32 %v1790, 4294901760
    %2209 = vmatpush1.msra.mxu0 %v2208
    %2210 = vmatprep.subr.mxu0 0.0
    %v2211 = vand.u32 %v1789, 4294901760
    %2212 = vmatpush1.msra.mxu0 %v2211
    %2213 = vmatprep.subr.mxu0 0.0
    %v2214 = vand.u32 %v1788, 4294901760
    %2215 = vmatpush1.msra.mxu0 %v2214
    %2216 = vmatprep.subr.mxu0 0.0
    %v2217 = vand.u32 %v1787, 4294901760
    %2218 = vmatpush1.msra.mxu0 %v2217
    %2219 = vmatprep.subr.mxu0 0.0
    %v2220 = vand.u32 %v1786, 4294901760
    %2221 = vmatpush1.msra.mxu0 %v2220
    %2222 = vmatprep.subr.mxu0 0.0
    %v2223 = vand.u32 %v1785, 4294901760
    %2224 = vmatpush1.msra.mxu0 %v2223
    %2225 = vmatprep.subr.mxu0 0.0
    %2226 = vmatpush2.msra.mxu0 0.0
    %2227 = vmatprep.subr.mxu0 0.0
    %2228 = vmatpush2.msra.mxu0 0.0
    %2229 = vmatprep.subr.mxu0 0.0
    %2230 = vmatpush2.msra.mxu0 0.0
    %2231 = vmatprep.subr.mxu0 0.0
    %2232 = vmatpush2.msra.mxu0 0.0
    %2233 = vmatprep.subr.mxu0 0.0
    %2234 = vmatpush2.msra.mxu0 0.0
    %2235 = vmatprep.subr.mxu0 0.0
    %2236 = vmatpush2.msra.mxu0 0.0
    %2237 = vmatprep.subr.mxu0 0.0
    %2238 = vmatpush2.msra.mxu0 0.0
    %2239 = vmatprep.subr.mxu0 0.0
    %2240 = vmatpush2.msra.mxu0 0.0
    %2241 = vmatprep.subr.mxu0 0.0
    %2242 = vmatpush2.msra.mxu0 0.0
    %2243 = vmatprep.subr.mxu0 0.0
    %2244 = vmatpush2.msra.mxu0 0.0
    %2245 = vmatprep.subr.mxu0 0.0
    %2246 = vmatpush2.msra.mxu0 0.0
    %2247 = vmatprep.subr.mxu0 0.0
    %2248 = vmatpush2.msra.mxu0 0.0
    %2249 = vmatprep.subr.mxu0 0.0
    %2250 = vmatpush2.msra.mxu0 0.0
    %2251 = vmatprep.subr.mxu0 0.0
    %2252 = vmatpush2.msra.mxu0 0.0
    %2253 = vmatprep.subr.mxu0 0.0
    %2254 = vmatpush2.msra.mxu0 0.0
    %2255 = vmatprep.subr.mxu0 0.0
    %2256 = vmatpush2.msra.mxu0 0.0
    %2257 = vmatprep.mubr.f32.mxu0 0.0
    %v2258 = vand.u32 %v1783, 4294901760
    %v2259 = vsub.f32 %v1783, %v2258
    %v2260 = vand.u32 %v2259, 4294901760
    %2261 = vmatmul.mubr.f32.gmra.mxu0 %v2260
    %v2262 = vpop.f32.mrf.mxu0
    %v2263 = vadd.f32 %v2167, %v2262
    %v2264 = vpop.f32.mrf.mxu0
    %2265 = vmatprep.mubr.f32.mxu0 0.0
    %v2266 = vand.u32 %v1784, 4294901760
    %v2267 = vsub.f32 %v1784, %v2266
    %v2268 = vand.u32 %v2267, 4294901760
    %2269 = vmatmul.mubr.f32.gmra.mxu0 %v2268
    %v2270 = vpop.f32.mrf.mxu0
    %v2271 = vadd.f32 %v2174, %v2270
    %v2272 = vpop.f32.mrf.mxu0
    %2273 = vdwg.mxu0
    %2274 = vmatprep.subr.mxu0 0.0
    %v2275 = vand.u32 %v1800, 4294901760
    %v2276 = vsub.f32 %v1800, %v2275
    %v2277 = vand.u32 %v2276, 4294901760
    %2278 = vmatpush1.msra.mxu0 %v2277
    %2279 = vmatprep.subr.mxu0 0.0
    %v2280 = vand.u32 %v1799, 4294901760
    %v2281 = vsub.f32 %v1799, %v2280
    %v2282 = vand.u32 %v2281, 4294901760
    %2283 = vmatpush1.msra.mxu0 %v2282
    %2284 = vmatprep.subr.mxu0 0.0
    %v2285 = vand.u32 %v1798, 4294901760
    %v2286 = vsub.f32 %v1798, %v2285
    %v2287 = vand.u32 %v2286, 4294901760
    %2288 = vmatpush1.msra.mxu0 %v2287
    %2289 = vmatprep.subr.mxu0 0.0
    %v2290 = vand.u32 %v1797, 4294901760
    %v2291 = vsub.f32 %v1797, %v2290
    %v2292 = vand.u32 %v2291, 4294901760
    %2293 = vmatpush1.msra.mxu0 %v2292
    %2294 = vmatprep.subr.mxu0 0.0
    %v2295 = vand.u32 %v1796, 4294901760
    %v2296 = vsub.f32 %v1796, %v2295
    %v2297 = vand.u32 %v2296, 4294901760
    %2298 = vmatpush1.msra.mxu0 %v2297
    %2299 = vmatprep.subr.mxu0 0.0
    %v2300 = vand.u32 %v1795, 4294901760
    %v2301 = vsub.f32 %v1795, %v2300
    %v2302 = vand.u32 %v2301, 4294901760
    %2303 = vmatpush1.msra.mxu0 %v2302
    %2304 = vmatprep.subr.mxu0 0.0
    %v2305 = vand.u32 %v1794, 4294901760
    %v2306 = vsub.f32 %v1794, %v2305
    %v2307 = vand.u32 %v2306, 4294901760
    %2308 = vmatpush1.msra.mxu0 %v2307
    %2309 = vmatprep.subr.mxu0 0.0
    %v2310 = vand.u32 %v1793, 4294901760
    %v2311 = vsub.f32 %v1793, %v2310
    %v2312 = vand.u32 %v2311, 4294901760
    %2313 = vmatpush1.msra.mxu0 %v2312
    %2314 = vmatprep.subr.mxu0 0.0
    %v2315 = vand.u32 %v1792, 4294901760
    %v2316 = vsub.f32 %v1792, %v2315
    %v2317 = vand.u32 %v2316, 4294901760
    %2318 = vmatpush1.msra.mxu0 %v2317
    %2319 = vmatprep.subr.mxu0 0.0
    %v2320 = vand.u32 %v1791, 4294901760
    %v2321 = vsub.f32 %v1791, %v2320
    %v2322 = vand.u32 %v2321, 4294901760
    %2323 = vmatpush1.msra.mxu0 %v2322
    %2324 = vmatprep.subr.mxu0 0.0
    %v2325 = vand.u32 %v1790, 4294901760
    %v2326 = vsub.f32 %v1790, %v2325
    %v2327 = vand.u32 %v2326, 4294901760
    %2328 = vmatpush1.msra.mxu0 %v2327
    %2329 = vmatprep.subr.mxu0 0.0
    %v2330 = vand.u32 %v1789, 4294901760
    %v2331 = vsub.f32 %v1789, %v2330
    %v2332 = vand.u32 %v2331, 4294901760
    %2333 = vmatpush1.msra.mxu0 %v2332
    %2334 = vmatprep.subr.mxu0 0.0
    %v2335 = vand.u32 %v1788, 4294901760
    %v2336 = vsub.f32 %v1788, %v2335
    %v2337 = vand.u32 %v2336, 4294901760
    %2338 = vmatpush1.msra.mxu0 %v2337
    %2339 = vmatprep.subr.mxu0 0.0
    %v2340 = vand.u32 %v1787, 4294901760
    %v2341 = vsub.f32 %v1787, %v2340
    %v2342 = vand.u32 %v2341, 4294901760
    %2343 = vmatpush1.msra.mxu0 %v2342
    %2344 = vmatprep.subr.mxu0 0.0
    %v2345 = vand.u32 %v1786, 4294901760
    %v2346 = vsub.f32 %v1786, %v2345
    %v2347 = vand.u32 %v2346, 4294901760
    %2348 = vmatpush1.msra.mxu0 %v2347
    %2349 = vmatprep.subr.mxu0 0.0
    %v2350 = vand.u32 %v1785, 4294901760
    %v2351 = vsub.f32 %v1785, %v2350
    %v2352 = vand.u32 %v2351, 4294901760
    %2353 = vmatpush1.msra.mxu0 %v2352
    %2354 = vmatprep.subr.mxu0 0.0
    %2355 = vmatpush2.msra.mxu0 0.0
    %2356 = vmatprep.subr.mxu0 0.0
    %2357 = vmatpush2.msra.mxu0 0.0
    %2358 = vmatprep.subr.mxu0 0.0
    %2359 = vmatpush2.msra.mxu0 0.0
    %2360 = vmatprep.subr.mxu0 0.0
    %2361 = vmatpush2.msra.mxu0 0.0
    %2362 = vmatprep.subr.mxu0 0.0
    %2363 = vmatpush2.msra.mxu0 0.0
    %2364 = vmatprep.subr.mxu0 0.0
    %2365 = vmatpush2.msra.mxu0 0.0
    %2366 = vmatprep.subr.mxu0 0.0
    %2367 = vmatpush2.msra.mxu0 0.0
    %2368 = vmatprep.subr.mxu0 0.0
    %2369 = vmatpush2.msra.mxu0 0.0
    %2370 = vmatprep.subr.mxu0 0.0
    %2371 = vmatpush2.msra.mxu0 0.0
    %2372 = vmatprep.subr.mxu0 0.0
    %2373 = vmatpush2.msra.mxu0 0.0
    %2374 = vmatprep.subr.mxu0 0.0
    %2375 = vmatpush2.msra.mxu0 0.0
    %2376 = vmatprep.subr.mxu0 0.0
    %2377 = vmatpush2.msra.mxu0 0.0
    %2378 = vmatprep.subr.mxu0 0.0
    %2379 = vmatpush2.msra.mxu0 0.0
    %2380 = vmatprep.subr.mxu0 0.0
    %2381 = vmatpush2.msra.mxu0 0.0
    %2382 = vmatprep.subr.mxu0 0.0
    %2383 = vmatpush2.msra.mxu0 0.0
    %2384 = vmatprep.subr.mxu0 0.0
    %2385 = vmatpush2.msra.mxu0 0.0
    %2386 = vmatprep.mubr.f32.mxu0 0.0
    %v2387 = vand.u32 %v1783, 4294901760
    %2388 = vmatmul.mubr.f32.gmra.mxu0 %v2387
    %v2389 = vpop.f32.mrf.mxu0
    %v2390 = vadd.f32 %v2263, %v2389
    %v2391 = vpop.f32.mrf.mxu0
    %2392 = vmatprep.mubr.f32.mxu0 0.0
    %v2393 = vand.u32 %v1784, 4294901760
    %2394 = vmatmul.mubr.f32.gmra.mxu0 %v2393
    %v2395 = vpop.f32.mrf.mxu0
    %v2396 = vadd.f32 %v2271, %v2395
    %v2397 = vpop.f32.mrf.mxu0
    %2398 = vdwg.mxu0
    %2399 = vmatprep.subr.mxu0 0.0
    %v2400 = vand.u32 %v1800, 4294901760
    %2401 = vmatpush1.msra.mxu0 %v2400
    %2402 = vmatprep.subr.mxu0 0.0
    %v2403 = vand.u32 %v1799, 4294901760
    %2404 = vmatpush1.msra.mxu0 %v2403
    %2405 = vmatprep.subr.mxu0 0.0
    %v2406 = vand.u32 %v1798, 4294901760
    %2407 = vmatpush1.msra.mxu0 %v2406
    %2408 = vmatprep.subr.mxu0 0.0
    %v2409 = vand.u32 %v1797, 4294901760
    %2410 = vmatpush1.msra.mxu0 %v2409
    %2411 = vmatprep.subr.mxu0 0.0
    %v2412 = vand.u32 %v1796, 4294901760
    %2413 = vmatpush1.msra.mxu0 %v2412
    %2414 = vmatprep.subr.mxu0 0.0
    %v2415 = vand.u32 %v1795, 4294901760
    %2416 = vmatpush1.msra.mxu0 %v2415
    %2417 = vmatprep.subr.mxu0 0.0
    %v2418 = vand.u32 %v1794, 4294901760
    %2419 = vmatpush1.msra.mxu0 %v2418
    %2420 = vmatprep.subr.mxu0 0.0
    %v2421 = vand.u32 %v1793, 4294901760
    %2422 = vmatpush1.msra.mxu0 %v2421
    %2423 = vmatprep.subr.mxu0 0.0
    %v2424 = vand.u32 %v1792, 4294901760
    %2425 = vmatpush1.msra.mxu0 %v2424
    %2426 = vmatprep.subr.mxu0 0.0
    %v2427 = vand.u32 %v1791, 4294901760
    %2428 = vmatpush1.msra.mxu0 %v2427
    %2429 = vmatprep.subr.mxu0 0.0
    %v2430 = vand.u32 %v1790, 4294901760
    %2431 = vmatpush1.msra.mxu0 %v2430
    %2432 = vmatprep.subr.mxu0 0.0
    %v2433 = vand.u32 %v1789, 4294901760
    %2434 = vmatpush1.msra.mxu0 %v2433
    %2435 = vmatprep.subr.mxu0 0.0
    %v2436 = vand.u32 %v1788, 4294901760
    %2437 = vmatpush1.msra.mxu0 %v2436
    %2438 = vmatprep.subr.mxu0 0.0
    %v2439 = vand.u32 %v1787, 4294901760
    %2440 = vmatpush1.msra.mxu0 %v2439
    %2441 = vmatprep.subr.mxu0 0.0
    %v2442 = vand.u32 %v1786, 4294901760
    %2443 = vmatpush1.msra.mxu0 %v2442
    %2444 = vmatprep.subr.mxu0 0.0
    %v2445 = vand.u32 %v1785, 4294901760
    %2446 = vmatpush1.msra.mxu0 %v2445
    %2447 = vmatprep.subr.mxu0 0.0
    %2448 = vmatpush2.msra.mxu0 0.0
    %2449 = vmatprep.subr.mxu0 0.0
    %2450 = vmatpush2.msra.mxu0 0.0
    %2451 = vmatprep.subr.mxu0 0.0
    %2452 = vmatpush2.msra.mxu0 0.0
    %2453 = vmatprep.subr.mxu0 0.0
    %2454 = vmatpush2.msra.mxu0 0.0
    %2455 = vmatprep.subr.mxu0 0.0
    %2456 = vmatpush2.msra.mxu0 0.0
    %2457 = vmatprep.subr.mxu0 0.0
    %2458 = vmatpush2.msra.mxu0 0.0
    %2459 = vmatprep.subr.mxu0 0.0
    %2460 = vmatpush2.msra.mxu0 0.0
    %2461 = vmatprep.subr.mxu0 0.0
    %2462 = vmatpush2.msra.mxu0 0.0
    %2463 = vmatprep.subr.mxu0 0.0
    %2464 = vmatpush2.msra.mxu0 0.0
    %2465 = vmatprep.subr.mxu0 0.0
    %2466 = vmatpush2.msra.mxu0 0.0
    %2467 = vmatprep.subr.mxu0 0.0
    %2468 = vmatpush2.msra.mxu0 0.0
    %2469 = vmatprep.subr.mxu0 0.0
    %2470 = vmatpush2.msra.mxu0 0.0
    %2471 = vmatprep.subr.mxu0 0.0
    %2472 = vmatpush2.msra.mxu0 0.0
    %2473 = vmatprep.subr.mxu0 0.0
    %2474 = vmatpush2.msra.mxu0 0.0
    %2475 = vmatprep.subr.mxu0 0.0
    %2476 = vmatpush2.msra.mxu0 0.0
    %2477 = vmatprep.subr.mxu0 0.0
    %2478 = vmatpush2.msra.mxu0 0.0
    %2479 = vmatprep.mubr.f32.mxu0 0.0
    %v2480 = vand.u32 %v1783, 4294901760
    %2481 = vmatmul.mubr.f32.gmra.mxu0 %v2480
    %v2482 = vpop.f32.mrf.mxu0
    %v2483 = vadd.f32 %v2390, %v2482
    %v2484 = vpop.f32.mrf.mxu0
    %2485 = vmatprep.mubr.f32.mxu0 0.0
    %v2486 = vand.u32 %v1784, 4294901760
    %2487 = vmatmul.mubr.f32.gmra.mxu0 %v2486
    %v2488 = vpop.f32.mrf.mxu0
    %v2489 = vadd.f32 %v2396, %v2488
    %v2490 = vpop.f32.mrf.mxu0
    %2491 = vdwg.mxu0
    %2492 = vst [vmem:[#allocation7] sm:$0xff] %v2483
    %2493 = vst [vmem:[#allocation7 + $0x8] sm:$0xff] %v2489
    // Predicated region
    $region46: #{tpu_custom_call.1} parent=1 // pred_check
      _
    $region47: #{tpu_custom_call.1} parent=1 // pred_check_branch
      %2495 = sbr.rel (0) target = $region49
    $region48: #{tpu_custom_call.1} parent=1 // pred_region
      %s2497 = ssub.s32 256, 256
      %2498 = vsyncadd [#allocation4], %s2497
      %s2499 = sshll.u32 [#allocation7], 4
      %s2500 = int_to_ptr.vmem [resolvable:$true] %s2499
      %2505 = dma.vmem_to_hbm [thread:$0]  %s2500, 256, %s9, [#allocation4], 128, 128, 8
    $region49: #{tpu_custom_call.1} parent=1 // pred_fallthru
      _
    // Predicated region
    $region50: #{tpu_custom_call.1} parent=1 // pred_check
      _
    $region51: #{tpu_custom_call.1} parent=1 // pred_check_branch
      %2507 = sbr.rel (0) target = $region53
    $region52: #{tpu_custom_call.1} parent=1 // pred_region
      %2508 = dma.done [#allocation4], 256
    $region53: #{tpu_custom_call.1} parent=1 // pred_fallthru
      _
    %2509 = vsyncpa [#allocation3], 1
    %2510 = vsyncpa [#allocation6], 1
    %2511 = vsyncpa [#allocation4], 1

</llo_original>
